<compile_context>
chip_gen: v7x
topology: tpu7x:2x2x1
jax: 0.10.0
libtpu: 0.0.40
codegen_flags: <defaults>
</compile_context>

<pallas_src>
import jax
import jax.numpy as jnp
from jax.experimental import pallas as pl
from jax.experimental.pallas import tpu as pltpu


# ----------------------------- VMEM / tiling config -------------------------

def _vmem_limit_bytes():
    try:
        cap = int(pltpu.get_tpu_info().vmem_capacity_bytes)
    except Exception:
        cap = 64 * 1024 * 1024          # conservative (v7x-sized) fallback
    # half of physical VMEM: v5e/v6e (128 MiB) -> 64 MiB, v7x (64 MiB) -> 32 MiB
    return max(min(cap // 2, 64 * 1024 * 1024), 16 * 1024 * 1024)


_VMEM_LIMIT = _vmem_limit_bytes()
_TILE_BUDGET = _VMEM_LIMIT // 2         # row-tile traffic; rest = weights + headroom
_ROW_CAP = 1024                         # 512-1024 rows already ~85% of HBM roofline

_CPARAMS = pltpu.CompilerParams(
    dimension_semantics=("parallel",),
    vmem_limit_bytes=_VMEM_LIMIT,
)


def _row_block(m, per_row_bytes):
    """Largest sublane-aligned row tile under the VMEM budget (<= _ROW_CAP)."""
    tm = min(_ROW_CAP, max(_TILE_BUDGET // max(per_row_bytes, 1), 8), m)
    if tm >= m:
        return m                        # single full block (any m is legal)
    if tm >= 128:
        tm = (tm // 128) * 128
    else:
        tm = max((tm // 8) * 8, 8)      # sublane aligned; ragged tail via cdiv grid
    return tm


# ------------------- single-buffered constant-operand specs -----------------

_BUFFERED_OK = None


def _single_buffered_weights_ok():
    """Eagerly probe whether pipeline_mode=pl.Buffered(1) lowers on this setup."""
    global _BUFFERED_OK
    if _BUFFERED_OK is None:
        try:
            def k(x_ref, o_ref):
                o_ref[...] = x_ref[...] + 1.0
            spec = pl.BlockSpec((8, 128), lambda i: (0, 0),
                                pipeline_mode=pl.Buffered(1))
            out = pl.pallas_call(
                k,
                out_shape=jax.ShapeDtypeStruct((16, 128), jnp.float32),
                grid=(2,),
                in_specs=[spec],
                out_specs=pl.BlockSpec((8, 128), lambda i: (i, 0)),
            )(jnp.zeros((8, 128), jnp.float32))
            jax.block_until_ready(out)
            _BUFFERED_OK = True
        except Exception:
            _BUFFERED_OK = False
    return _BUFFERED_OK


def _const_spec(shape):
    """BlockSpec for a grid-invariant operand (weight/bias): single-buffered."""
    index_map = lambda i: tuple(0 for _ in shape)
    if _single_buffered_weights_ok():
        return pl.BlockSpec(shape, index_map, pipeline_mode=pl.Buffered(1))
    return pl.BlockSpec(shape, index_map)


# ----------------------------- activations ----------------------------------

def _silu(x):
    # exp + reciprocal both go to the EUP slot; no VALU divide.
    return x * pl.reciprocal(1.0 + jnp.exp(-x), approx=True)


def _gelu(x):
    return jax.nn.gelu(x, approximate=True)


# ----------------------------- Pallas kernels -------------------------------

def pallas_linear_add(x, w, b, add):
    """y = x @ w + b + add.  Fuses proj(x) with the +pos_embed pass."""
    M, K = x.shape
    N = w.shape[1]
    per_row = 4 * K + 4 * N + 4 * N + 4 * N   # dbuf x, dbuf add, dbuf out, f32 acc
    tm = _row_block(M, per_row)

    def kernel(x_ref, a_ref, w_ref, b_ref, o_ref):
        acc = jnp.dot(x_ref[...], w_ref[...], preferred_element_type=jnp.float32)
        acc = acc + b_ref[...] + a_ref[...].astype(jnp.float32)
        o_ref[...] = acc.astype(o_ref.dtype)

    return pl.pallas_call(
        kernel,
        out_shape=jax.ShapeDtypeStruct((M, N), jnp.bfloat16),
        grid=(pl.cdiv(M, tm),),
        in_specs=[
            pl.BlockSpec((tm, K), lambda i: (i, 0)),
            pl.BlockSpec((tm, N), lambda i: (i, 0)),
            _const_spec((K, N)),
            _const_spec((1, N)),
        ],
        out_specs=pl.BlockSpec((tm, N), lambda i: (i, 0)),
        compiler_params=_CPARAMS,
    )(x, add, w, b.reshape(1, -1))


def pallas_mlp2_residual(x, w1, b1, w2, b2, act):
    """y = act(x @ w1 + b1) @ w2 + b2 + x   (pos_mlp with pos_embed residual)."""
    M, K = x.shape
    H = w1.shape[1]
    N = w2.shape[1]
    per_row = 4 * K + 4 * N + 4 * H + 2 * H + 4 * N
    tm = _row_block(M, per_row)

    def kernel(x_ref, w1_ref, b1_ref, w2_ref, b2_ref, o_ref):
        h = jnp.dot(x_ref[...], w1_ref[...], preferred_element_type=jnp.float32)
        h = act(h + b1_ref[...])
        y = jnp.dot(h.astype(w2_ref.dtype), w2_ref[...],
                    preferred_element_type=jnp.float32)
        y = y + b2_ref[...] + x_ref[...].astype(jnp.float32)
        o_ref[...] = y.astype(o_ref.dtype)

    return pl.pallas_call(
        kernel,
        out_shape=jax.ShapeDtypeStruct((M, N), jnp.bfloat16),
        grid=(pl.cdiv(M, tm),),
        in_specs=[
            pl.BlockSpec((tm, K), lambda i: (i, 0)),
            _const_spec((K, H)),
            _const_spec((1, H)),
            _const_spec((H, N)),
            _const_spec((1, N)),
        ],
        out_specs=pl.BlockSpec((tm, N), lambda i: (i, 0)),
        compiler_params=_CPARAMS,
    )(x, w1, b1.reshape(1, -1), w2, b2.reshape(1, -1))


def pallas_edge_mlp(xa, xb, w1a, w1b, b1, w2, b2):
    """msg = gelu(xa @ w1a + xb @ w1b + b1) @ w2 + b2  (split-weight, no concat)."""
    M, K = xa.shape
    H = w1a.shape[1]
    N = w2.shape[1]
    per_row = 4 * K + 4 * K + 4 * N + 4 * H + 2 * H + 4 * N
    tm = _row_block(M, per_row)

    def kernel(a_ref, b_ref, w1a_ref, w1b_ref, b1_ref, w2_ref, b2_ref, o_ref):
        h = jnp.dot(a_ref[...], w1a_ref[...], preferred_element_type=jnp.float32)
        h = h + jnp.dot(b_ref[...], w1b_ref[...],
                        preferred_element_type=jnp.float32)
        h = _gelu(h + b1_ref[...])
        y = jnp.dot(h.astype(w2_ref.dtype), w2_ref[...],
                    preferred_element_type=jnp.float32)
        o_ref[...] = (y + b2_ref[...]).astype(o_ref.dtype)

    return pl.pallas_call(
        kernel,
        out_shape=jax.ShapeDtypeStruct((M, N), jnp.bfloat16),
        grid=(pl.cdiv(M, tm),),
        in_specs=[
            pl.BlockSpec((tm, K), lambda i: (i, 0)),
            pl.BlockSpec((tm, K), lambda i: (i, 0)),
            _const_spec((K, H)),
            _const_spec((K, H)),
            _const_spec((1, H)),
            _const_spec((H, N)),
            _const_spec((1, N)),
        ],
        out_specs=pl.BlockSpec((tm, N), lambda i: (i, 0)),
        compiler_params=_CPARAMS,
    )(xa, xb, w1a, w1b, b1.reshape(1, -1), w2, b2.reshape(1, -1))


def pallas_node_update(x, agg_sum, inv_deg, w1a, w1b, b1, w2, b2):
    """out = x + gelu(x @ w1a + (agg_sum*inv_deg) @ w1b + b1) @ w2 + b2.

    agg_sum is the f32 segment-sum of messages; inv_deg folds the mean.
    x (input 0) is aliased to the output (in-place residual update).
    """
    M, K = x.shape
    H = w1a.shape[1]
    N = w2.shape[1]
    per_row = 4 * K + 8 * K + 8 + 4 * N + 4 * H + 2 * H + 4 * N
    tm = _row_block(M, per_row)

    def kernel(x_ref, g_ref, d_ref, w1a_ref, w1b_ref, b1_ref,
               w2_ref, b2_ref, o_ref):
        xb = x_ref[...]
        h = jnp.dot(xb, w1a_ref[...], preferred_element_type=jnp.float32)
        g = (g_ref[...] * d_ref[...]).astype(w1b_ref.dtype)      # mean aggregation
        h = h + jnp.dot(g, w1b_ref[...], preferred_element_type=jnp.float32)
        h = _gelu(h + b1_ref[...])
        y = jnp.dot(h.astype(w2_ref.dtype), w2_ref[...],
                    preferred_element_type=jnp.float32)
        y = y + b2_ref[...] + xb.astype(jnp.float32)
        o_ref[...] = y.astype(o_ref.dtype)

    return pl.pallas_call(
        kernel,
        out_shape=jax.ShapeDtypeStruct((M, N), jnp.bfloat16),
        grid=(pl.cdiv(M, tm),),
        in_specs=[
            pl.BlockSpec((tm, K), lambda i: (i, 0)),
            pl.BlockSpec((tm, K), lambda i: (i, 0)),
            pl.BlockSpec((tm, 1), lambda i: (i, 0)),
            _const_spec((K, H)),
            _const_spec((K, H)),
            _const_spec((1, H)),
            _const_spec((H, N)),
            _const_spec((1, N)),
        ],
        out_specs=pl.BlockSpec((tm, N), lambda i: (i, 0)),
        input_output_aliases={0: 0},        # in-place residual update of x
        compiler_params=_CPARAMS,
    )(x, agg_sum, inv_deg, w1a, w1b, b1.reshape(1, -1), w2, b2.reshape(1, -1))


def pallas_sincos_embed(pos, freq_rows, phase):
    """ContinuousSincosEmbed: pos (M, ndim) f32 -> (M, dim) bf16.

    freq_rows (ndim, dim) and phase (1, dim) are host-precomputed (cos lanes
    carry a +pi/2 phase), so the kernel is a lane-dense multiply-add plus one
    jnp.sin over full tiles — no select, half the transcendental work.
    """
    M, ndim = pos.shape
    dim = freq_rows.shape[1]
    per_row = 8 * ndim + 4 * dim + 4 * dim
    tm = _row_block(M, per_row)

    def kernel(p_ref, f_ref, ph_ref, o_ref):
        p = p_ref[...]                                    # (tm, ndim) f32
        ang = ph_ref[...] + p[:, 0:1] * f_ref[0:1, :]     # (tm, dim)
        for a in range(1, ndim):
            ang = ang + p[:, a:a + 1] * f_ref[a:a + 1, :]
        o_ref[...] = jnp.sin(ang).astype(o_ref.dtype)

    return pl.pallas_call(
        kernel,
        out_shape=jax.ShapeDtypeStruct((M, dim), jnp.bfloat16),
        grid=(pl.cdiv(M, tm),),
        in_specs=[
            pl.BlockSpec((tm, ndim), lambda i: (i, 0)),
            _const_spec((ndim, dim)),
            _const_spec((1, dim)),
        ],
        out_specs=pl.BlockSpec((tm, dim), lambda i: (i, 0)),
        compiler_params=_CPARAMS,
    )(pos, freq_rows, phase)


# ----------------------------- parameter init -------------------------------

def _xavier_uniform(key, fan_in, fan_out):
    limit = (6.0 / (fan_in + fan_out)) ** 0.5
    return jax.random.uniform(key, (fan_in, fan_out), jnp.float32, -limit, limit)


class BaselineMeshEmbedPallas:
    def __init__(self, dim, depth, resolution, input_dim, key,
                 max_wavelength=10000.0):
        assert depth >= 1 and len(resolution) == 2
        self.dim = dim
        self.depth = depth
        self.resolution = tuple(resolution)
        self.num_grid_points = resolution[0] * resolution[1]
        self.input_dim = input_dim

        # Probe Buffered(1) support once, eagerly (outside any jit trace).
        _single_buffered_weights_ok()

        ndim = len(resolution)
        half = dim // (2 * ndim)
        assert 2 * ndim * half == dim, "dim must be divisible by 2*ndim"
        idx = jnp.arange(half, dtype=jnp.float32)
        omega = 1.0 / (max_wavelength ** (2.0 * idx / (2.0 * half)))   # (half,)
        freq = jnp.zeros((ndim, dim), jnp.float32)
        phase = jnp.zeros((dim,), jnp.float32)
        for a in range(ndim):
            off = a * 2 * half
            freq = freq.at[a, off:off + half].set(omega)               # sin lanes
            freq = freq.at[a, off + half:off + 2 * half].set(omega)    # cos lanes
            phase = phase.at[off + half:off + 2 * half].set(0.5 * jnp.pi)
        self.freq_rows = freq                        # (ndim, dim) f32
        self.phase = phase.reshape(1, dim)           # (1, dim)    f32

        keys = jax.random.split(key, 3 + 4 * depth)
        bf = jnp.bfloat16
        # proj: Linear(input_dim, dim), xavier uniform weight, zero bias
        self.proj_w = _xavier_uniform(keys[0], input_dim, dim).astype(bf)
        self.proj_b = jnp.zeros((dim,), jnp.float32)
        # pos_mlp: Linear(dim, dim) -> SiLU -> Linear(dim, dim), zero biases
        self.pm_w1 = _xavier_uniform(keys[1], dim, dim).astype(bf)
        self.pm_b1 = jnp.zeros((dim,), jnp.float32)
        self.pm_w2 = _xavier_uniform(keys[2], dim, dim).astype(bf)
        self.pm_b2 = jnp.zeros((dim,), jnp.float32)
        # GNN layers: concat weights sampled as one xavier matrix, then split
        # into the two (dim, dim) halves used by the split-weight kernels.
        self.gnn = []
        for d in range(depth):
            k = keys[3 + 4 * d: 3 + 4 * (d + 1)]
            wm1 = _xavier_uniform(k[0], 2 * dim, dim)
            wu1 = _xavier_uniform(k[2], 2 * dim, dim)
            self.gnn.append(dict(
                wm1a=wm1[:dim].astype(bf), wm1b=wm1[dim:].astype(bf),
                bm1=jnp.zeros((dim,), jnp.float32),
                wm2=_xavier_uniform(k[1], dim, dim).astype(bf),
                bm2=jnp.zeros((dim,), jnp.float32),
                wu1a=wu1[:dim].astype(bf), wu1b=wu1[dim:].astype(bf),
                bu1=jnp.zeros((dim,), jnp.float32),
                wu2=_xavier_uniform(k[3], dim, dim).astype(bf),
                bu2=jnp.zeros((dim,), jnp.float32),
            ))

    # ------------------------ GNN layer --------------------------------
    def _gnn_layer(self, x, src, dst, inv_deg, p):
        # TODO(synk): reference GNNLayer definition not provided; standard
        # message-passing layer (mean aggregation, residual update) is used.
        # TODO(synk): edge gathers + segment-sum remain XLA glue (data-dependent
        # row gather/scatter); all dense math runs in Pallas.
        x_src = jnp.take(x, src, axis=0)                     # (E, dim)
        x_dst = jnp.take(x, dst, axis=0)                     # (E, dim)
        msg = pallas_edge_mlp(x_src, x_dst,
                              p["wm1a"], p["wm1b"], p["bm1"],
                              p["wm2"], p["bm2"])            # (E, dim) bf16
        # accumulate in f32 (bf16 accumulation loses precision on high-degree
        # nodes); mean (1/deg) + residual are fused into the update kernel.
        agg_sum = jax.ops.segment_sum(msg.astype(jnp.float32), dst,
                                      num_segments=x.shape[0])
        return pallas_node_update(x, agg_sum, inv_deg,
                                  p["wu1a"], p["wu1b"], p["bu1"],
                                  p["wu2"], p["bu2"])

    # ------------------------ forward -----------------------------------
    def __call__(self, x, pos, batch_idx, edge_index, num_batches):
        G = self.num_grid_points
        dim = self.dim
        n = x.shape[0]
        # The reference's `cumsum(counts) - counts[0]` indexing is only correct
        # for equal per-batch node counts, so batch b owns rows
        # [b*per, (b+1)*per) and the grid points are its first G rows.
        assert n % num_batches == 0, "equal per-batch node counts required"
        per = n // num_batches

        pos_embed = pallas_sincos_embed(pos.astype(jnp.float32),
                                        self.freq_rows, self.phase)
        # proj(x) + pos_embed fused into one kernel (no standalone add pass).
        x = pallas_linear_add(x.astype(jnp.bfloat16), self.proj_w, self.proj_b,
                              pos_embed)

        # grid rows: pos_mlp(pos_embed) + pos_embed (residual fused in-kernel)
        pe_grid = pos_embed.reshape(num_batches, per, dim)[:, :G, :]
        grid_feats = pallas_mlp2_residual(
            pe_grid.reshape(num_batches * G, dim),
            self.pm_w1, self.pm_b1, self.pm_w2, self.pm_b2, _silu)
        x = (x.reshape(num_batches, per, dim)
               .at[:, :G, :].set(grid_feats.reshape(num_batches, G, dim))
               .reshape(n, dim))

        src = edge_index[:, 0]
        dst = edge_index[:, 1]
        # degree depends only on edge_index: compute once, pre-fold as 1/deg.
        deg = jax.ops.segment_sum(jnp.ones((dst.shape[0],), jnp.float32), dst,
                                  num_segments=n)
        inv_deg = (1.0 / jnp.maximum(deg, 1.0)).reshape(-1, 1)   # (N,1) f32

        for p in self.gnn:
            x = self._gnn_layer(x, src, dst, inv_deg, p)

        out = x.reshape(num_batches, per, dim)[:, :G, :]         # (B, G, dim)
        return out.astype(jnp.float32)


# ----------------------------- demo / test ----------------------------------

if __name__ == "__main__":
    key = jax.random.PRNGKey(0)
    k_param, k_x, k_pos, k_edge = jax.random.split(key, 4)

    # dim is a multiple of 128 so every kernel's output store is an unmasked
    # lane-dense vst and matmul columns fill the MXU.
    dim = 128
    depth = 2
    resolution = (4, 4)          # num_grid_points = 16
    input_dim = 8
    num_batches = 2
    nodes_per_sample = 32        # 16 grid points + 16 mesh nodes per sample
    N = num_batches * nodes_per_sample
    E = 256

    x = jax.random.normal(k_x, (N, input_dim), jnp.float32)
    pos = jax.random.uniform(k_pos, (N, 2), jnp.float32, 0.0, 10.0)
    batch_idx = jnp.repeat(jnp.arange(num_batches, dtype=jnp.int32),
                           nodes_per_sample)
    edge_index = jax.random.randint(k_edge, (E, 2), 0, N, dtype=jnp.int32)

    module = BaselineMeshEmbedPallas(dim, depth, resolution, input_dim, k_param)
    fwd = jax.jit(module.__call__, static_argnums=(4,))
    out = jax.block_until_ready(fwd(x, pos, batch_idx, edge_index, num_batches))

    assert out.shape == (num_batches, resolution[0] * resolution[1], dim), out.shape
    assert bool(jnp.all(jnp.isfinite(out)))
    print("KERNEL_OK")
</pallas_src>

<mosaic_0001>
module attributes {stable_mosaic.version = 11 : i64} {
  func.func @k(%arg0: i32, %arg1: memref<8x128xf32, #tpu.memory_space<vmem>>, %arg2: memref<8x128xf32, #tpu.memory_space<vmem>>) attributes {dimension_semantics = [#tpu.dimension_semantics<arbitrary>], iteration_bounds = array<i64: 2>, scalar_prefetch = 0 : i64, scratch_operands = 0 : i64, tpu.core_type = #tpu.core_type<tc>, window_params = [{pipeline_mode = #tpu.pipeline_mode<synchronous>, transform_indices = @transform_0, window_bounds = array<i64: 8, 128>}, {transform_indices = @transform_1, window_bounds = array<i64: 8, 128>}]} {
    %c0 = arith.constant 0 : index
    %c0_0 = arith.constant 0 : index
    %0 = vector.load %arg1[%c0, %c0_0] : memref<8x128xf32, #tpu.memory_space<vmem>>, vector<8x128xf32>
    %cst = arith.constant 1.000000e+00 : f32
    %1 = vector.broadcast %cst : f32 to vector<8x128xf32>
    %2 = arith.addf %0, %1 : vector<8x128xf32>
    %c0_1 = arith.constant 0 : index
    %c0_2 = arith.constant 0 : index
    %3 = vector.load %arg2[%c0_1, %c0_2] : memref<8x128xf32, #tpu.memory_space<vmem>>, vector<8x128xf32>
    tpu.vector_store %arg2[%c0_1, %c0_2], %2 {strides = array<i32>} : memref<8x128xf32, #tpu.memory_space<vmem>>, vector<8x128xf32>,
    return
  }
  func.func @transform_0(%arg0: i32) -> (i32, i32) {
    %c0_i32 = arith.constant 0 : i32
    %c0_i32_0 = arith.constant 0 : i32
    %c0_i32_1 = arith.constant 0 : i32
    return %c0_i32, %c0_i32_0 : i32, i32
  }
  func.func @transform_1(%arg0: i32) -> (i32, i32) {
    %c0_i32 = arith.constant 0 : i32
    %c0_i32_0 = arith.constant 0 : i32
    return %arg0, %c0_i32 : i32, i32
  }
}

module attributes {stable_mosaic.version = 11 : i64} {
  func.func private @main(%arg0: i32) attributes {dimension_semantics = [#tpu.dimension_semantics<core_parallel>], iteration_bounds = array<i64: 2>, tpu.core_type = #tpu.core_type<sc_scalar_subcore>, window_params = []} {
    return
  }
}

module attributes {stable_mosaic.version = 11 : i64} {
  func.func private @main(%arg0: i32) attributes {dimension_semantics = [#tpu.dimension_semantics<core_parallel>], iteration_bounds = array<i64: 2>, tpu.core_type = #tpu.core_type<sc_scalar_subcore>, window_params = []} {
    return
  }
}

module attributes {stable_mosaic.version = 11 : i64} {
  func.func @kernel(%arg0: i32, %arg1: memref<64x8xbf16, #tpu.memory_space<vmem>>, %arg2: memref<64x128xbf16, #tpu.memory_space<vmem>>, %arg3: memref<8x128xbf16, #tpu.memory_space<vmem>>, %arg4: memref<1x128xf32, #tpu.memory_space<vmem>>, %arg5: memref<64x128xbf16, #tpu.memory_space<vmem>>) attributes {dimension_semantics = [#tpu.dimension_semantics<parallel>], iteration_bounds = array<i64: 1>, scalar_prefetch = 0 : i64, scratch_operands = 0 : i64, tpu.core_type = #tpu.core_type<tc>, window_params = [{transform_indices = @transform_0, window_bounds = array<i64: 64, 8>}, {transform_indices = @transform_1, window_bounds = array<i64: 64, 128>}, {pipeline_mode = #tpu.pipeline_mode<synchronous>, transform_indices = @transform_2, window_bounds = array<i64: 8, 128>}, {pipeline_mode = #tpu.pipeline_mode<synchronous>, transform_indices = @transform_3, window_bounds = array<i64: 1, 128>}, {transform_indices = @transform_4, window_bounds = array<i64: 64, 128>}]} {
    %c0 = arith.constant 0 : index
    %c0_0 = arith.constant 0 : index
    %0 = vector.load %arg1[%c0, %c0_0] : memref<64x8xbf16, #tpu.memory_space<vmem>>, vector<64x8xbf16>
    %c0_1 = arith.constant 0 : index
    %c0_2 = arith.constant 0 : index
    %1 = vector.load %arg3[%c0_1, %c0_2] : memref<8x128xbf16, #tpu.memory_space<vmem>>, vector<8x128xbf16>
    %cst = arith.constant dense<0.000000e+00> : vector<64x128xf32>
    %2 = tpu.matmul %0, %1, %cst {dimension_numbers = #tpu.dot_dimension_numbers<[1], [0], [0], [1], [0, 0, 1, 1], [], []>} : vector<64x8xbf16>, vector<8x128xbf16>, vector<64x128xf32> -> vector<64x128xf32>
    %c0_3 = arith.constant 0 : index
    %c0_4 = arith.constant 0 : index
    %3 = vector.load %arg4[%c0_3, %c0_4] : memref<1x128xf32, #tpu.memory_space<vmem>>, vector<1x128xf32>
    %4 = vector.broadcast %3 : vector<1x128xf32> to vector<64x128xf32>
    %5 = arith.addf %2, %4 : vector<64x128xf32>
    %c0_5 = arith.constant 0 : index
    %c0_6 = arith.constant 0 : index
    %6 = vector.load %arg2[%c0_5, %c0_6] : memref<64x128xbf16, #tpu.memory_space<vmem>>, vector<64x128xbf16>
    %7 = arith.extf %6 : vector<64x128xbf16> to vector<64x128xf32>
    %8 = arith.addf %5, %7 : vector<64x128xf32>
    %9 = arith.truncf %8 : vector<64x128xf32> to vector<64x128xbf16>
    %c0_7 = arith.constant 0 : index
    %c0_8 = arith.constant 0 : index
    %10 = vector.load %arg5[%c0_7, %c0_8] : memref<64x128xbf16, #tpu.memory_space<vmem>>, vector<64x128xbf16>
    tpu.vector_store %arg5[%c0_7, %c0_8], %9 {strides = array<i32>} : memref<64x128xbf16, #tpu.memory_space<vmem>>, vector<64x128xbf16>,
    return
  }
  func.func @transform_0(%arg0: i32) -> (i32, i32) {
    %c0_i32 = arith.constant 0 : i32
    %c0_i32_0 = arith.constant 0 : i32
    return %arg0, %c0_i32 : i32, i32
  }
  func.func @transform_1(%arg0: i32) -> (i32, i32) {
    %c0_i32 = arith.constant 0 : i32
    %c0_i32_0 = arith.constant 0 : i32
    return %arg0, %c0_i32 : i32, i32
  }
  func.func @transform_2(%arg0: i32) -> (i32, i32) {
    %c0_i32 = arith.constant 0 : i32
    %c0_i32_0 = arith.constant 0 : i32
    %c0_i32_1 = arith.constant 0 : i32
    return %c0_i32, %c0_i32_0 : i32, i32
  }
  func.func @transform_3(%arg0: i32) -> (i32, i32) {
    %c0_i32 = arith.constant 0 : i32
    %c0_i32_0 = arith.constant 0 : i32
    %c0_i32_1 = arith.constant 0 : i32
    return %c0_i32, %c0_i32_0 : i32, i32
  }
  func.func @transform_4(%arg0: i32) -> (i32, i32) {
    %c0_i32 = arith.constant 0 : i32
    %c0_i32_0 = arith.constant 0 : i32
    return %arg0, %c0_i32 : i32, i32
  }
}

module attributes {stable_mosaic.version = 11 : i64} {
  func.func @kernel(%arg0: i32, %arg1: memref<64x2xf32, #tpu.memory_space<vmem>>, %arg2: memref<2x128xf32, #tpu.memory_space<vmem>>, %arg3: memref<1x128xf32, #tpu.memory_space<vmem>>, %arg4: memref<64x128xbf16, #tpu.memory_space<vmem>>) attributes {dimension_semantics = [#tpu.dimension_semantics<parallel>], iteration_bounds = array<i64: 1>, scalar_prefetch = 0 : i64, scratch_operands = 0 : i64, tpu.core_type = #tpu.core_type<tc>, window_params = [{transform_indices = @transform_0, window_bounds = array<i64: 64, 2>}, {pipeline_mode = #tpu.pipeline_mode<synchronous>, transform_indices = @transform_1, window_bounds = array<i64: 2, 128>}, {pipeline_mode = #tpu.pipeline_mode<synchronous>, transform_indices = @transform_2, window_bounds = array<i64: 1, 128>}, {transform_indices = @transform_3, window_bounds = array<i64: 64, 128>}]} {
    %c0 = arith.constant 0 : index
    %c0_0 = arith.constant 0 : index
    %0 = vector.load %arg1[%c0, %c0_0] : memref<64x2xf32, #tpu.memory_space<vmem>>, vector<64x2xf32>
    %c0_1 = arith.constant 0 : index
    %c0_2 = arith.constant 0 : index
    %1 = vector.load %arg3[%c0_1, %c0_2] : memref<1x128xf32, #tpu.memory_space<vmem>>, vector<1x128xf32>
    %2 = vector.extract_strided_slice %0 {offsets = [0, 0], sizes = [64, 1], strides = [1, 1]} : vector<64x2xf32> to vector<64x1xf32>
    %c0_3 = arith.constant 0 : index
    %c0_4 = arith.constant 0 : index
    %3 = vector.load %arg2[%c0_3, %c0_4] : memref<2x128xf32, #tpu.memory_space<vmem>>, vector<1x128xf32>
    %4 = vector.broadcast %2 : vector<64x1xf32> to vector<64x128xf32>
    %5 = vector.broadcast %3 : vector<1x128xf32> to vector<64x128xf32>
    %6 = arith.mulf %4, %5 : vector<64x128xf32>
    %7 = vector.broadcast %1 : vector<1x128xf32> to vector<64x128xf32>
    %8 = arith.addf %7, %6 : vector<64x128xf32>
    %9 = vector.extract_strided_slice %0 {offsets = [0, 1], sizes = [64, 1], strides = [1, 1]} : vector<64x2xf32> to vector<64x1xf32>
    %c1 = arith.constant 1 : index
    %c0_5 = arith.constant 0 : index
    %10 = vector.load %arg2[%c1, %c0_5] : memref<2x128xf32, #tpu.memory_space<vmem>>, vector<1x128xf32>
    %11 = vector.broadcast %9 : vector<64x1xf32> to vector<64x128xf32>
    %12 = vector.broadcast %10 : vector<1x128xf32> to vector<64x128xf32>
    %13 = arith.mulf %11, %12 : vector<64x128xf32>
    %14 = arith.addf %8, %13 : vector<64x128xf32>
    %15 = math.sin %14 : vector<64x128xf32>
    %16 = arith.truncf %15 : vector<64x128xf32> to vector<64x128xbf16>
    %c0_6 = arith.constant 0 : index
    %c0_7 = arith.constant 0 : index
    %17 = vector.load %arg4[%c0_6, %c0_7] : memref<64x128xbf16, #tpu.memory_space<vmem>>, vector<64x128xbf16>
    tpu.vector_store %arg4[%c0_6, %c0_7], %16 {strides = array<i32>} : memref<64x128xbf16, #tpu.memory_space<vmem>>, vector<64x128xbf16>,
    return
  }
  func.func @transform_0(%arg0: i32) -> (i32, i32) {
    %c0_i32 = arith.constant 0 : i32
    %c0_i32_0 = arith.constant 0 : i32
    return %arg0, %c0_i32 : i32, i32
  }
  func.func @transform_1(%arg0: i32) -> (i32, i32) {
    %c0_i32 = arith.constant 0 : i32
    %c0_i32_0 = arith.constant 0 : i32
    %c0_i32_1 = arith.constant 0 : i32
    return %c0_i32, %c0_i32_0 : i32, i32
  }
  func.func @transform_2(%arg0: i32) -> (i32, i32) {
    %c0_i32 = arith.constant 0 : i32
    %c0_i32_0 = arith.constant 0 : i32
    %c0_i32_1 = arith.constant 0 : i32
    return %c0_i32, %c0_i32_0 : i32, i32
  }
  func.func @transform_3(%arg0: i32) -> (i32, i32) {
    %c0_i32 = arith.constant 0 : i32
    %c0_i32_0 = arith.constant 0 : i32
    return %arg0, %c0_i32 : i32, i32
  }
}

module attributes {stable_mosaic.version = 11 : i64} {
  func.func @kernel(%arg0: i32, %arg1: memref<32x128xbf16, #tpu.memory_space<vmem>>, %arg2: memref<128x128xbf16, #tpu.memory_space<vmem>>, %arg3: memref<1x128xf32, #tpu.memory_space<vmem>>, %arg4: memref<128x128xbf16, #tpu.memory_space<vmem>>, %arg5: memref<1x128xf32, #tpu.memory_space<vmem>>, %arg6: memref<32x128xbf16, #tpu.memory_space<vmem>>) attributes {dimension_semantics = [#tpu.dimension_semantics<parallel>], iteration_bounds = array<i64: 1>, scalar_prefetch = 0 : i64, scratch_operands = 0 : i64, tpu.core_type = #tpu.core_type<tc>, window_params = [{transform_indices = @transform_0, window_bounds = array<i64: 32, 128>}, {pipeline_mode = #tpu.pipeline_mode<synchronous>, transform_indices = @transform_1, window_bounds = array<i64: 128, 128>}, {pipeline_mode = #tpu.pipeline_mode<synchronous>, transform_indices = @transform_2, window_bounds = array<i64: 1, 128>}, {pipeline_mode = #tpu.pipeline_mode<synchronous>, transform_indices = @transform_3, window_bounds = array<i64: 128, 128>}, {pipeline_mode = #tpu.pipeline_mode<synchronous>, transform_indices = @transform_4, window_bounds = array<i64: 1, 128>}, {transform_indices = @transform_5, window_bounds = array<i64: 32, 128>}]} {
    %c0 = arith.constant 0 : index
    %c0_0 = arith.constant 0 : index
    %0 = vector.load %arg1[%c0, %c0_0] : memref<32x128xbf16, #tpu.memory_space<vmem>>, vector<32x128xbf16>
    %c0_1 = arith.constant 0 : index
    %c0_2 = arith.constant 0 : index
    %1 = vector.load %arg2[%c0_1, %c0_2] : memref<128x128xbf16, #tpu.memory_space<vmem>>, vector<128x128xbf16>
    %cst = arith.constant dense<0.000000e+00> : vector<32x128xf32>
    %2 = tpu.matmul %0, %1, %cst {dimension_numbers = #tpu.dot_dimension_numbers<[1], [0], [0], [1], [0, 0, 1, 1], [], []>} : vector<32x128xbf16>, vector<128x128xbf16>, vector<32x128xf32> -> vector<32x128xf32>
    %c0_3 = arith.constant 0 : index
    %c0_4 = arith.constant 0 : index
    %3 = vector.load %arg3[%c0_3, %c0_4] : memref<1x128xf32, #tpu.memory_space<vmem>>, vector<1x128xf32>
    %4 = vector.broadcast %3 : vector<1x128xf32> to vector<32x128xf32>
    %5 = arith.addf %2, %4 : vector<32x128xf32>
    %cst_5 = arith.constant 0.000000e+00 : f32
    %6 = vector.broadcast %cst_5 : f32 to vector<32x128xf32>
    %7 = arith.subf %6, %5 : vector<32x128xf32>
    %8 = math.exp %7 : vector<32x128xf32>
    %cst_6 = arith.constant 1.000000e+00 : f32
    %9 = vector.broadcast %cst_6 : f32 to vector<32x128xf32>
    %10 = arith.addf %9, %8 : vector<32x128xf32>
    %11 = tpu.reciprocal %10 {approx = true} : vector<32x128xf32> -> vector<32x128xf32>
    %12 = arith.mulf %5, %11 : vector<32x128xf32>
    %13 = arith.truncf %12 : vector<32x128xf32> to vector<32x128xbf16>
    %c0_7 = arith.constant 0 : index
    %c0_8 = arith.constant 0 : index
    %14 = vector.load %arg4[%c0_7, %c0_8] : memref<128x128xbf16, #tpu.memory_space<vmem>>, vector<128x128xbf16>
    %cst_9 = arith.constant dense<0.000000e+00> : vector<32x128xf32>
    %15 = tpu.matmul %13, %14, %cst_9 {dimension_numbers = #tpu.dot_dimension_numbers<[1], [0], [0], [1], [0, 0, 1, 1], [], []>} : vector<32x128xbf16>, vector<128x128xbf16>, vector<32x128xf32> -> vector<32x128xf32>
    %c0_10 = arith.constant 0 : index
    %c0_11 = arith.constant 0 : index
    %16 = vector.load %arg5[%c0_10, %c0_11] : memref<1x128xf32, #tpu.memory_space<vmem>>, vector<1x128xf32>
    %17 = vector.broadcast %16 : vector<1x128xf32> to vector<32x128xf32>
    %18 = arith.addf %15, %17 : vector<32x128xf32>
    %c0_12 = arith.constant 0 : index
    %c0_13 = arith.constant 0 : index
    %19 = vector.load %arg1[%c0_12, %c0_13] : memref<32x128xbf16, #tpu.memory_space<vmem>>, vector<32x128xbf16>
    %20 = arith.extf %19 : vector<32x128xbf16> to vector<32x128xf32>
    %21 = arith.addf %18, %20 : vector<32x128xf32>
    %22 = arith.truncf %21 : vector<32x128xf32> to vector<32x128xbf16>
    %c0_14 = arith.constant 0 : index
    %c0_15 = arith.constant 0 : index
    %23 = vector.load %arg6[%c0_14, %c0_15] : memref<32x128xbf16, #tpu.memory_space<vmem>>, vector<32x128xbf16>
    tpu.vector_store %arg6[%c0_14, %c0_15], %22 {strides = array<i32>} : memref<32x128xbf16, #tpu.memory_space<vmem>>, vector<32x128xbf16>,
    return
  }
  func.func @transform_0(%arg0: i32) -> (i32, i32) {
    %c0_i32 = arith.constant 0 : i32
    %c0_i32_0 = arith.constant 0 : i32
    return %arg0, %c0_i32 : i32, i32
  }
  func.func @transform_1(%arg0: i32) -> (i32, i32) {
    %c0_i32 = arith.constant 0 : i32
    %c0_i32_0 = arith.constant 0 : i32
    %c0_i32_1 = arith.constant 0 : i32
    return %c0_i32, %c0_i32_0 : i32, i32
  }
  func.func @transform_2(%arg0: i32) -> (i32, i32) {
    %c0_i32 = arith.constant 0 : i32
    %c0_i32_0 = arith.constant 0 : i32
    %c0_i32_1 = arith.constant 0 : i32
    return %c0_i32, %c0_i32_0 : i32, i32
  }
  func.func @transform_3(%arg0: i32) -> (i32, i32) {
    %c0_i32 = arith.constant 0 : i32
    %c0_i32_0 = arith.constant 0 : i32
    %c0_i32_1 = arith.constant 0 : i32
    return %c0_i32, %c0_i32_0 : i32, i32
  }
  func.func @transform_4(%arg0: i32) -> (i32, i32) {
    %c0_i32 = arith.constant 0 : i32
    %c0_i32_0 = arith.constant 0 : i32
    %c0_i32_1 = arith.constant 0 : i32
    return %c0_i32, %c0_i32_0 : i32, i32
  }
  func.func @transform_5(%arg0: i32) -> (i32, i32) {
    %c0_i32 = arith.constant 0 : i32
    %c0_i32_0 = arith.constant 0 : i32
    return %arg0, %c0_i32 : i32, i32
  }
}

module attributes {stable_mosaic.version = 11 : i64} {
  func.func @kernel(%arg0: i32, %arg1: memref<256x128xbf16, #tpu.memory_space<vmem>>, %arg2: memref<256x128xbf16, #tpu.memory_space<vmem>>, %arg3: memref<128x128xbf16, #tpu.memory_space<vmem>>, %arg4: memref<128x128xbf16, #tpu.memory_space<vmem>>, %arg5: memref<1x128xf32, #tpu.memory_space<vmem>>, %arg6: memref<128x128xbf16, #tpu.memory_space<vmem>>, %arg7: memref<1x128xf32, #tpu.memory_space<vmem>>, %arg8: memref<256x128xbf16, #tpu.memory_space<vmem>>) attributes {dimension_semantics = [#tpu.dimension_semantics<parallel>], iteration_bounds = array<i64: 1>, scalar_prefetch = 0 : i64, scratch_operands = 0 : i64, tpu.core_type = #tpu.core_type<tc>, window_params = [{transform_indices = @transform_0, window_bounds = array<i64: 256, 128>}, {transform_indices = @transform_1, window_bounds = array<i64: 256, 128>}, {pipeline_mode = #tpu.pipeline_mode<synchronous>, transform_indices = @transform_2, window_bounds = array<i64: 128, 128>}, {pipeline_mode = #tpu.pipeline_mode<synchronous>, transform_indices = @transform_3, window_bounds = array<i64: 128, 128>}, {pipeline_mode = #tpu.pipeline_mode<synchronous>, transform_indices = @transform_4, window_bounds = array<i64: 1, 128>}, {pipeline_mode = #tpu.pipeline_mode<synchronous>, transform_indices = @transform_5, window_bounds = array<i64: 128, 128>}, {pipeline_mode = #tpu.pipeline_mode<synchronous>, transform_indices = @transform_6, window_bounds = array<i64: 1, 128>}, {transform_indices = @transform_7, window_bounds = array<i64: 256, 128>}]} {
    %c0 = arith.constant 0 : index
    %c0_0 = arith.constant 0 : index
    %0 = vector.load %arg1[%c0, %c0_0] : memref<256x128xbf16, #tpu.memory_space<vmem>>, vector<256x128xbf16>
    %c0_1 = arith.constant 0 : index
    %c0_2 = arith.constant 0 : index
    %1 = vector.load %arg3[%c0_1, %c0_2] : memref<128x128xbf16, #tpu.memory_space<vmem>>, vector<128x128xbf16>
    %cst = arith.constant dense<0.000000e+00> : vector<256x128xf32>
    %2 = tpu.matmul %0, %1, %cst {dimension_numbers = #tpu.dot_dimension_numbers<[1], [0], [0], [1], [0, 0, 1, 1], [], []>} : vector<256x128xbf16>, vector<128x128xbf16>, vector<256x128xf32> -> vector<256x128xf32>
    %c0_3 = arith.constant 0 : index
    %c0_4 = arith.constant 0 : index
    %3 = vector.load %arg2[%c0_3, %c0_4] : memref<256x128xbf16, #tpu.memory_space<vmem>>, vector<256x128xbf16>
    %c0_5 = arith.constant 0 : index
    %c0_6 = arith.constant 0 : index
    %4 = vector.load %arg4[%c0_5, %c0_6] : memref<128x128xbf16, #tpu.memory_space<vmem>>, vector<128x128xbf16>
    %cst_7 = arith.constant dense<0.000000e+00> : vector<256x128xf32>
    %5 = tpu.matmul %3, %4, %cst_7 {dimension_numbers = #tpu.dot_dimension_numbers<[1], [0], [0], [1], [0, 0, 1, 1], [], []>} : vector<256x128xbf16>, vector<128x128xbf16>, vector<256x128xf32> -> vector<256x128xf32>
    %6 = arith.addf %2, %5 : vector<256x128xf32>
    %c0_8 = arith.constant 0 : index
    %c0_9 = arith.constant 0 : index
    %7 = vector.load %arg5[%c0_8, %c0_9] : memref<1x128xf32, #tpu.memory_space<vmem>>, vector<1x128xf32>
    %8 = vector.broadcast %7 : vector<1x128xf32> to vector<256x128xf32>
    %9 = arith.addf %6, %8 : vector<256x128xf32>
    %10 = arith.mulf %9, %9 : vector<256x128xf32>
    %11 = arith.mulf %9, %10 : vector<256x128xf32>
    %cst_10 = arith.constant 4.471500e-02 : f32
    %12 = vector.broadcast %cst_10 : f32 to vector<256x128xf32>
    %13 = arith.mulf %12, %11 : vector<256x128xf32>
    %14 = arith.addf %9, %13 : vector<256x128xf32>
    %cst_11 = arith.constant 0.797884583 : f32
    %15 = vector.broadcast %cst_11 : f32 to vector<256x128xf32>
    %16 = arith.mulf %15, %14 : vector<256x128xf32>
    %17 = math.tanh %16 : vector<256x128xf32>
    %cst_12 = arith.constant 1.000000e+00 : f32
    %18 = vector.broadcast %cst_12 : f32 to vector<256x128xf32>
    %19 = arith.addf %18, %17 : vector<256x128xf32>
    %cst_13 = arith.constant 5.000000e-01 : f32
    %20 = vector.broadcast %cst_13 : f32 to vector<256x128xf32>
    %21 = arith.mulf %20, %19 : vector<256x128xf32>
    %22 = arith.mulf %9, %21 : vector<256x128xf32>
    %23 = arith.truncf %22 : vector<256x128xf32> to vector<256x128xbf16>
    %c0_14 = arith.constant 0 : index
    %c0_15 = arith.constant 0 : index
    %24 = vector.load %arg6[%c0_14, %c0_15] : memref<128x128xbf16, #tpu.memory_space<vmem>>, vector<128x128xbf16>
    %cst_16 = arith.constant dense<0.000000e+00> : vector<256x128xf32>
    %25 = tpu.matmul %23, %24, %cst_16 {dimension_numbers = #tpu.dot_dimension_numbers<[1], [0], [0], [1], [0, 0, 1, 1], [], []>} : vector<256x128xbf16>, vector<128x128xbf16>, vector<256x128xf32> -> vector<256x128xf32>
    %c0_17 = arith.constant 0 : index
    %c0_18 = arith.constant 0 : index
    %26 = vector.load %arg7[%c0_17, %c0_18] : memref<1x128xf32, #tpu.memory_space<vmem>>, vector<1x128xf32>
    %27 = vector.broadcast %26 : vector<1x128xf32> to vector<256x128xf32>
    %28 = arith.addf %25, %27 : vector<256x128xf32>
    %29 = arith.truncf %28 : vector<256x128xf32> to vector<256x128xbf16>
    %c0_19 = arith.constant 0 : index
    %c0_20 = arith.constant 0 : index
    %30 = vector.load %arg8[%c0_19, %c0_20] : memref<256x128xbf16, #tpu.memory_space<vmem>>, vector<256x128xbf16>
    tpu.vector_store %arg8[%c0_19, %c0_20], %29 {strides = array<i32>} : memref<256x128xbf16, #tpu.memory_space<vmem>>, vector<256x128xbf16>,
    return
  }
  func.func @transform_0(%arg0: i32) -> (i32, i32) {
    %c0_i32 = arith.constant 0 : i32
    %c0_i32_0 = arith.constant 0 : i32
    return %arg0, %c0_i32 : i32, i32
  }
  func.func @transform_1(%arg0: i32) -> (i32, i32) {
    %c0_i32 = arith.constant 0 : i32
    %c0_i32_0 = arith.constant 0 : i32
    return %arg0, %c0_i32 : i32, i32
  }
  func.func @transform_2(%arg0: i32) -> (i32, i32) {
    %c0_i32 = arith.constant 0 : i32
    %c0_i32_0 = arith.constant 0 : i32
    %c0_i32_1 = arith.constant 0 : i32
    return %c0_i32, %c0_i32_0 : i32, i32
  }
  func.func @transform_3(%arg0: i32) -> (i32, i32) {
    %c0_i32 = arith.constant 0 : i32
    %c0_i32_0 = arith.constant 0 : i32
    %c0_i32_1 = arith.constant 0 : i32
    return %c0_i32, %c0_i32_0 : i32, i32
  }
  func.func @transform_4(%arg0: i32) -> (i32, i32) {
    %c0_i32 = arith.constant 0 : i32
    %c0_i32_0 = arith.constant 0 : i32
    %c0_i32_1 = arith.constant 0 : i32
    return %c0_i32, %c0_i32_0 : i32, i32
  }
  func.func @transform_5(%arg0: i32) -> (i32, i32) {
    %c0_i32 = arith.constant 0 : i32
    %c0_i32_0 = arith.constant 0 : i32
    %c0_i32_1 = arith.constant 0 : i32
    return %c0_i32, %c0_i32_0 : i32, i32
  }
  func.func @transform_6(%arg0: i32) -> (i32, i32) {
    %c0_i32 = arith.constant 0 : i32
    %c0_i32_0 = arith.constant 0 : i32
    %c0_i32_1 = arith.constant 0 : i32
    return %c0_i32, %c0_i32_0 : i32, i32
  }
  func.func @transform_7(%arg0: i32) -> (i32, i32) {
    %c0_i32 = arith.constant 0 : i32
    %c0_i32_0 = arith.constant 0 : i32
    return %arg0, %c0_i32 : i32, i32
  }
}

module attributes {stable_mosaic.version = 11 : i64} {
  func.func @kernel(%arg0: i32, %arg1: memref<64x128xbf16, #tpu.memory_space<vmem>>, %arg2: memref<64x128xf32, #tpu.memory_space<vmem>>, %arg3: memref<64x1xf32, #tpu.memory_space<vmem>>, %arg4: memref<128x128xbf16, #tpu.memory_space<vmem>>, %arg5: memref<128x128xbf16, #tpu.memory_space<vmem>>, %arg6: memref<1x128xf32, #tpu.memory_space<vmem>>, %arg7: memref<128x128xbf16, #tpu.memory_space<vmem>>, %arg8: memref<1x128xf32, #tpu.memory_space<vmem>>, %arg9: memref<64x128xbf16, #tpu.memory_space<vmem>>) attributes {dimension_semantics = [#tpu.dimension_semantics<parallel>], iteration_bounds = array<i64: 1>, scalar_prefetch = 0 : i64, scratch_operands = 0 : i64, tpu.core_type = #tpu.core_type<tc>, window_params = [{transform_indices = @transform_0, window_bounds = array<i64: 64, 128>}, {transform_indices = @transform_1, window_bounds = array<i64: 64, 128>}, {transform_indices = @transform_2, window_bounds = array<i64: 64, 1>}, {pipeline_mode = #tpu.pipeline_mode<synchronous>, transform_indices = @transform_3, window_bounds = array<i64: 128, 128>}, {pipeline_mode = #tpu.pipeline_mode<synchronous>, transform_indices = @transform_4, window_bounds = array<i64: 128, 128>}, {pipeline_mode = #tpu.pipeline_mode<synchronous>, transform_indices = @transform_5, window_bounds = array<i64: 1, 128>}, {pipeline_mode = #tpu.pipeline_mode<synchronous>, transform_indices = @transform_6, window_bounds = array<i64: 128, 128>}, {pipeline_mode = #tpu.pipeline_mode<synchronous>, transform_indices = @transform_7, window_bounds = array<i64: 1, 128>}, {transform_indices = @transform_8, window_bounds = array<i64: 64, 128>}]} {
    %c0 = arith.constant 0 : index
    %c0_0 = arith.constant 0 : index
    %0 = vector.load %arg1[%c0, %c0_0] : memref<64x128xbf16, #tpu.memory_space<vmem>>, vector<64x128xbf16>
    %c0_1 = arith.constant 0 : index
    %c0_2 = arith.constant 0 : index
    %1 = vector.load %arg4[%c0_1, %c0_2] : memref<128x128xbf16, #tpu.memory_space<vmem>>, vector<128x128xbf16>
    %cst = arith.constant dense<0.000000e+00> : vector<64x128xf32>
    %2 = tpu.matmul %0, %1, %cst {dimension_numbers = #tpu.dot_dimension_numbers<[1], [0], [0], [1], [0, 0, 1, 1], [], []>} : vector<64x128xbf16>, vector<128x128xbf16>, vector<64x128xf32> -> vector<64x128xf32>
    %c0_3 = arith.constant 0 : index
    %c0_4 = arith.constant 0 : index
    %3 = vector.load %arg2[%c0_3, %c0_4] : memref<64x128xf32, #tpu.memory_space<vmem>>, vector<64x128xf32>
    %c0_5 = arith.constant 0 : index
    %c0_6 = arith.constant 0 : index
    %4 = vector.load %arg3[%c0_5, %c0_6] : memref<64x1xf32, #tpu.memory_space<vmem>>, vector<64x1xf32>
    %5 = vector.broadcast %4 : vector<64x1xf32> to vector<64x128xf32>
    %6 = arith.mulf %3, %5 : vector<64x128xf32>
    %7 = arith.truncf %6 : vector<64x128xf32> to vector<64x128xbf16>
    %c0_7 = arith.constant 0 : index
    %c0_8 = arith.constant 0 : index
    %8 = vector.load %arg5[%c0_7, %c0_8] : memref<128x128xbf16, #tpu.memory_space<vmem>>, vector<128x128xbf16>
    %cst_9 = arith.constant dense<0.000000e+00> : vector<64x128xf32>
    %9 = tpu.matmul %7, %8, %cst_9 {dimension_numbers = #tpu.dot_dimension_numbers<[1], [0], [0], [1], [0, 0, 1, 1], [], []>} : vector<64x128xbf16>, vector<128x128xbf16>, vector<64x128xf32> -> vector<64x128xf32>
    %10 = arith.addf %2, %9 : vector<64x128xf32>
    %c0_10 = arith.constant 0 : index
    %c0_11 = arith.constant 0 : index
    %11 = vector.load %arg6[%c0_10, %c0_11] : memref<1x128xf32, #tpu.memory_space<vmem>>, vector<1x128xf32>
    %12 = vector.broadcast %11 : vector<1x128xf32> to vector<64x128xf32>
    %13 = arith.addf %10, %12 : vector<64x128xf32>
    %14 = arith.mulf %13, %13 : vector<64x128xf32>
    %15 = arith.mulf %13, %14 : vector<64x128xf32>
    %cst_12 = arith.constant 4.471500e-02 : f32
    %16 = vector.broadcast %cst_12 : f32 to vector<64x128xf32>
    %17 = arith.mulf %16, %15 : vector<64x128xf32>
    %18 = arith.addf %13, %17 : vector<64x128xf32>
    %cst_13 = arith.constant 0.797884583 : f32
    %19 = vector.broadcast %cst_13 : f32 to vector<64x128xf32>
    %20 = arith.mulf %19, %18 : vector<64x128xf32>
    %21 = math.tanh %20 : vector<64x128xf32>
    %cst_14 = arith.constant 1.000000e+00 : f32
    %22 = vector.broadcast %cst_14 : f32 to vector<64x128xf32>
    %23 = arith.addf %22, %21 : vector<64x128xf32>
    %cst_15 = arith.constant 5.000000e-01 : f32
    %24 = vector.broadcast %cst_15 : f32 to vector<64x128xf32>
    %25 = arith.mulf %24, %23 : vector<64x128xf32>
    %26 = arith.mulf %13, %25 : vector<64x128xf32>
    %27 = arith.truncf %26 : vector<64x128xf32> to vector<64x128xbf16>
    %c0_16 = arith.constant 0 : index
    %c0_17 = arith.constant 0 : index
    %28 = vector.load %arg7[%c0_16, %c0_17] : memref<128x128xbf16, #tpu.memory_space<vmem>>, vector<128x128xbf16>
    %cst_18 = arith.constant dense<0.000000e+00> : vector<64x128xf32>
    %29 = tpu.matmul %27, %28, %cst_18 {dimension_numbers = #tpu.dot_dimension_numbers<[1], [0], [0], [1], [0, 0, 1, 1], [], []>} : vector<64x128xbf16>, vector<128x128xbf16>, vector<64x128xf32> -> vector<64x128xf32>
    %c0_19 = arith.constant 0 : index
    %c0_20 = arith.constant 0 : index
    %30 = vector.load %arg8[%c0_19, %c0_20] : memref<1x128xf32, #tpu.memory_space<vmem>>, vector<1x128xf32>
    %31 = vector.broadcast %30 : vector<1x128xf32> to vector<64x128xf32>
    %32 = arith.addf %29, %31 : vector<64x128xf32>
    %33 = arith.extf %0 : vector<64x128xbf16> to vector<64x128xf32>
    %34 = arith.addf %32, %33 : vector<64x128xf32>
    %35 = arith.truncf %34 : vector<64x128xf32> to vector<64x128xbf16>
    %c0_21 = arith.constant 0 : index
    %c0_22 = arith.constant 0 : index
    %36 = vector.load %arg9[%c0_21, %c0_22] : memref<64x128xbf16, #tpu.memory_space<vmem>>, vector<64x128xbf16>
    tpu.vector_store %arg9[%c0_21, %c0_22], %35 {strides = array<i32>} : memref<64x128xbf16, #tpu.memory_space<vmem>>, vector<64x128xbf16>,
    return
  }
  func.func @transform_0(%arg0: i32) -> (i32, i32) {
    %c0_i32 = arith.constant 0 : i32
    %c0_i32_0 = arith.constant 0 : i32
    return %arg0, %c0_i32 : i32, i32
  }
  func.func @transform_1(%arg0: i32) -> (i32, i32) {
    %c0_i32 = arith.constant 0 : i32
    %c0_i32_0 = arith.constant 0 : i32
    return %arg0, %c0_i32 : i32, i32
  }
  func.func @transform_2(%arg0: i32) -> (i32, i32) {
    %c0_i32 = arith.constant 0 : i32
    %c0_i32_0 = arith.constant 0 : i32
    return %arg0, %c0_i32 : i32, i32
  }
  func.func @transform_3(%arg0: i32) -> (i32, i32) {
    %c0_i32 = arith.constant 0 : i32
    %c0_i32_0 = arith.constant 0 : i32
    %c0_i32_1 = arith.constant 0 : i32
    return %c0_i32, %c0_i32_0 : i32, i32
  }
  func.func @transform_4(%arg0: i32) -> (i32, i32) {
    %c0_i32 = arith.constant 0 : i32
    %c0_i32_0 = arith.constant 0 : i32
    %c0_i32_1 = arith.constant 0 : i32
    return %c0_i32, %c0_i32_0 : i32, i32
  }
  func.func @transform_5(%arg0: i32) -> (i32, i32) {
    %c0_i32 = arith.constant 0 : i32
    %c0_i32_0 = arith.constant 0 : i32
    %c0_i32_1 = arith.constant 0 : i32
    return %c0_i32, %c0_i32_0 : i32, i32
  }
  func.func @transform_6(%arg0: i32) -> (i32, i32) {
    %c0_i32 = arith.constant 0 : i32
    %c0_i32_0 = arith.constant 0 : i32
    %c0_i32_1 = arith.constant 0 : i32
    return %c0_i32, %c0_i32_0 : i32, i32
  }
  func.func @transform_7(%arg0: i32) -> (i32, i32) {
    %c0_i32 = arith.constant 0 : i32
    %c0_i32_0 = arith.constant 0 : i32
    %c0_i32_1 = arith.constant 0 : i32
    return %c0_i32, %c0_i32_0 : i32, i32
  }
  func.func @transform_8(%arg0: i32) -> (i32, i32) {
    %c0_i32 = arith.constant 0 : i32
    %c0_i32_0 = arith.constant 0 : i32
    return %arg0, %c0_i32 : i32, i32
  }
}

</mosaic_0001>

<llo_original>
// kernel: tpu_custom_call.1
$region0: #{tpu_custom_call.1}
  #allocation0 [shape = 'u32[]', space=smem, size = 0x4, offset = 0x4, fixed_abs, tag = 'smem constant byte address 0x4 - core index']
  #allocation1 [shape = 'u32[144,128]{1,0:T(1,128)}', space=vmem, size = 0x12000, scoped, tag = 'internal scratch']
  %s0 = inlined_call_operand.hbm [shape: f32[8,128], index: 0, kind: input, shape index: {}]
  %s1 = inlined_call_operand.hbm [shape: f32[16,128], index: 1, kind: output, shape index: {}]
  %s2 = sld [smem:[#allocation0]]
  $region41: #{tpu_custom_call.1} parent=0
    _
  %s4 = ssub.s32 1, %s2
  %s5 = scalar_select 0, %s4, %s2
  $region1: #{tpu_custom_call.1} parent=0
    #allocation2 [shape = 'u8[4096]{0}', space=vmem, size = 0x1000, scoped, tag = 'input window, operand 0, single buffered']
    #allocation3 [shape = 's32[2]{0}', space=sflag, size = 0x8, scoped, tag = 'scoped memory for tpu_custom_call.1']
    #allocation4 [shape = 's32[2]{0}', space=sflag, size = 0x8, scoped, tag = 'scoped memory for tpu_custom_call.1']
    #allocation5 [shape = 'u8[8192]{0}', space=vmem, size = 0x2000, scoped, tag = 'output window, operand 0']
    %6 = vsyncpa [#allocation3], 0
    %7 = vsyncpa [#allocation4], 0
    %s8 = scalar_lea.sflag [#allocation4], 1
    %9 = vsyncpa %s8, 0
    loop: start=0, step=1, limit=4
    $region2: #{tpu_custom_call.1} parent=1 // loop_pre_header
      _
    $region3: #{tpu_custom_call.1} parent=1 // loop_header
      %s11 = sphi 0, %s15
      %p12 = scmp.ge.s32.totalorder %s11, 4
      %s19 = sphi 0, %s19
      %s21 = sphi 0, %s19
      %s22 = sphi 0, %s21
      %s36 = sphi 0, %s22
      %s42 = sphi 0, %s44
      %s45 = sphi 0, %s42
      %s46 = sphi 0, %s45
      %s62 = sphi 0, %s46
    $region4: #{tpu_custom_call.1} parent=1 // loop_header_branch
      %14 = sbr.rel (%p12) target = $region8
    $region5: #{tpu_custom_call.1} parent=1 // loop_body
      %s16 = ssub.s32 %s11, 1
      %s17 = ssub.s32 %s11, 2
      %s18 = sadd.s32 %s11, 1
      %s20 = sadd.s32 %s19, 1
      %p23 = scmp.eq.s32.totalorder %s11, 1
      %p24 = scmp.ne.s32.totalorder %s19, %s21
      %p25 = scmp.eq.s32.totalorder %s11, 0
      %p26 = por %p24, %p25
      %p27 = scmp.ne.s32.totalorder %s19, %s21
      %p28 = scmp.eq.s32.totalorder %s16, 1
      %p29 = por %p27, %p28
      %p30 = scmp.ne.s32.totalorder %s21, %s22
      %p31 = scmp.eq.s32.totalorder %s16, 0
      %p32 = por %p30, %p31
      %p33 = scmp.ne.s32.totalorder %s21, %s22
      %p34 = scmp.eq.s32.totalorder %s17, 1
      %p35 = por %p33, %p34
      %p37 = scmp.ne.s32.totalorder %s22, %s36
      %p38 = scmp.eq.s32.totalorder %s17, 0
      %p39 = por %p37, %p38
      %s40 = ssub.s32 %s11, %s18
      %p41 = scmp.eq.s32.totalorder %s40, 0
      %s43 = sadd.s32 %s42, 1
      %s44 = scalar_select %p41, %s42, %s43
      %p47 = pneg %p41
      %p48 = scmp.eq.s32.totalorder %s11, 1
      %p49 = por %p47, %p48
      %p50 = scmp.ne.s32.totalorder %s42, %s45
      %p51 = scmp.eq.s32.totalorder %s11, 0
      %p52 = por %p50, %p51
      %p53 = scmp.ne.s32.totalorder %s42, %s45
      %p54 = scmp.eq.s32.totalorder %s16, 1
      %p55 = por %p53, %p54
      %p56 = scmp.ne.s32.totalorder %s45, %s46
      %p57 = scmp.eq.s32.totalorder %s16, 0
      %p58 = por %p56, %p57
      %p59 = scmp.ne.s32.totalorder %s45, %s46
      %p60 = scmp.eq.s32.totalorder %s17, 1
      %p61 = por %p59, %p60
      %p63 = scmp.ne.s32.totalorder %s46, %s62
      %p64 = scmp.eq.s32.totalorder %s17, 0
      %p65 = por %p63, %p64
      %p66 = scmp.le.s32.totalorder 1, %s11
      %p67 = scmp.lt.s32.totalorder %s11, 3
      %p68 = pnand %p66, %p67
      %p69 = pneg %p68
      // Predicated region
      $region9: #{tpu_custom_call.1} parent=5 // pred_check
        _
      $region10: #{tpu_custom_call.1} parent=5 // pred_check_branch
        %71 = sbr.rel (%p68) target = $region12
      $region11: #{tpu_custom_call.1} parent=5 // pred_region
        %s72 = ssub.s32 %s11, 1
        // Predicated region
        $region13: #{tpu_custom_call.1} parent=11 // pred_check
          %p73 = pneg %p32
        $region14: #{tpu_custom_call.1} parent=11 // pred_check_branch
          %75 = sbr.rel (%p73) target = $region16
        $region15: #{tpu_custom_call.1} parent=11 // pred_region
          %s77 = ssub.s32 128, 128
          %78 = vsyncadd [#allocation3], %s77
          %s80 = sshll.u32 [#allocation2], 4
          %s81 = int_to_ptr.vmem [resolvable:$true] %s80
          %83 = dma.hbm_to_vmem [thread:$0]  %s0, 128, %s81, [#allocation3]
        $region16: #{tpu_custom_call.1} parent=11 // pred_fallthru
          _
      $region12: #{tpu_custom_call.1} parent=5 // pred_fallthru
        _
      %p84 = scmp.lt.s32.totalorder %s11, 2
      // Predicated region
      $region17: #{tpu_custom_call.1} parent=5 // pred_check
        %p85 = pneg %p84
      $region18: #{tpu_custom_call.1} parent=5 // pred_check_branch
        %87 = sbr.rel (%p85) target = $region20
      $region19: #{tpu_custom_call.1} parent=5 // pred_region
        _
      $region20: #{tpu_custom_call.1} parent=5 // pred_fallthru
        _
      %p88 = scmp.le.s32.totalorder 1, %s11
      %p89 = scmp.lt.s32.totalorder %s11, 3
      %p90 = pnand %p88, %p89
      %p91 = pneg %p90
      // Predicated region
      $region21: #{tpu_custom_call.1} parent=5 // pred_check
        _
      $region22: #{tpu_custom_call.1} parent=5 // pred_check_branch
        %93 = sbr.rel (%p90) target = $region24
      $region23: #{tpu_custom_call.1} parent=5 // pred_region
        %s94 = ssub.s32 %s11, 1
        // Predicated region
        $region25: #{tpu_custom_call.1} parent=23 // pred_check
          %p95 = pneg %p32
        $region26: #{tpu_custom_call.1} parent=23 // pred_check_branch
          %97 = sbr.rel (%p95) target = $region28
        $region27: #{tpu_custom_call.1} parent=23 // pred_region
          %98 = dma.done [#allocation3], 128
        $region28: #{tpu_custom_call.1} parent=23 // pred_fallthru
          _
        %p99 = pneg %p32
        %p100 = pneg %p29
        %p101 = pneg %p58
        %p102 = pneg %p55
        %s103 = sand.u32 %s45, 1
        %s104 = scalar_lea.sflag [#allocation4], %s103
        %s105 = sand.u32 %s45, 1
        %s106 = smul.addr %s105, 8
        %s107 = scalar_lea.vmem [#allocation5], %s106
        %v108 = vld [vmem:[#allocation2] sm:$0xff]
        %v109 = vadd.f32 %v108, 1.0
        %110 = vst [vmem:[%s107] sm:$0xff] %v109
        %s111 = sand.u32 %s45, 1
        %s112 = scalar_lea.sflag [#allocation4], %s111
        %s113 = sand.u32 %s45, 1
        %s114 = smul.addr %s113, 8
        %s115 = scalar_lea.vmem [#allocation5], %s114
        // Predicated region
        $region29: #{tpu_custom_call.1} parent=23 // pred_check
          %p116 = pneg %p55
        $region30: #{tpu_custom_call.1} parent=23 // pred_check_branch
          %118 = sbr.rel (%p116) target = $region32
        $region31: #{tpu_custom_call.1} parent=23 // pred_region
          %s120 = ssub.s32 128, 128
          %121 = vsyncadd %s112, %s120
          %s122 = smul.addr %s16, 128
          %s123 = scalar_lea.hbm %s1, %s122
          %s125 = sshll.u32 %s115, 4
          %s126 = int_to_ptr.vmem [resolvable:$true] %s125
          %128 = dma.vmem_to_hbm [thread:$0]  %s126, 128, %s123, %s112
        $region32: #{tpu_custom_call.1} parent=23 // pred_fallthru
          _
      $region24: #{tpu_custom_call.1} parent=5 // pred_fallthru
        _
      %p129 = scmp.le.s32.totalorder 2, %s11
      // Predicated region
      $region33: #{tpu_custom_call.1} parent=5 // pred_check
        %p130 = pneg %p129
      $region34: #{tpu_custom_call.1} parent=5 // pred_check_branch
        %132 = sbr.rel (%p130) target = $region36
      $region35: #{tpu_custom_call.1} parent=5 // pred_region
        %s133 = ssub.s32 %s11, 2
        // Predicated region
        $region37: #{tpu_custom_call.1} parent=35 // pred_check
          %p134 = pneg %p61
        $region38: #{tpu_custom_call.1} parent=35 // pred_check_branch
          %136 = sbr.rel (%p134) target = $region40
        $region39: #{tpu_custom_call.1} parent=35 // pred_region
          %s137 = sand.u32 %s46, 1
          %s138 = scalar_lea.sflag [#allocation4], %s137
          %s139 = sand.u32 %s46, 1
          %s140 = smul.addr %s139, 8
          %s141 = scalar_lea.vmem [#allocation5], %s140
          %142 = dma.done %s138, 128
        $region40: #{tpu_custom_call.1} parent=35 // pred_fallthru
          _
      $region36: #{tpu_custom_call.1} parent=5 // pred_fallthru
        _
    $region6: #{tpu_custom_call.1} parent=1 // loop_footer
      %s15 = sadd.s32 1, %s11
    $region7: #{tpu_custom_call.1} parent=1 // loop_footer_branch
      %10 = sbr.rel target = $region3
    $region8: #{tpu_custom_call.1} parent=1 // loop_exit
      _
    %143 = vsyncpa [#allocation3], 1
    %s144 = scalar_lea.sflag [#allocation3], 1
    %145 = vsyncpa %s144, 1
    %146 = vsyncpa [#allocation4], 1
    %s147 = scalar_lea.sflag [#allocation4], 1
    %148 = vsyncpa %s147, 1

// kernel: a_call__.8
$region0: #{a_call__.8}
  #allocation0 [shape = 'u32[]', space=smem, size = 0x4, offset = 0x4, fixed_abs, tag = 'smem constant byte address 0x4 - core index']
  #allocation1 [shape = 'u32[144,128]{1,0:T(1,128)}', space=vmem, size = 0x12000, scoped, tag = 'internal scratch']
  %s0 = inlined_call_operand.vmem [shape: bf16[64,8], index: 0, kind: input, shape index: {}]
  %s1 = inlined_call_operand.vmem [shape: bf16[64,128], index: 1, kind: input, shape index: {}]
  %s2 = inlined_call_operand.vmem [shape: bf16[8,128], index: 2, kind: input, shape index: {}]
  %s3 = inlined_call_operand.vmem [shape: f32[1,128], index: 3, kind: input, shape index: {}]
  %s4 = inlined_call_operand.vmem [shape: bf16[64,128], index: 4, kind: output, shape index: {}]
  %s5 = sld [smem:[#allocation0]]
  $region26: #{a_call__.8} parent=0
    _
  %s7 = ssub.s32 1, %s5
  %s8 = scalar_select 0, %s7, %s5
  // Predicated region
  $region2: #{a_call__.8} parent=0 // pred_check
    _
  $region3: #{a_call__.8} parent=0 // pred_check_branch
    %10 = sbr.rel (0) target = $region5
  $region4: #{a_call__.8} parent=0 // pred_region
    _
  $region5: #{a_call__.8} parent=0 // pred_fallthru
    _
  // Predicated region
  $region6: #{a_call__.8} parent=0 // pred_check
    _
  $region7: #{a_call__.8} parent=0 // pred_check_branch
    %12 = sbr.rel (0) target = $region9
  $region8: #{a_call__.8} parent=0 // pred_region
    _
  $region9: #{a_call__.8} parent=0 // pred_fallthru
    _
  // Predicated region
  $region10: #{a_call__.8} parent=0 // pred_check
    _
  $region11: #{a_call__.8} parent=0 // pred_check_branch
    %14 = sbr.rel (0) target = $region13
  $region12: #{a_call__.8} parent=0 // pred_region
    _
  $region13: #{a_call__.8} parent=0 // pred_fallthru
    _
  // Predicated region
  $region14: #{a_call__.8} parent=0 // pred_check
    _
  $region15: #{a_call__.8} parent=0 // pred_check_branch
    %16 = sbr.rel (0) target = $region17
  $region16: #{a_call__.8} parent=0 // pred_region
    _
  $region17: #{a_call__.8} parent=0 // pred_fallthru
    _
  %v18 = vld [vmem:[%s0] sm:$0xf]
  %v19 = vld [vmem:[%s0 + $0x4] sm:$0xf]
  %v20 = vld [vmem:[%s0 + $0x8] sm:$0xf]
  %v21 = vld [vmem:[%s0 + $0xc] sm:$0xf]
  %v22 = vld [vmem:[%s0 + $0x10] sm:$0xf]
  %v23 = vld [vmem:[%s0 + $0x14] sm:$0xf]
  %v24 = vld [vmem:[%s0 + $0x18] sm:$0xf]
  %v25 = vld [vmem:[%s0 + $0x1c] sm:$0xf]
  %v26 = vld [vmem:[%s2] sm:$0xf]
  %v27 = vld [vmem:[%s3] sm:$0x1]
  %v29 = vlaneseq
  %v30 = vshrl.u32 %v29, 7
  %v31 = vsub.s32 0, %v30
  %v32 = vrot.slane %v27, %v31
  %v42 = vunpack.c.l.b16 %v18
  %v43 = vunpack.c.l.b16 %v19
  %v44 = vunpack.c.l.b16 %v20
  %v45 = vunpack.c.l.b16 %v21
  %v46 = vunpack.c.l.b16 %v22
  %v47 = vunpack.c.l.b16 %v23
  %v48 = vunpack.c.l.b16 %v24
  %v49 = vunpack.c.l.b16 %v25
  %v50 = vpack.c.b16 %v43, %v42
  %v51 = vpack.c.b16 %v45, %v44
  %v52 = vpack.c.b16 %v47, %v46
  %v53 = vpack.c.b16 %v49, %v48
  %vm54 = vcmask 64512
  %v56 = vsel %vm54, %v50, 0
  %v59 = vsel %vm54, %v51, 0
  %v62 = vsel %vm54, %v52, 0
  %v65 = vsel %vm54, %v53, 0
  %vm67 = vcmask 1043456
  %v69 = vsel %vm67, %v26, 0
  %71 = vmatprep.subr.bf16.mxu0 0
  %72 = vmatpush1.bf16.msra.mxu0 %v69
  %73 = vmatprep.subr.bf16.mxu0 0
  %74 = vmatpush1.bf16.msra.mxu0 0
  %75 = vmatprep.subr.bf16.mxu0 0
  %76 = vmatpush1.bf16.msra.mxu0 0
  %77 = vmatprep.subr.bf16.mxu0 0
  %78 = vmatpush1.bf16.msra.mxu0 0
  %79 = vmatprep.subr.bf16.mxu0 0
  %80 = vmatpush1.bf16.msra.mxu0 0
  %81 = vmatprep.subr.bf16.mxu0 0
  %82 = vmatpush1.bf16.msra.mxu0 0
  %83 = vmatprep.subr.bf16.mxu0 0
  %84 = vmatpush1.bf16.msra.mxu0 0
  %85 = vmatprep.subr.bf16.mxu0 0
  %86 = vmatpush1.bf16.msra.mxu0 0
  %87 = vmatprep.subr.bf16.mxu0 0
  %88 = vmatpush1.bf16.msra.mxu0 0
  %89 = vmatprep.subr.bf16.mxu0 0
  %90 = vmatpush1.bf16.msra.mxu0 0
  %91 = vmatprep.subr.bf16.mxu0 0
  %92 = vmatpush1.bf16.msra.mxu0 0
  %93 = vmatprep.subr.bf16.mxu0 0
  %94 = vmatpush1.bf16.msra.mxu0 0
  %95 = vmatprep.subr.bf16.mxu0 0
  %96 = vmatpush1.bf16.msra.mxu0 0
  %97 = vmatprep.subr.bf16.mxu0 0
  %98 = vmatpush1.bf16.msra.mxu0 0
  %99 = vmatprep.subr.bf16.mxu0 0
  %100 = vmatpush1.bf16.msra.mxu0 0
  %101 = vmatprep.subr.bf16.mxu0 0
  %102 = vmatpush1.bf16.msra.mxu0 0
  %103 = vmatprep.mubr.bf16.mxu0 0
  %104 = vmatmul.mubr.bf16.gmra.mrb[0].mxu0 %v56
  %v105 = vpop.f32.mrb[0].mxu0
  %v106 = vadd.f32 %v32, %v105
  %v107 = vpop.f32.mrb[0].mxu0
  %v108 = vpop.f32.mrb[0].mxu0
  %v109 = vadd.f32 %v32, %v108
  %v110 = vpop.f32.mrb[0].mxu0
  %111 = vmatprep.mubr.bf16.mxu0 0
  %112 = vmatmul.mubr.bf16.gmra.mrb[0].mxu0 %v59
  %v113 = vpop.f32.mrb[0].mxu0
  %v114 = vadd.f32 %v32, %v113
  %v115 = vpop.f32.mrb[0].mxu0
  %v116 = vpop.f32.mrb[0].mxu0
  %v117 = vadd.f32 %v32, %v116
  %v118 = vpop.f32.mrb[0].mxu0
  %119 = vmatprep.mubr.bf16.mxu0 0
  %120 = vmatmul.mubr.bf16.gmra.mrb[0].mxu0 %v62
  %v121 = vpop.f32.mrb[0].mxu0
  %v122 = vadd.f32 %v32, %v121
  %v123 = vpop.f32.mrb[0].mxu0
  %v124 = vpop.f32.mrb[0].mxu0
  %v125 = vadd.f32 %v32, %v124
  %v126 = vpop.f32.mrb[0].mxu0
  %127 = vmatprep.mubr.bf16.mxu0 0
  %128 = vmatmul.mubr.bf16.gmra.mrb[0].mxu0 %v65
  %v129 = vpop.f32.mrb[0].mxu0
  %v130 = vadd.f32 %v32, %v129
  %v131 = vpop.f32.mrb[0].mxu0
  %v132 = vpop.f32.mrb[0].mxu0
  %v133 = vadd.f32 %v32, %v132
  %v134 = vpop.f32.mrb[0].mxu0
  %135 = vdwg.mxu0
  %v136 = vld [vmem:[%s1] sm:$0xf]
  %v137 = vld [vmem:[%s1 + $0x4] sm:$0xf]
  %v138 = vld [vmem:[%s1 + $0x8] sm:$0xf]
  %v139 = vld [vmem:[%s1 + $0xc] sm:$0xf]
  %v140 = vld [vmem:[%s1 + $0x10] sm:$0xf]
  %v141 = vld [vmem:[%s1 + $0x14] sm:$0xf]
  %v142 = vld [vmem:[%s1 + $0x18] sm:$0xf]
  %v143 = vld [vmem:[%s1 + $0x1c] sm:$0xf]
  %v144 = vunpack.c.l.bf16 %v136
  %v145 = vunpack.c.l.bf16 %v137
  %v146 = vunpack.c.l.bf16 %v138
  %v147 = vunpack.c.l.bf16 %v139
  %v148 = vunpack.c.l.bf16 %v140
  %v149 = vunpack.c.l.bf16 %v141
  %v150 = vunpack.c.l.bf16 %v142
  %v151 = vunpack.c.l.bf16 %v143
  %v152 = vadd.f32 %v106, %v144
  %v153 = vadd.f32 %v109, %v145
  %v154 = vadd.f32 %v114, %v146
  %v155 = vadd.f32 %v117, %v147
  %v156 = vadd.f32 %v122, %v148
  %v157 = vadd.f32 %v125, %v149
  %v158 = vadd.f32 %v130, %v150
  %v159 = vadd.f32 %v133, %v151
  %v160 = vpack.c.bf16 %v153, %v152
  %v161 = vpack.c.bf16 %v155, %v154
  %v162 = vpack.c.bf16 %v157, %v156
  %v163 = vpack.c.bf16 %v159, %v158
  %v168 = vunpack.c.l.b16 %v160
  %v169 = vunpack.c.h.b16 %v160
  %v170 = vunpack.c.l.b16 %v161
  %v171 = vunpack.c.h.b16 %v161
  %v172 = vunpack.c.l.b16 %v162
  %v173 = vunpack.c.h.b16 %v162
  %v174 = vunpack.c.l.b16 %v163
  %v175 = vunpack.c.h.b16 %v163
  %v176 = vpack.c.b16 %v168, %v168
  %v177 = vpack.c.b16 %v169, %v169
  %v178 = vpack.c.b16 %v170, %v170
  %v179 = vpack.c.b16 %v171, %v171
  %v180 = vpack.c.b16 %v172, %v172
  %v181 = vpack.c.b16 %v173, %v173
  %v182 = vpack.c.b16 %v174, %v174
  %v183 = vpack.c.b16 %v175, %v175
  %192 = vst [vmem:[%s4] sm:$0xf] %v176
  %193 = vst [vmem:[%s4 + $0x4] sm:$0xf] %v177
  %194 = vst [vmem:[%s4 + $0x8] sm:$0xf] %v178
  %195 = vst [vmem:[%s4 + $0xc] sm:$0xf] %v179
  %196 = vst [vmem:[%s4 + $0x10] sm:$0xf] %v180
  %197 = vst [vmem:[%s4 + $0x14] sm:$0xf] %v181
  %198 = vst [vmem:[%s4 + $0x18] sm:$0xf] %v182
  %199 = vst [vmem:[%s4 + $0x1c] sm:$0xf] %v183
  // Predicated region
  $region18: #{a_call__.8} parent=0 // pred_check
    _
  $region19: #{a_call__.8} parent=0 // pred_check_branch
    %201 = sbr.rel (0) target = $region21
  $region20: #{a_call__.8} parent=0 // pred_region
    _
  $region21: #{a_call__.8} parent=0 // pred_fallthru
    _
  // Predicated region
  $region22: #{a_call__.8} parent=0 // pred_check
    _
  $region23: #{a_call__.8} parent=0 // pred_check_branch
    %203 = sbr.rel (0) target = $region25
  $region24: #{a_call__.8} parent=0 // pred_region
    _
  $region25: #{a_call__.8} parent=0 // pred_fallthru
    _

// kernel: a_call__.7
$region0: #{a_call__.7}
  #allocation0 [shape = 'u32[]', space=smem, size = 0x4, offset = 0x4, fixed_abs, tag = 'smem constant byte address 0x4 - core index']
  #allocation1 [shape = 'u32[144,128]{1,0:T(1,128)}', space=vmem, size = 0x12000, scoped, tag = 'internal scratch']
  %s0 = inlined_call_operand.vmem [shape: f32[64,2], index: 0, kind: input, shape index: {}]
  %s1 = inlined_call_operand.vmem [shape: f32[2,128], index: 1, kind: input, shape index: {}]
  %s2 = inlined_call_operand.vmem [shape: f32[1,128], index: 2, kind: input, shape index: {}]
  %s3 = inlined_call_operand.vmem [shape: bf16[64,128], index: 3, kind: output, shape index: {}]
  %s4 = sld [smem:[#allocation0]]
  $region22: #{a_call__.7} parent=0
    _
  %s6 = ssub.s32 1, %s4
  %s7 = scalar_select 0, %s6, %s4
  // Predicated region
  $region2: #{a_call__.7} parent=0 // pred_check
    _
  $region3: #{a_call__.7} parent=0 // pred_check_branch
    %9 = sbr.rel (0) target = $region5
  $region4: #{a_call__.7} parent=0 // pred_region
    _
  $region5: #{a_call__.7} parent=0 // pred_fallthru
    _
  // Predicated region
  $region6: #{a_call__.7} parent=0 // pred_check
    _
  $region7: #{a_call__.7} parent=0 // pred_check_branch
    %11 = sbr.rel (0) target = $region9
  $region8: #{a_call__.7} parent=0 // pred_region
    _
  $region9: #{a_call__.7} parent=0 // pred_fallthru
    _
  // Predicated region
  $region10: #{a_call__.7} parent=0 // pred_check
    _
  $region11: #{a_call__.7} parent=0 // pred_check_branch
    %13 = sbr.rel (0) target = $region13
  $region12: #{a_call__.7} parent=0 // pred_region
    _
  $region13: #{a_call__.7} parent=0 // pred_fallthru
    _
  %v14 = vld [vmem:[%s0] sm:$0xff]
  %v15 = vld [vmem:[%s0 + $0x8] sm:$0xff]
  %v16 = vld [vmem:[%s0 + $0x10] sm:$0xff]
  %v17 = vld [vmem:[%s0 + $0x18] sm:$0xff]
  %v18 = vld [vmem:[%s0 + $0x20] sm:$0xff]
  %v19 = vld [vmem:[%s0 + $0x28] sm:$0xff]
  %v20 = vld [vmem:[%s0 + $0x30] sm:$0xff]
  %v21 = vld [vmem:[%s0 + $0x38] sm:$0xff]
  %v22 = vld [vmem:[%s2] sm:$0x1]
  %v23 = vld [vmem:[%s1] sm:$0x1]
  %25 = vset.pattern.permute.xlu0 0
  %26 = vperm.xlu0 %25, %v14
  %v27 = vpop.permute.xlu0 %26
  %30 = vset.pattern.permute.xlu0 0
  %31 = vperm.xlu0 %30, %v15
  %v32 = vpop.permute.xlu0 %31
  %35 = vset.pattern.permute.xlu0 0
  %36 = vperm.xlu0 %35, %v16
  %v37 = vpop.permute.xlu0 %36
  %40 = vset.pattern.permute.xlu0 0
  %41 = vperm.xlu0 %40, %v17
  %v42 = vpop.permute.xlu0 %41
  %45 = vset.pattern.permute.xlu0 0
  %46 = vperm.xlu0 %45, %v18
  %v47 = vpop.permute.xlu0 %46
  %50 = vset.pattern.permute.xlu0 0
  %51 = vperm.xlu0 %50, %v19
  %v52 = vpop.permute.xlu0 %51
  %55 = vset.pattern.permute.xlu0 0
  %56 = vperm.xlu0 %55, %v20
  %v57 = vpop.permute.xlu0 %56
  %60 = vset.pattern.permute.xlu0 0
  %61 = vperm.xlu0 %60, %v21
  %v62 = vpop.permute.xlu0 %61
  %v64 = vlaneseq
  %v65 = vshrl.u32 %v64, 7
  %v66 = vsub.s32 0, %v65
  %v67 = vrot.slane %v23, %v66
  %v68 = vmul.f32 %v27, %v67
  %v69 = vmul.f32 %v32, %v67
  %v70 = vmul.f32 %v37, %v67
  %v71 = vmul.f32 %v42, %v67
  %v72 = vmul.f32 %v47, %v67
  %v73 = vmul.f32 %v52, %v67
  %v74 = vmul.f32 %v57, %v67
  %v75 = vmul.f32 %v62, %v67
  %v77 = vlaneseq
  %v78 = vshrl.u32 %v77, 7
  %v79 = vsub.s32 0, %v78
  %v80 = vrot.slane %v22, %v79
  %v82 = vadd.f32 %v80, %v68
  %v83 = vadd.f32 %v80, %v69
  %v84 = vadd.f32 %v80, %v70
  %v85 = vadd.f32 %v80, %v71
  %v86 = vadd.f32 %v80, %v72
  %v87 = vadd.f32 %v80, %v73
  %v88 = vadd.f32 %v80, %v74
  %v89 = vadd.f32 %v80, %v75
  %v90 = vld [vmem:[%s1 + $0x1] sm:$0x1]
  %91 = vset.pattern.permute.xlu0 1
  %92 = vperm.xlu0 %91, %v14
  %v93 = vpop.permute.xlu0 %92
  %95 = vset.pattern.permute.xlu0 1
  %96 = vperm.xlu0 %95, %v15
  %v97 = vpop.permute.xlu0 %96
  %99 = vset.pattern.permute.xlu0 1
  %100 = vperm.xlu0 %99, %v16
  %v101 = vpop.permute.xlu0 %100
  %103 = vset.pattern.permute.xlu0 1
  %104 = vperm.xlu0 %103, %v17
  %v105 = vpop.permute.xlu0 %104
  %107 = vset.pattern.permute.xlu0 1
  %108 = vperm.xlu0 %107, %v18
  %v109 = vpop.permute.xlu0 %108
  %111 = vset.pattern.permute.xlu0 1
  %112 = vperm.xlu0 %111, %v19
  %v113 = vpop.permute.xlu0 %112
  %115 = vset.pattern.permute.xlu0 1
  %116 = vperm.xlu0 %115, %v20
  %v117 = vpop.permute.xlu0 %116
  %119 = vset.pattern.permute.xlu0 1
  %120 = vperm.xlu0 %119, %v21
  %v121 = vpop.permute.xlu0 %120
  %v123 = vlaneseq
  %v124 = vshrl.u32 %v123, 7
  %v125 = vsub.s32 0, %v124
  %v126 = vrot.slane %v90, %v125
  %v127 = vmul.f32 %v93, %v126
  %v128 = vmul.f32 %v97, %v126
  %v129 = vmul.f32 %v101, %v126
  %v130 = vmul.f32 %v105, %v126
  %v131 = vmul.f32 %v109, %v126
  %v132 = vmul.f32 %v113, %v126
  %v133 = vmul.f32 %v117, %v126
  %v134 = vmul.f32 %v121, %v126
  %v135 = vadd.f32 %v82, %v127
  %v136 = vadd.f32 %v83, %v128
  %v137 = vadd.f32 %v84, %v129
  %v138 = vadd.f32 %v85, %v130
  %v139 = vadd.f32 %v86, %v131
  %v140 = vadd.f32 %v87, %v132
  %v141 = vadd.f32 %v88, %v133
  %v142 = vadd.f32 %v89, %v134
  %v143 = vand.u32 2147483647, %v135
  %vm144 = vcmp.le.f32.partialorder %v143, 0.7853982
  %vm145 = vcmp.lt.s32.totalorder %v135, 0
  %v146 = vand.u32 %v135, 2139095040
  %v147 = vshrl.u32 %v146, 23
  %v148 = vsub.s32 %v147, 127
  %v149 = vand.u32 2147483647, %v135
  %v150 = vand.u32 %v149, 8388607
  %v151 = vor.u32 %v150, 8388608
  %v152 = vsub.s32 0, %v151
  %v153 = vadd.s32 %v148, 1
  %vm154 = vcmp.gt.s32.totalorder %v153, 0
  %v155 = vsel %vm154, %v153, 0
  %v156 = vshrl.u32 %v155, 5
  %v157 = vand.u32 %v155, 31
  %v158 = vsub.s32 32, %v157
  %v159 = vshrl.u32 683565275, %v158
  %v160 = vshll.u32 683565275, %v157
  %v161 = vshrl.u32 2475754826, %v158
  %v162 = vor.u32 %v160, %v161
  %v163 = vshll.u32 2475754826, %v157
  %v164 = vshrl.u32 2131351028, %v158
  %v165 = vor.u32 %v163, %v164
  %v166 = vshll.u32 2131351028, %v157
  %v167 = vshrl.u32 2102212464, %v158
  %v168 = vor.u32 %v166, %v167
  %v169 = vshll.u32 2102212464, %v157
  %v170 = vshrl.u32 920167782, %v158
  %v171 = vor.u32 %v169, %v170
  %v172 = vshll.u32 920167782, %v157
  %v173 = vshrl.u32 1326507024, %v158
  %v174 = vor.u32 %v172, %v173
  %vm175 = vcmp.lt.s32.totalorder %v156, 1
  %vm176 = vcmp.lt.s32.totalorder %v156, 2
  %vm177 = vcmp.lt.s32.totalorder %v156, 3
  %vm178 = vcmp.lt.s32.totalorder %v156, 4
  %v179 = vsel %vm175, %v159, %v162
  %v180 = vsel %vm178, %v168, 2102212464
  %v181 = vsel %vm177, %v165, %v180
  %v182 = vsel %vm176, %v179, %v181
  %v183 = vsel %vm175, %v162, %v165
  %v184 = vsel %vm178, %v171, 920167782
  %v185 = vsel %vm177, %v168, %v184
  %v186 = vsel %vm176, %v183, %v185
  %v187 = vsel %vm175, %v165, %v168
  %v188 = vsel %vm178, %v174, 1326507024
  %v189 = vsel %vm177, %v171, %v188
  %v190 = vsel %vm176, %v187, %v189
  %v191 = vshll.u32 %v151, 8
  %v192 = vmul.u32.u64.compose %v191, %v190
  %v193 = vextract.low.u32 %v192
  %v194 = vextract.high.u32 %v192
  %v195 = vmul.u32.u64.compose %v191, %v186
  %v196 = vextract.low.u32 %v195
  %v197 = vextract.high.u32 %v195
  %v198 = vmul.u32 %v191, %v182
  %v199 = vadd.s32 %v194, %v196
  %vm200 = vc.u32 %v194, %v196
  %v201 = vadd.s32 %v197, 1
  %v202 = vsel %vm200, %v201, %v197
  %v203 = vadd.s32 %v198, %v202
  %v204 = vadd.s32 %v203, 536870912
  %v205 = vshrl.u32 %v204, 30
  %v206 = vshll.u32 %v205, 30
  %v207 = vsub.s32 %v203, %v206
  %vm208 = vcmp.lt.s32.totalorder %v207, 0
  %v209 = vsub.s32 0, %v207
  %v210 = vsel %vm208, %v209, %v207
  %v211 = vclz %v210
  %v212 = vsub.s32 %v211, 2
  %vm213 = vcmp.gt.s32.totalorder 0, %v212
  %v214 = vsel %vm213, 0, %v212
  %v215 = vsub.s32 32, %v214
  %v216 = vshll.u32 %v207, %v214
  %v217 = vshrl.u32 %v199, %v215
  %v218 = vor.u32 %v216, %v217
  %v219 = vsub.s32 4294967266, %v214
  %v220 = vadd.s32 %v219, 127
  %v221 = vshll.u32 %v220, 23
  %v222 = vor.u32 4788187, %v221
  %v223 = vand.u32 2147483647, %v222
  %v225 = vcvt.s32.f32 %v218
  %v226 = vmul.f32 %v225, %v223
  %v227 = vxor.u32 %v226, 2147483648
  %v228 = vsel %vm145, %v227, %v226
  %v229 = vsub.s32 4, %v205
  %v230 = vsel %vm145, %v229, %v205
  %v231 = vsel %vm144, %v135, %v228
  %v232 = vsel %vm144, 0, %v230
  %v233 = vcosq.f32.pop %v231
  %v234 = vsinq.f32.pop %v231
  %vm235 = vweird.f32 %v135
  %v236 = vadd.s32 %v232, 3
  %v237 = vand.u32 %v236, 3
  %vm238 = vcmp.lt.s32.totalorder %v237, 2
  %vm239 = vcmp.eq.s32.totalorder %v237, 0
  %v240 = vxor.u32 %v234, 2147483648
  %v241 = vsel %vm239, %v233, %v240
  %vm242 = vcmp.eq.s32.totalorder %v237, 2
  %v243 = vxor.u32 %v233, 2147483648
  %v244 = vsel %vm242, %v243, %v234
  %v245 = vsel %vm238, %v241, %v244
  %v246 = vsel %vm235, nan, %v245
  %v247 = vand.u32 2147483647, %v136
  %vm248 = vcmp.le.f32.partialorder %v247, 0.7853982
  %vm249 = vcmp.lt.s32.totalorder %v136, 0
  %v250 = vand.u32 %v136, 2139095040
  %v251 = vshrl.u32 %v250, 23
  %v252 = vsub.s32 %v251, 127
  %v253 = vand.u32 2147483647, %v136
  %v254 = vand.u32 %v253, 8388607
  %v255 = vor.u32 %v254, 8388608
  %v256 = vsub.s32 0, %v255
  %v257 = vadd.s32 %v252, 1
  %vm258 = vcmp.gt.s32.totalorder %v257, 0
  %v259 = vsel %vm258, %v257, 0
  %v260 = vshrl.u32 %v259, 5
  %v261 = vand.u32 %v259, 31
  %v262 = vsub.s32 32, %v261
  %v263 = vshrl.u32 683565275, %v262
  %v264 = vshll.u32 683565275, %v261
  %v265 = vshrl.u32 2475754826, %v262
  %v266 = vor.u32 %v264, %v265
  %v267 = vshll.u32 2475754826, %v261
  %v268 = vshrl.u32 2131351028, %v262
  %v269 = vor.u32 %v267, %v268
  %v270 = vshll.u32 2131351028, %v261
  %v271 = vshrl.u32 2102212464, %v262
  %v272 = vor.u32 %v270, %v271
  %v273 = vshll.u32 2102212464, %v261
  %v274 = vshrl.u32 920167782, %v262
  %v275 = vor.u32 %v273, %v274
  %v276 = vshll.u32 920167782, %v261
  %v277 = vshrl.u32 1326507024, %v262
  %v278 = vor.u32 %v276, %v277
  %vm279 = vcmp.lt.s32.totalorder %v260, 1
  %vm280 = vcmp.lt.s32.totalorder %v260, 2
  %vm281 = vcmp.lt.s32.totalorder %v260, 3
  %vm282 = vcmp.lt.s32.totalorder %v260, 4
  %v283 = vsel %vm279, %v263, %v266
  %v284 = vsel %vm282, %v272, 2102212464
  %v285 = vsel %vm281, %v269, %v284
  %v286 = vsel %vm280, %v283, %v285
  %v287 = vsel %vm279, %v266, %v269
  %v288 = vsel %vm282, %v275, 920167782
  %v289 = vsel %vm281, %v272, %v288
  %v290 = vsel %vm280, %v287, %v289
  %v291 = vsel %vm279, %v269, %v272
  %v292 = vsel %vm282, %v278, 1326507024
  %v293 = vsel %vm281, %v275, %v292
  %v294 = vsel %vm280, %v291, %v293
  %v295 = vshll.u32 %v255, 8
  %v296 = vmul.u32.u64.compose %v295, %v294
  %v297 = vextract.low.u32 %v296
  %v298 = vextract.high.u32 %v296
  %v299 = vmul.u32.u64.compose %v295, %v290
  %v300 = vextract.low.u32 %v299
  %v301 = vextract.high.u32 %v299
  %v302 = vmul.u32 %v295, %v286
  %v303 = vadd.s32 %v298, %v300
  %vm304 = vc.u32 %v298, %v300
  %v305 = vadd.s32 %v301, 1
  %v306 = vsel %vm304, %v305, %v301
  %v307 = vadd.s32 %v302, %v306
  %v308 = vadd.s32 %v307, 536870912
  %v309 = vshrl.u32 %v308, 30
  %v310 = vshll.u32 %v309, 30
  %v311 = vsub.s32 %v307, %v310
  %vm312 = vcmp.lt.s32.totalorder %v311, 0
  %v313 = vsub.s32 0, %v311
  %v314 = vsel %vm312, %v313, %v311
  %v315 = vclz %v314
  %v316 = vsub.s32 %v315, 2
  %vm317 = vcmp.gt.s32.totalorder 0, %v316
  %v318 = vsel %vm317, 0, %v316
  %v319 = vsub.s32 32, %v318
  %v320 = vshll.u32 %v311, %v318
  %v321 = vshrl.u32 %v303, %v319
  %v322 = vor.u32 %v320, %v321
  %v323 = vsub.s32 4294967266, %v318
  %v324 = vadd.s32 %v323, 127
  %v325 = vshll.u32 %v324, 23
  %v326 = vor.u32 4788187, %v325
  %v327 = vand.u32 2147483647, %v326
  %v329 = vcvt.s32.f32 %v322
  %v330 = vmul.f32 %v329, %v327
  %v331 = vxor.u32 %v330, 2147483648
  %v332 = vsel %vm249, %v331, %v330
  %v333 = vsub.s32 4, %v309
  %v334 = vsel %vm249, %v333, %v309
  %v335 = vsel %vm248, %v136, %v332
  %v336 = vsel %vm248, 0, %v334
  %v337 = vcosq.f32.pop %v335
  %v338 = vsinq.f32.pop %v335
  %vm339 = vweird.f32 %v136
  %v340 = vadd.s32 %v336, 3
  %v341 = vand.u32 %v340, 3
  %vm342 = vcmp.lt.s32.totalorder %v341, 2
  %vm343 = vcmp.eq.s32.totalorder %v341, 0
  %v344 = vxor.u32 %v338, 2147483648
  %v345 = vsel %vm343, %v337, %v344
  %vm346 = vcmp.eq.s32.totalorder %v341, 2
  %v347 = vxor.u32 %v337, 2147483648
  %v348 = vsel %vm346, %v347, %v338
  %v349 = vsel %vm342, %v345, %v348
  %v350 = vsel %vm339, nan, %v349
  %v351 = vand.u32 2147483647, %v137
  %vm352 = vcmp.le.f32.partialorder %v351, 0.7853982
  %vm353 = vcmp.lt.s32.totalorder %v137, 0
  %v354 = vand.u32 %v137, 2139095040
  %v355 = vshrl.u32 %v354, 23
  %v356 = vsub.s32 %v355, 127
  %v357 = vand.u32 2147483647, %v137
  %v358 = vand.u32 %v357, 8388607
  %v359 = vor.u32 %v358, 8388608
  %v360 = vsub.s32 0, %v359
  %v361 = vadd.s32 %v356, 1
  %vm362 = vcmp.gt.s32.totalorder %v361, 0
  %v363 = vsel %vm362, %v361, 0
  %v364 = vshrl.u32 %v363, 5
  %v365 = vand.u32 %v363, 31
  %v366 = vsub.s32 32, %v365
  %v367 = vshrl.u32 683565275, %v366
  %v368 = vshll.u32 683565275, %v365
  %v369 = vshrl.u32 2475754826, %v366
  %v370 = vor.u32 %v368, %v369
  %v371 = vshll.u32 2475754826, %v365
  %v372 = vshrl.u32 2131351028, %v366
  %v373 = vor.u32 %v371, %v372
  %v374 = vshll.u32 2131351028, %v365
  %v375 = vshrl.u32 2102212464, %v366
  %v376 = vor.u32 %v374, %v375
  %v377 = vshll.u32 2102212464, %v365
  %v378 = vshrl.u32 920167782, %v366
  %v379 = vor.u32 %v377, %v378
  %v380 = vshll.u32 920167782, %v365
  %v381 = vshrl.u32 1326507024, %v366
  %v382 = vor.u32 %v380, %v381
  %vm383 = vcmp.lt.s32.totalorder %v364, 1
  %vm384 = vcmp.lt.s32.totalorder %v364, 2
  %vm385 = vcmp.lt.s32.totalorder %v364, 3
  %vm386 = vcmp.lt.s32.totalorder %v364, 4
  %v387 = vsel %vm383, %v367, %v370
  %v388 = vsel %vm386, %v376, 2102212464
  %v389 = vsel %vm385, %v373, %v388
  %v390 = vsel %vm384, %v387, %v389
  %v391 = vsel %vm383, %v370, %v373
  %v392 = vsel %vm386, %v379, 920167782
  %v393 = vsel %vm385, %v376, %v392
  %v394 = vsel %vm384, %v391, %v393
  %v395 = vsel %vm383, %v373, %v376
  %v396 = vsel %vm386, %v382, 1326507024
  %v397 = vsel %vm385, %v379, %v396
  %v398 = vsel %vm384, %v395, %v397
  %v399 = vshll.u32 %v359, 8
  %v400 = vmul.u32.u64.compose %v399, %v398
  %v401 = vextract.low.u32 %v400
  %v402 = vextract.high.u32 %v400
  %v403 = vmul.u32.u64.compose %v399, %v394
  %v404 = vextract.low.u32 %v403
  %v405 = vextract.high.u32 %v403
  %v406 = vmul.u32 %v399, %v390
  %v407 = vadd.s32 %v402, %v404
  %vm408 = vc.u32 %v402, %v404
  %v409 = vadd.s32 %v405, 1
  %v410 = vsel %vm408, %v409, %v405
  %v411 = vadd.s32 %v406, %v410
  %v412 = vadd.s32 %v411, 536870912
  %v413 = vshrl.u32 %v412, 30
  %v414 = vshll.u32 %v413, 30
  %v415 = vsub.s32 %v411, %v414
  %vm416 = vcmp.lt.s32.totalorder %v415, 0
  %v417 = vsub.s32 0, %v415
  %v418 = vsel %vm416, %v417, %v415
  %v419 = vclz %v418
  %v420 = vsub.s32 %v419, 2
  %vm421 = vcmp.gt.s32.totalorder 0, %v420
  %v422 = vsel %vm421, 0, %v420
  %v423 = vsub.s32 32, %v422
  %v424 = vshll.u32 %v415, %v422
  %v425 = vshrl.u32 %v407, %v423
  %v426 = vor.u32 %v424, %v425
  %v427 = vsub.s32 4294967266, %v422
  %v428 = vadd.s32 %v427, 127
  %v429 = vshll.u32 %v428, 23
  %v430 = vor.u32 4788187, %v429
  %v431 = vand.u32 2147483647, %v430
  %v433 = vcvt.s32.f32 %v426
  %v434 = vmul.f32 %v433, %v431
  %v435 = vxor.u32 %v434, 2147483648
  %v436 = vsel %vm353, %v435, %v434
  %v437 = vsub.s32 4, %v413
  %v438 = vsel %vm353, %v437, %v413
  %v439 = vsel %vm352, %v137, %v436
  %v440 = vsel %vm352, 0, %v438
  %v441 = vcosq.f32.pop %v439
  %v442 = vsinq.f32.pop %v439
  %vm443 = vweird.f32 %v137
  %v444 = vadd.s32 %v440, 3
  %v445 = vand.u32 %v444, 3
  %vm446 = vcmp.lt.s32.totalorder %v445, 2
  %vm447 = vcmp.eq.s32.totalorder %v445, 0
  %v448 = vxor.u32 %v442, 2147483648
  %v449 = vsel %vm447, %v441, %v448
  %vm450 = vcmp.eq.s32.totalorder %v445, 2
  %v451 = vxor.u32 %v441, 2147483648
  %v452 = vsel %vm450, %v451, %v442
  %v453 = vsel %vm446, %v449, %v452
  %v454 = vsel %vm443, nan, %v453
  %v455 = vand.u32 2147483647, %v138
  %vm456 = vcmp.le.f32.partialorder %v455, 0.7853982
  %vm457 = vcmp.lt.s32.totalorder %v138, 0
  %v458 = vand.u32 %v138, 2139095040
  %v459 = vshrl.u32 %v458, 23
  %v460 = vsub.s32 %v459, 127
  %v461 = vand.u32 2147483647, %v138
  %v462 = vand.u32 %v461, 8388607
  %v463 = vor.u32 %v462, 8388608
  %v464 = vsub.s32 0, %v463
  %v465 = vadd.s32 %v460, 1
  %vm466 = vcmp.gt.s32.totalorder %v465, 0
  %v467 = vsel %vm466, %v465, 0
  %v468 = vshrl.u32 %v467, 5
  %v469 = vand.u32 %v467, 31
  %v470 = vsub.s32 32, %v469
  %v471 = vshrl.u32 683565275, %v470
  %v472 = vshll.u32 683565275, %v469
  %v473 = vshrl.u32 2475754826, %v470
  %v474 = vor.u32 %v472, %v473
  %v475 = vshll.u32 2475754826, %v469
  %v476 = vshrl.u32 2131351028, %v470
  %v477 = vor.u32 %v475, %v476
  %v478 = vshll.u32 2131351028, %v469
  %v479 = vshrl.u32 2102212464, %v470
  %v480 = vor.u32 %v478, %v479
  %v481 = vshll.u32 2102212464, %v469
  %v482 = vshrl.u32 920167782, %v470
  %v483 = vor.u32 %v481, %v482
  %v484 = vshll.u32 920167782, %v469
  %v485 = vshrl.u32 1326507024, %v470
  %v486 = vor.u32 %v484, %v485
  %vm487 = vcmp.lt.s32.totalorder %v468, 1
  %vm488 = vcmp.lt.s32.totalorder %v468, 2
  %vm489 = vcmp.lt.s32.totalorder %v468, 3
  %vm490 = vcmp.lt.s32.totalorder %v468, 4
  %v491 = vsel %vm487, %v471, %v474
  %v492 = vsel %vm490, %v480, 2102212464
  %v493 = vsel %vm489, %v477, %v492
  %v494 = vsel %vm488, %v491, %v493
  %v495 = vsel %vm487, %v474, %v477
  %v496 = vsel %vm490, %v483, 920167782
  %v497 = vsel %vm489, %v480, %v496
  %v498 = vsel %vm488, %v495, %v497
  %v499 = vsel %vm487, %v477, %v480
  %v500 = vsel %vm490, %v486, 1326507024
  %v501 = vsel %vm489, %v483, %v500
  %v502 = vsel %vm488, %v499, %v501
  %v503 = vshll.u32 %v463, 8
  %v504 = vmul.u32.u64.compose %v503, %v502
  %v505 = vextract.low.u32 %v504
  %v506 = vextract.high.u32 %v504
  %v507 = vmul.u32.u64.compose %v503, %v498
  %v508 = vextract.low.u32 %v507
  %v509 = vextract.high.u32 %v507
  %v510 = vmul.u32 %v503, %v494
  %v511 = vadd.s32 %v506, %v508
  %vm512 = vc.u32 %v506, %v508
  %v513 = vadd.s32 %v509, 1
  %v514 = vsel %vm512, %v513, %v509
  %v515 = vadd.s32 %v510, %v514
  %v516 = vadd.s32 %v515, 536870912
  %v517 = vshrl.u32 %v516, 30
  %v518 = vshll.u32 %v517, 30
  %v519 = vsub.s32 %v515, %v518
  %vm520 = vcmp.lt.s32.totalorder %v519, 0
  %v521 = vsub.s32 0, %v519
  %v522 = vsel %vm520, %v521, %v519
  %v523 = vclz %v522
  %v524 = vsub.s32 %v523, 2
  %vm525 = vcmp.gt.s32.totalorder 0, %v524
  %v526 = vsel %vm525, 0, %v524
  %v527 = vsub.s32 32, %v526
  %v528 = vshll.u32 %v519, %v526
  %v529 = vshrl.u32 %v511, %v527
  %v530 = vor.u32 %v528, %v529
  %v531 = vsub.s32 4294967266, %v526
  %v532 = vadd.s32 %v531, 127
  %v533 = vshll.u32 %v532, 23
  %v534 = vor.u32 4788187, %v533
  %v535 = vand.u32 2147483647, %v534
  %v537 = vcvt.s32.f32 %v530
  %v538 = vmul.f32 %v537, %v535
  %v539 = vxor.u32 %v538, 2147483648
  %v540 = vsel %vm457, %v539, %v538
  %v541 = vsub.s32 4, %v517
  %v542 = vsel %vm457, %v541, %v517
  %v543 = vsel %vm456, %v138, %v540
  %v544 = vsel %vm456, 0, %v542
  %v545 = vcosq.f32.pop %v543
  %v546 = vsinq.f32.pop %v543
  %vm547 = vweird.f32 %v138
  %v548 = vadd.s32 %v544, 3
  %v549 = vand.u32 %v548, 3
  %vm550 = vcmp.lt.s32.totalorder %v549, 2
  %vm551 = vcmp.eq.s32.totalorder %v549, 0
  %v552 = vxor.u32 %v546, 2147483648
  %v553 = vsel %vm551, %v545, %v552
  %vm554 = vcmp.eq.s32.totalorder %v549, 2
  %v555 = vxor.u32 %v545, 2147483648
  %v556 = vsel %vm554, %v555, %v546
  %v557 = vsel %vm550, %v553, %v556
  %v558 = vsel %vm547, nan, %v557
  %v559 = vand.u32 2147483647, %v139
  %vm560 = vcmp.le.f32.partialorder %v559, 0.7853982
  %vm561 = vcmp.lt.s32.totalorder %v139, 0
  %v562 = vand.u32 %v139, 2139095040
  %v563 = vshrl.u32 %v562, 23
  %v564 = vsub.s32 %v563, 127
  %v565 = vand.u32 2147483647, %v139
  %v566 = vand.u32 %v565, 8388607
  %v567 = vor.u32 %v566, 8388608
  %v568 = vsub.s32 0, %v567
  %v569 = vadd.s32 %v564, 1
  %vm570 = vcmp.gt.s32.totalorder %v569, 0
  %v571 = vsel %vm570, %v569, 0
  %v572 = vshrl.u32 %v571, 5
  %v573 = vand.u32 %v571, 31
  %v574 = vsub.s32 32, %v573
  %v575 = vshrl.u32 683565275, %v574
  %v576 = vshll.u32 683565275, %v573
  %v577 = vshrl.u32 2475754826, %v574
  %v578 = vor.u32 %v576, %v577
  %v579 = vshll.u32 2475754826, %v573
  %v580 = vshrl.u32 2131351028, %v574
  %v581 = vor.u32 %v579, %v580
  %v582 = vshll.u32 2131351028, %v573
  %v583 = vshrl.u32 2102212464, %v574
  %v584 = vor.u32 %v582, %v583
  %v585 = vshll.u32 2102212464, %v573
  %v586 = vshrl.u32 920167782, %v574
  %v587 = vor.u32 %v585, %v586
  %v588 = vshll.u32 920167782, %v573
  %v589 = vshrl.u32 1326507024, %v574
  %v590 = vor.u32 %v588, %v589
  %vm591 = vcmp.lt.s32.totalorder %v572, 1
  %vm592 = vcmp.lt.s32.totalorder %v572, 2
  %vm593 = vcmp.lt.s32.totalorder %v572, 3
  %vm594 = vcmp.lt.s32.totalorder %v572, 4
  %v595 = vsel %vm591, %v575, %v578
  %v596 = vsel %vm594, %v584, 2102212464
  %v597 = vsel %vm593, %v581, %v596
  %v598 = vsel %vm592, %v595, %v597
  %v599 = vsel %vm591, %v578, %v581
  %v600 = vsel %vm594, %v587, 920167782
  %v601 = vsel %vm593, %v584, %v600
  %v602 = vsel %vm592, %v599, %v601
  %v603 = vsel %vm591, %v581, %v584
  %v604 = vsel %vm594, %v590, 1326507024
  %v605 = vsel %vm593, %v587, %v604
  %v606 = vsel %vm592, %v603, %v605
  %v607 = vshll.u32 %v567, 8
  %v608 = vmul.u32.u64.compose %v607, %v606
  %v609 = vextract.low.u32 %v608
  %v610 = vextract.high.u32 %v608
  %v611 = vmul.u32.u64.compose %v607, %v602
  %v612 = vextract.low.u32 %v611
  %v613 = vextract.high.u32 %v611
  %v614 = vmul.u32 %v607, %v598
  %v615 = vadd.s32 %v610, %v612
  %vm616 = vc.u32 %v610, %v612
  %v617 = vadd.s32 %v613, 1
  %v618 = vsel %vm616, %v617, %v613
  %v619 = vadd.s32 %v614, %v618
  %v620 = vadd.s32 %v619, 536870912
  %v621 = vshrl.u32 %v620, 30
  %v622 = vshll.u32 %v621, 30
  %v623 = vsub.s32 %v619, %v622
  %vm624 = vcmp.lt.s32.totalorder %v623, 0
  %v625 = vsub.s32 0, %v623
  %v626 = vsel %vm624, %v625, %v623
  %v627 = vclz %v626
  %v628 = vsub.s32 %v627, 2
  %vm629 = vcmp.gt.s32.totalorder 0, %v628
  %v630 = vsel %vm629, 0, %v628
  %v631 = vsub.s32 32, %v630
  %v632 = vshll.u32 %v623, %v630
  %v633 = vshrl.u32 %v615, %v631
  %v634 = vor.u32 %v632, %v633
  %v635 = vsub.s32 4294967266, %v630
  %v636 = vadd.s32 %v635, 127
  %v637 = vshll.u32 %v636, 23
  %v638 = vor.u32 4788187, %v637
  %v639 = vand.u32 2147483647, %v638
  %v641 = vcvt.s32.f32 %v634
  %v642 = vmul.f32 %v641, %v639
  %v643 = vxor.u32 %v642, 2147483648
  %v644 = vsel %vm561, %v643, %v642
  %v645 = vsub.s32 4, %v621
  %v646 = vsel %vm561, %v645, %v621
  %v647 = vsel %vm560, %v139, %v644
  %v648 = vsel %vm560, 0, %v646
  %v649 = vcosq.f32.pop %v647
  %v650 = vsinq.f32.pop %v647
  %vm651 = vweird.f32 %v139
  %v652 = vadd.s32 %v648, 3
  %v653 = vand.u32 %v652, 3
  %vm654 = vcmp.lt.s32.totalorder %v653, 2
  %vm655 = vcmp.eq.s32.totalorder %v653, 0
  %v656 = vxor.u32 %v650, 2147483648
  %v657 = vsel %vm655, %v649, %v656
  %vm658 = vcmp.eq.s32.totalorder %v653, 2
  %v659 = vxor.u32 %v649, 2147483648
  %v660 = vsel %vm658, %v659, %v650
  %v661 = vsel %vm654, %v657, %v660
  %v662 = vsel %vm651, nan, %v661
  %v663 = vand.u32 2147483647, %v140
  %vm664 = vcmp.le.f32.partialorder %v663, 0.7853982
  %vm665 = vcmp.lt.s32.totalorder %v140, 0
  %v666 = vand.u32 %v140, 2139095040
  %v667 = vshrl.u32 %v666, 23
  %v668 = vsub.s32 %v667, 127
  %v669 = vand.u32 2147483647, %v140
  %v670 = vand.u32 %v669, 8388607
  %v671 = vor.u32 %v670, 8388608
  %v672 = vsub.s32 0, %v671
  %v673 = vadd.s32 %v668, 1
  %vm674 = vcmp.gt.s32.totalorder %v673, 0
  %v675 = vsel %vm674, %v673, 0
  %v676 = vshrl.u32 %v675, 5
  %v677 = vand.u32 %v675, 31
  %v678 = vsub.s32 32, %v677
  %v679 = vshrl.u32 683565275, %v678
  %v680 = vshll.u32 683565275, %v677
  %v681 = vshrl.u32 2475754826, %v678
  %v682 = vor.u32 %v680, %v681
  %v683 = vshll.u32 2475754826, %v677
  %v684 = vshrl.u32 2131351028, %v678
  %v685 = vor.u32 %v683, %v684
  %v686 = vshll.u32 2131351028, %v677
  %v687 = vshrl.u32 2102212464, %v678
  %v688 = vor.u32 %v686, %v687
  %v689 = vshll.u32 2102212464, %v677
  %v690 = vshrl.u32 920167782, %v678
  %v691 = vor.u32 %v689, %v690
  %v692 = vshll.u32 920167782, %v677
  %v693 = vshrl.u32 1326507024, %v678
  %v694 = vor.u32 %v692, %v693
  %vm695 = vcmp.lt.s32.totalorder %v676, 1
  %vm696 = vcmp.lt.s32.totalorder %v676, 2
  %vm697 = vcmp.lt.s32.totalorder %v676, 3
  %vm698 = vcmp.lt.s32.totalorder %v676, 4
  %v699 = vsel %vm695, %v679, %v682
  %v700 = vsel %vm698, %v688, 2102212464
  %v701 = vsel %vm697, %v685, %v700
  %v702 = vsel %vm696, %v699, %v701
  %v703 = vsel %vm695, %v682, %v685
  %v704 = vsel %vm698, %v691, 920167782
  %v705 = vsel %vm697, %v688, %v704
  %v706 = vsel %vm696, %v703, %v705
  %v707 = vsel %vm695, %v685, %v688
  %v708 = vsel %vm698, %v694, 1326507024
  %v709 = vsel %vm697, %v691, %v708
  %v710 = vsel %vm696, %v707, %v709
  %v711 = vshll.u32 %v671, 8
  %v712 = vmul.u32.u64.compose %v711, %v710
  %v713 = vextract.low.u32 %v712
  %v714 = vextract.high.u32 %v712
  %v715 = vmul.u32.u64.compose %v711, %v706
  %v716 = vextract.low.u32 %v715
  %v717 = vextract.high.u32 %v715
  %v718 = vmul.u32 %v711, %v702
  %v719 = vadd.s32 %v714, %v716
  %vm720 = vc.u32 %v714, %v716
  %v721 = vadd.s32 %v717, 1
  %v722 = vsel %vm720, %v721, %v717
  %v723 = vadd.s32 %v718, %v722
  %v724 = vadd.s32 %v723, 536870912
  %v725 = vshrl.u32 %v724, 30
  %v726 = vshll.u32 %v725, 30
  %v727 = vsub.s32 %v723, %v726
  %vm728 = vcmp.lt.s32.totalorder %v727, 0
  %v729 = vsub.s32 0, %v727
  %v730 = vsel %vm728, %v729, %v727
  %v731 = vclz %v730
  %v732 = vsub.s32 %v731, 2
  %vm733 = vcmp.gt.s32.totalorder 0, %v732
  %v734 = vsel %vm733, 0, %v732
  %v735 = vsub.s32 32, %v734
  %v736 = vshll.u32 %v727, %v734
  %v737 = vshrl.u32 %v719, %v735
  %v738 = vor.u32 %v736, %v737
  %v739 = vsub.s32 4294967266, %v734
  %v740 = vadd.s32 %v739, 127
  %v741 = vshll.u32 %v740, 23
  %v742 = vor.u32 4788187, %v741
  %v743 = vand.u32 2147483647, %v742
  %v745 = vcvt.s32.f32 %v738
  %v746 = vmul.f32 %v745, %v743
  %v747 = vxor.u32 %v746, 2147483648
  %v748 = vsel %vm665, %v747, %v746
  %v749 = vsub.s32 4, %v725
  %v750 = vsel %vm665, %v749, %v725
  %v751 = vsel %vm664, %v140, %v748
  %v752 = vsel %vm664, 0, %v750
  %v753 = vcosq.f32.pop %v751
  %v754 = vsinq.f32.pop %v751
  %vm755 = vweird.f32 %v140
  %v756 = vadd.s32 %v752, 3
  %v757 = vand.u32 %v756, 3
  %vm758 = vcmp.lt.s32.totalorder %v757, 2
  %vm759 = vcmp.eq.s32.totalorder %v757, 0
  %v760 = vxor.u32 %v754, 2147483648
  %v761 = vsel %vm759, %v753, %v760
  %vm762 = vcmp.eq.s32.totalorder %v757, 2
  %v763 = vxor.u32 %v753, 2147483648
  %v764 = vsel %vm762, %v763, %v754
  %v765 = vsel %vm758, %v761, %v764
  %v766 = vsel %vm755, nan, %v765
  %v767 = vand.u32 2147483647, %v141
  %vm768 = vcmp.le.f32.partialorder %v767, 0.7853982
  %vm769 = vcmp.lt.s32.totalorder %v141, 0
  %v770 = vand.u32 %v141, 2139095040
  %v771 = vshrl.u32 %v770, 23
  %v772 = vsub.s32 %v771, 127
  %v773 = vand.u32 2147483647, %v141
  %v774 = vand.u32 %v773, 8388607
  %v775 = vor.u32 %v774, 8388608
  %v776 = vsub.s32 0, %v775
  %v777 = vadd.s32 %v772, 1
  %vm778 = vcmp.gt.s32.totalorder %v777, 0
  %v779 = vsel %vm778, %v777, 0
  %v780 = vshrl.u32 %v779, 5
  %v781 = vand.u32 %v779, 31
  %v782 = vsub.s32 32, %v781
  %v783 = vshrl.u32 683565275, %v782
  %v784 = vshll.u32 683565275, %v781
  %v785 = vshrl.u32 2475754826, %v782
  %v786 = vor.u32 %v784, %v785
  %v787 = vshll.u32 2475754826, %v781
  %v788 = vshrl.u32 2131351028, %v782
  %v789 = vor.u32 %v787, %v788
  %v790 = vshll.u32 2131351028, %v781
  %v791 = vshrl.u32 2102212464, %v782
  %v792 = vor.u32 %v790, %v791
  %v793 = vshll.u32 2102212464, %v781
  %v794 = vshrl.u32 920167782, %v782
  %v795 = vor.u32 %v793, %v794
  %v796 = vshll.u32 920167782, %v781
  %v797 = vshrl.u32 1326507024, %v782
  %v798 = vor.u32 %v796, %v797
  %vm799 = vcmp.lt.s32.totalorder %v780, 1
  %vm800 = vcmp.lt.s32.totalorder %v780, 2
  %vm801 = vcmp.lt.s32.totalorder %v780, 3
  %vm802 = vcmp.lt.s32.totalorder %v780, 4
  %v803 = vsel %vm799, %v783, %v786
  %v804 = vsel %vm802, %v792, 2102212464
  %v805 = vsel %vm801, %v789, %v804
  %v806 = vsel %vm800, %v803, %v805
  %v807 = vsel %vm799, %v786, %v789
  %v808 = vsel %vm802, %v795, 920167782
  %v809 = vsel %vm801, %v792, %v808
  %v810 = vsel %vm800, %v807, %v809
  %v811 = vsel %vm799, %v789, %v792
  %v812 = vsel %vm802, %v798, 1326507024
  %v813 = vsel %vm801, %v795, %v812
  %v814 = vsel %vm800, %v811, %v813
  %v815 = vshll.u32 %v775, 8
  %v816 = vmul.u32.u64.compose %v815, %v814
  %v817 = vextract.low.u32 %v816
  %v818 = vextract.high.u32 %v816
  %v819 = vmul.u32.u64.compose %v815, %v810
  %v820 = vextract.low.u32 %v819
  %v821 = vextract.high.u32 %v819
  %v822 = vmul.u32 %v815, %v806
  %v823 = vadd.s32 %v818, %v820
  %vm824 = vc.u32 %v818, %v820
  %v825 = vadd.s32 %v821, 1
  %v826 = vsel %vm824, %v825, %v821
  %v827 = vadd.s32 %v822, %v826
  %v828 = vadd.s32 %v827, 536870912
  %v829 = vshrl.u32 %v828, 30
  %v830 = vshll.u32 %v829, 30
  %v831 = vsub.s32 %v827, %v830
  %vm832 = vcmp.lt.s32.totalorder %v831, 0
  %v833 = vsub.s32 0, %v831
  %v834 = vsel %vm832, %v833, %v831
  %v835 = vclz %v834
  %v836 = vsub.s32 %v835, 2
  %vm837 = vcmp.gt.s32.totalorder 0, %v836
  %v838 = vsel %vm837, 0, %v836
  %v839 = vsub.s32 32, %v838
  %v840 = vshll.u32 %v831, %v838
  %v841 = vshrl.u32 %v823, %v839
  %v842 = vor.u32 %v840, %v841
  %v843 = vsub.s32 4294967266, %v838
  %v844 = vadd.s32 %v843, 127
  %v845 = vshll.u32 %v844, 23
  %v846 = vor.u32 4788187, %v845
  %v847 = vand.u32 2147483647, %v846
  %v849 = vcvt.s32.f32 %v842
  %v850 = vmul.f32 %v849, %v847
  %v851 = vxor.u32 %v850, 2147483648
  %v852 = vsel %vm769, %v851, %v850
  %v853 = vsub.s32 4, %v829
  %v854 = vsel %vm769, %v853, %v829
  %v855 = vsel %vm768, %v141, %v852
  %v856 = vsel %vm768, 0, %v854
  %v857 = vcosq.f32.pop %v855
  %v858 = vsinq.f32.pop %v855
  %vm859 = vweird.f32 %v141
  %v860 = vadd.s32 %v856, 3
  %v861 = vand.u32 %v860, 3
  %vm862 = vcmp.lt.s32.totalorder %v861, 2
  %vm863 = vcmp.eq.s32.totalorder %v861, 0
  %v864 = vxor.u32 %v858, 2147483648
  %v865 = vsel %vm863, %v857, %v864
  %vm866 = vcmp.eq.s32.totalorder %v861, 2
  %v867 = vxor.u32 %v857, 2147483648
  %v868 = vsel %vm866, %v867, %v858
  %v869 = vsel %vm862, %v865, %v868
  %v870 = vsel %vm859, nan, %v869
  %v871 = vand.u32 2147483647, %v142
  %vm872 = vcmp.le.f32.partialorder %v871, 0.7853982
  %vm873 = vcmp.lt.s32.totalorder %v142, 0
  %v874 = vand.u32 %v142, 2139095040
  %v875 = vshrl.u32 %v874, 23
  %v876 = vsub.s32 %v875, 127
  %v877 = vand.u32 2147483647, %v142
  %v878 = vand.u32 %v877, 8388607
  %v879 = vor.u32 %v878, 8388608
  %v880 = vsub.s32 0, %v879
  %v881 = vadd.s32 %v876, 1
  %vm882 = vcmp.gt.s32.totalorder %v881, 0
  %v883 = vsel %vm882, %v881, 0
  %v884 = vshrl.u32 %v883, 5
  %v885 = vand.u32 %v883, 31
  %v886 = vsub.s32 32, %v885
  %v887 = vshrl.u32 683565275, %v886
  %v888 = vshll.u32 683565275, %v885
  %v889 = vshrl.u32 2475754826, %v886
  %v890 = vor.u32 %v888, %v889
  %v891 = vshll.u32 2475754826, %v885
  %v892 = vshrl.u32 2131351028, %v886
  %v893 = vor.u32 %v891, %v892
  %v894 = vshll.u32 2131351028, %v885
  %v895 = vshrl.u32 2102212464, %v886
  %v896 = vor.u32 %v894, %v895
  %v897 = vshll.u32 2102212464, %v885
  %v898 = vshrl.u32 920167782, %v886
  %v899 = vor.u32 %v897, %v898
  %v900 = vshll.u32 920167782, %v885
  %v901 = vshrl.u32 1326507024, %v886
  %v902 = vor.u32 %v900, %v901
  %vm903 = vcmp.lt.s32.totalorder %v884, 1
  %vm904 = vcmp.lt.s32.totalorder %v884, 2
  %vm905 = vcmp.lt.s32.totalorder %v884, 3
  %vm906 = vcmp.lt.s32.totalorder %v884, 4
  %v907 = vsel %vm903, %v887, %v890
  %v908 = vsel %vm906, %v896, 2102212464
  %v909 = vsel %vm905, %v893, %v908
  %v910 = vsel %vm904, %v907, %v909
  %v911 = vsel %vm903, %v890, %v893
  %v912 = vsel %vm906, %v899, 920167782
  %v913 = vsel %vm905, %v896, %v912
  %v914 = vsel %vm904, %v911, %v913
  %v915 = vsel %vm903, %v893, %v896
  %v916 = vsel %vm906, %v902, 1326507024
  %v917 = vsel %vm905, %v899, %v916
  %v918 = vsel %vm904, %v915, %v917
  %v919 = vshll.u32 %v879, 8
  %v920 = vmul.u32.u64.compose %v919, %v918
  %v921 = vextract.low.u32 %v920
  %v922 = vextract.high.u32 %v920
  %v923 = vmul.u32.u64.compose %v919, %v914
  %v924 = vextract.low.u32 %v923
  %v925 = vextract.high.u32 %v923
  %v926 = vmul.u32 %v919, %v910
  %v927 = vadd.s32 %v922, %v924
  %vm928 = vc.u32 %v922, %v924
  %v929 = vadd.s32 %v925, 1
  %v930 = vsel %vm928, %v929, %v925
  %v931 = vadd.s32 %v926, %v930
  %v932 = vadd.s32 %v931, 536870912
  %v933 = vshrl.u32 %v932, 30
  %v934 = vshll.u32 %v933, 30
  %v935 = vsub.s32 %v931, %v934
  %vm936 = vcmp.lt.s32.totalorder %v935, 0
  %v937 = vsub.s32 0, %v935
  %v938 = vsel %vm936, %v937, %v935
  %v939 = vclz %v938
  %v940 = vsub.s32 %v939, 2
  %vm941 = vcmp.gt.s32.totalorder 0, %v940
  %v942 = vsel %vm941, 0, %v940
  %v943 = vsub.s32 32, %v942
  %v944 = vshll.u32 %v935, %v942
  %v945 = vshrl.u32 %v927, %v943
  %v946 = vor.u32 %v944, %v945
  %v947 = vsub.s32 4294967266, %v942
  %v948 = vadd.s32 %v947, 127
  %v949 = vshll.u32 %v948, 23
  %v950 = vor.u32 4788187, %v949
  %v951 = vand.u32 2147483647, %v950
  %v953 = vcvt.s32.f32 %v946
  %v954 = vmul.f32 %v953, %v951
  %v955 = vxor.u32 %v954, 2147483648
  %v956 = vsel %vm873, %v955, %v954
  %v957 = vsub.s32 4, %v933
  %v958 = vsel %vm873, %v957, %v933
  %v959 = vsel %vm872, %v142, %v956
  %v960 = vsel %vm872, 0, %v958
  %v961 = vcosq.f32.pop %v959
  %v962 = vsinq.f32.pop %v959
  %vm963 = vweird.f32 %v142
  %v964 = vadd.s32 %v960, 3
  %v965 = vand.u32 %v964, 3
  %vm966 = vcmp.lt.s32.totalorder %v965, 2
  %vm967 = vcmp.eq.s32.totalorder %v965, 0
  %v968 = vxor.u32 %v962, 2147483648
  %v969 = vsel %vm967, %v961, %v968
  %vm970 = vcmp.eq.s32.totalorder %v965, 2
  %v971 = vxor.u32 %v961, 2147483648
  %v972 = vsel %vm970, %v971, %v962
  %v973 = vsel %vm966, %v969, %v972
  %v974 = vsel %vm963, nan, %v973
  %v975 = vpack.c.bf16 %v350, %v246
  %v976 = vpack.c.bf16 %v558, %v454
  %v977 = vpack.c.bf16 %v766, %v662
  %v978 = vpack.c.bf16 %v974, %v870
  %v983 = vunpack.c.l.b16 %v975
  %v984 = vunpack.c.h.b16 %v975
  %v985 = vunpack.c.l.b16 %v976
  %v986 = vunpack.c.h.b16 %v976
  %v987 = vunpack.c.l.b16 %v977
  %v988 = vunpack.c.h.b16 %v977
  %v989 = vunpack.c.l.b16 %v978
  %v990 = vunpack.c.h.b16 %v978
  %v991 = vpack.c.b16 %v983, %v983
  %v992 = vpack.c.b16 %v984, %v984
  %v993 = vpack.c.b16 %v985, %v985
  %v994 = vpack.c.b16 %v986, %v986
  %v995 = vpack.c.b16 %v987, %v987
  %v996 = vpack.c.b16 %v988, %v988
  %v997 = vpack.c.b16 %v989, %v989
  %v998 = vpack.c.b16 %v990, %v990
  %1007 = vst [vmem:[%s3] sm:$0xf] %v991
  %1008 = vst [vmem:[%s3 + $0x4] sm:$0xf] %v992
  %1009 = vst [vmem:[%s3 + $0x8] sm:$0xf] %v993
  %1010 = vst [vmem:[%s3 + $0xc] sm:$0xf] %v994
  %1011 = vst [vmem:[%s3 + $0x10] sm:$0xf] %v995
  %1012 = vst [vmem:[%s3 + $0x14] sm:$0xf] %v996
  %1013 = vst [vmem:[%s3 + $0x18] sm:$0xf] %v997
  %1014 = vst [vmem:[%s3 + $0x1c] sm:$0xf] %v998
  // Predicated region
  $region14: #{a_call__.7} parent=0 // pred_check
    _
  $region15: #{a_call__.7} parent=0 // pred_check_branch
    %1016 = sbr.rel (0) target = $region17
  $region16: #{a_call__.7} parent=0 // pred_region
    _
  $region17: #{a_call__.7} parent=0 // pred_fallthru
    _
  // Predicated region
  $region18: #{a_call__.7} parent=0 // pred_check
    _
  $region19: #{a_call__.7} parent=0 // pred_check_branch
    %1018 = sbr.rel (0) target = $region21
  $region20: #{a_call__.7} parent=0 // pred_region
    _
  $region21: #{a_call__.7} parent=0 // pred_fallthru
    _

// kernel: a_call__.9
$region0: #{a_call__.9}
  #allocation0 [shape = 'u32[]', space=smem, size = 0x4, offset = 0x4, fixed_abs, tag = 'smem constant byte address 0x4 - core index']
  #allocation1 [shape = 'u32[144,128]{1,0:T(1,128)}', space=vmem, size = 0x12000, scoped, tag = 'internal scratch']
  %s0 = inlined_call_operand.vmem [shape: bf16[32,128], index: 0, kind: input, shape index: {}]
  %s1 = inlined_call_operand.vmem [shape: bf16[128,128], index: 1, kind: input, shape index: {}]
  %s2 = inlined_call_operand.vmem [shape: f32[1,128], index: 2, kind: input, shape index: {}, may-alias: {2,4}]
  %s3 = inlined_call_operand.vmem [shape: bf16[128,128], index: 3, kind: input, shape index: {}]
  %s4 = inlined_call_operand.vmem [shape: f32[1,128], index: 4, kind: input, shape index: {}, may-alias: {2,4}]
  %s5 = inlined_call_operand.vmem [shape: bf16[32,128], index: 5, kind: output, shape index: {}]
  %s6 = sld [smem:[#allocation0]]
  $region30: #{a_call__.9} parent=0
    _
  %s8 = ssub.s32 1, %s6
  %s9 = scalar_select 0, %s8, %s6
  // Predicated region
  $region2: #{a_call__.9} parent=0 // pred_check
    _
  $region3: #{a_call__.9} parent=0 // pred_check_branch
    %11 = sbr.rel (0) target = $region5
  $region4: #{a_call__.9} parent=0 // pred_region
    _
  $region5: #{a_call__.9} parent=0 // pred_fallthru
    _
  // Predicated region
  $region6: #{a_call__.9} parent=0 // pred_check
    _
  $region7: #{a_call__.9} parent=0 // pred_check_branch
    %13 = sbr.rel (0) target = $region9
  $region8: #{a_call__.9} parent=0 // pred_region
    _
  $region9: #{a_call__.9} parent=0 // pred_fallthru
    _
  // Predicated region
  $region10: #{a_call__.9} parent=0 // pred_check
    _
  $region11: #{a_call__.9} parent=0 // pred_check_branch
    %15 = sbr.rel (0) target = $region13
  $region12: #{a_call__.9} parent=0 // pred_region
    _
  $region13: #{a_call__.9} parent=0 // pred_fallthru
    _
  // Predicated region
  $region14: #{a_call__.9} parent=0 // pred_check
    _
  $region15: #{a_call__.9} parent=0 // pred_check_branch
    %17 = sbr.rel (0) target = $region17
  $region16: #{a_call__.9} parent=0 // pred_region
    _
  $region17: #{a_call__.9} parent=0 // pred_fallthru
    _
  // Predicated region
  $region18: #{a_call__.9} parent=0 // pred_check
    _
  $region19: #{a_call__.9} parent=0 // pred_check_branch
    %19 = sbr.rel (0) target = $region21
  $region20: #{a_call__.9} parent=0 // pred_region
    _
  $region21: #{a_call__.9} parent=0 // pred_fallthru
    _
  %v21 = vld [vmem:[%s0] sm:$0xf]
  %v22 = vld [vmem:[%s0 + $0x4] sm:$0xf]
  %v23 = vld [vmem:[%s0 + $0x8] sm:$0xf]
  %v24 = vld [vmem:[%s0 + $0xc] sm:$0xf]
  %v25 = vld [vmem:[%s1] sm:$0xf]
  %v26 = vld [vmem:[%s1 + $0x4] sm:$0xf]
  %v27 = vld [vmem:[%s1 + $0x8] sm:$0xf]
  %v28 = vld [vmem:[%s1 + $0xc] sm:$0xf]
  %v29 = vld [vmem:[%s1 + $0x10] sm:$0xf]
  %v30 = vld [vmem:[%s1 + $0x14] sm:$0xf]
  %v31 = vld [vmem:[%s1 + $0x18] sm:$0xf]
  %v32 = vld [vmem:[%s1 + $0x1c] sm:$0xf]
  %v33 = vld [vmem:[%s1 + $0x20] sm:$0xf]
  %v34 = vld [vmem:[%s1 + $0x24] sm:$0xf]
  %v35 = vld [vmem:[%s1 + $0x28] sm:$0xf]
  %v36 = vld [vmem:[%s1 + $0x2c] sm:$0xf]
  %v37 = vld [vmem:[%s1 + $0x30] sm:$0xf]
  %v38 = vld [vmem:[%s1 + $0x34] sm:$0xf]
  %v39 = vld [vmem:[%s1 + $0x38] sm:$0xf]
  %v40 = vld [vmem:[%s1 + $0x3c] sm:$0xf]
  %v41 = vld [vmem:[%s2] sm:$0x1]
  %v43 = vlaneseq
  %v44 = vshrl.u32 %v43, 7
  %v45 = vsub.s32 0, %v44
  %v46 = vrot.slane %v41, %v45
  %v52 = vunpack.c.l.b16 %v21
  %v53 = vunpack.c.l.b16 %v22
  %v54 = vunpack.c.l.b16 %v23
  %v55 = vunpack.c.l.b16 %v24
  %v56 = vpack.c.b16 %v53, %v52
  %v57 = vpack.c.b16 %v55, %v54
  %v76 = vunpack.c.l.b16 %v25
  %v77 = vunpack.c.l.b16 %v26
  %v78 = vunpack.c.l.b16 %v27
  %v79 = vunpack.c.l.b16 %v28
  %v80 = vunpack.c.l.b16 %v29
  %v81 = vunpack.c.l.b16 %v30
  %v82 = vunpack.c.l.b16 %v31
  %v83 = vunpack.c.l.b16 %v32
  %v84 = vunpack.c.l.b16 %v33
  %v85 = vunpack.c.l.b16 %v34
  %v86 = vunpack.c.l.b16 %v35
  %v87 = vunpack.c.l.b16 %v36
  %v88 = vunpack.c.l.b16 %v37
  %v89 = vunpack.c.l.b16 %v38
  %v90 = vunpack.c.l.b16 %v39
  %v91 = vunpack.c.l.b16 %v40
  %v92 = vpack.c.b16 %v77, %v76
  %v93 = vpack.c.b16 %v79, %v78
  %v94 = vpack.c.b16 %v81, %v80
  %v95 = vpack.c.b16 %v83, %v82
  %v96 = vpack.c.b16 %v85, %v84
  %v97 = vpack.c.b16 %v87, %v86
  %v98 = vpack.c.b16 %v89, %v88
  %v99 = vpack.c.b16 %v91, %v90
  %108 = vmatprep.subr.bf16.mxu0 0
  %109 = vmatpush1.bf16.msra.mxu0 %v92
  %110 = vmatprep.subr.bf16.mxu0 0
  %111 = vmatpush1.bf16.msra.mxu0 %v93
  %112 = vmatprep.subr.bf16.mxu0 0
  %113 = vmatpush1.bf16.msra.mxu0 %v94
  %114 = vmatprep.subr.bf16.mxu0 0
  %115 = vmatpush1.bf16.msra.mxu0 %v95
  %116 = vmatprep.subr.bf16.mxu0 0
  %117 = vmatpush1.bf16.msra.mxu0 %v96
  %118 = vmatprep.subr.bf16.mxu0 0
  %119 = vmatpush1.bf16.msra.mxu0 %v97
  %120 = vmatprep.subr.bf16.mxu0 0
  %121 = vmatpush1.bf16.msra.mxu0 %v98
  %122 = vmatprep.subr.bf16.mxu0 0
  %123 = vmatpush1.bf16.msra.mxu0 %v99
  %124 = vmatprep.subr.bf16.mxu0 0
  %125 = vmatpush1.bf16.msra.mxu0 0
  %126 = vmatprep.subr.bf16.mxu0 0
  %127 = vmatpush1.bf16.msra.mxu0 0
  %128 = vmatprep.subr.bf16.mxu0 0
  %129 = vmatpush1.bf16.msra.mxu0 0
  %130 = vmatprep.subr.bf16.mxu0 0
  %131 = vmatpush1.bf16.msra.mxu0 0
  %132 = vmatprep.subr.bf16.mxu0 0
  %133 = vmatpush1.bf16.msra.mxu0 0
  %134 = vmatprep.subr.bf16.mxu0 0
  %135 = vmatpush1.bf16.msra.mxu0 0
  %136 = vmatprep.subr.bf16.mxu0 0
  %137 = vmatpush1.bf16.msra.mxu0 0
  %138 = vmatprep.subr.bf16.mxu0 0
  %139 = vmatpush1.bf16.msra.mxu0 0
  %140 = vmatprep.mubr.bf16.mxu0 0
  %141 = vmatmul.mubr.bf16.gmra.mrb[0].mxu0 %v56
  %v142 = vpop.f32.mrb[0].mxu0
  %v143 = vadd.f32 %v46, %v142
  %v144 = vpop.f32.mrb[0].mxu0
  %v145 = vpop.f32.mrb[0].mxu0
  %v146 = vadd.f32 %v46, %v145
  %v147 = vpop.f32.mrb[0].mxu0
  %148 = vmatprep.mubr.bf16.mxu0 0
  %149 = vmatmul.mubr.bf16.gmra.mrb[0].mxu0 %v57
  %v150 = vpop.f32.mrb[0].mxu0
  %v151 = vadd.f32 %v46, %v150
  %v152 = vpop.f32.mrb[0].mxu0
  %v153 = vpop.f32.mrb[0].mxu0
  %v154 = vadd.f32 %v46, %v153
  %v155 = vpop.f32.mrb[0].mxu0
  %156 = vdwg.mxu0
  %v157 = vsub.f32 0.0, %v143
  %v158 = vsub.f32 0.0, %v146
  %v159 = vsub.f32 0.0, %v151
  %v160 = vsub.f32 0.0, %v154
  %v161 = vmul.f32 %v157, 1.442695
  %v162 = vpow.pop %v161
  %v163 = vmul.f32 %v158, 1.442695
  %v164 = vpow.pop %v163
  %v165 = vmul.f32 %v159, 1.442695
  %v166 = vpow.pop %v165
  %v167 = vmul.f32 %v160, 1.442695
  %v168 = vpow.pop %v167
  %v169 = vadd.f32 %v162, 1.0
  %v170 = vadd.f32 %v164, 1.0
  %v171 = vadd.f32 %v166, 1.0
  %v172 = vadd.f32 %v168, 1.0
  %v173 = vrcp.pop %v169
  %v174 = vrcp.pop %v170
  %v175 = vrcp.pop %v171
  %v176 = vrcp.pop %v172
  %v177 = vmul.f32 %v143, %v173
  %v178 = vmul.f32 %v146, %v174
  %v179 = vmul.f32 %v151, %v175
  %v180 = vmul.f32 %v154, %v176
  %v181 = vpack.c.bf16 %v178, %v177
  %v182 = vpack.c.bf16 %v180, %v179
  %v183 = vld [vmem:[%s3] sm:$0xf]
  %v184 = vld [vmem:[%s3 + $0x4] sm:$0xf]
  %v185 = vld [vmem:[%s3 + $0x8] sm:$0xf]
  %v186 = vld [vmem:[%s3 + $0xc] sm:$0xf]
  %v187 = vld [vmem:[%s3 + $0x10] sm:$0xf]
  %v188 = vld [vmem:[%s3 + $0x14] sm:$0xf]
  %v189 = vld [vmem:[%s3 + $0x18] sm:$0xf]
  %v190 = vld [vmem:[%s3 + $0x1c] sm:$0xf]
  %v191 = vld [vmem:[%s3 + $0x20] sm:$0xf]
  %v192 = vld [vmem:[%s3 + $0x24] sm:$0xf]
  %v193 = vld [vmem:[%s3 + $0x28] sm:$0xf]
  %v194 = vld [vmem:[%s3 + $0x2c] sm:$0xf]
  %v195 = vld [vmem:[%s3 + $0x30] sm:$0xf]
  %v196 = vld [vmem:[%s3 + $0x34] sm:$0xf]
  %v197 = vld [vmem:[%s3 + $0x38] sm:$0xf]
  %v198 = vld [vmem:[%s3 + $0x3c] sm:$0xf]
  %v199 = vld [vmem:[%s4] sm:$0x1]
  %v201 = vlaneseq
  %v202 = vshrl.u32 %v201, 7
  %v203 = vsub.s32 0, %v202
  %v204 = vrot.slane %v199, %v203
  %v222 = vunpack.c.l.b16 %v183
  %v223 = vunpack.c.l.b16 %v184
  %v224 = vunpack.c.l.b16 %v185
  %v225 = vunpack.c.l.b16 %v186
  %v226 = vunpack.c.l.b16 %v187
  %v227 = vunpack.c.l.b16 %v188
  %v228 = vunpack.c.l.b16 %v189
  %v229 = vunpack.c.l.b16 %v190
  %v230 = vunpack.c.l.b16 %v191
  %v231 = vunpack.c.l.b16 %v192
  %v232 = vunpack.c.l.b16 %v193
  %v233 = vunpack.c.l.b16 %v194
  %v234 = vunpack.c.l.b16 %v195
  %v235 = vunpack.c.l.b16 %v196
  %v236 = vunpack.c.l.b16 %v197
  %v237 = vunpack.c.l.b16 %v198
  %v238 = vpack.c.b16 %v223, %v222
  %v239 = vpack.c.b16 %v225, %v224
  %v240 = vpack.c.b16 %v227, %v226
  %v241 = vpack.c.b16 %v229, %v228
  %v242 = vpack.c.b16 %v231, %v230
  %v243 = vpack.c.b16 %v233, %v232
  %v244 = vpack.c.b16 %v235, %v234
  %v245 = vpack.c.b16 %v237, %v236
  %254 = vmatprep.subr.bf16.mxu0 0
  %255 = vmatpush1.bf16.msra.mxu0 %v238
  %256 = vmatprep.subr.bf16.mxu0 0
  %257 = vmatpush1.bf16.msra.mxu0 %v239
  %258 = vmatprep.subr.bf16.mxu0 0
  %259 = vmatpush1.bf16.msra.mxu0 %v240
  %260 = vmatprep.subr.bf16.mxu0 0
  %261 = vmatpush1.bf16.msra.mxu0 %v241
  %262 = vmatprep.subr.bf16.mxu0 0
  %263 = vmatpush1.bf16.msra.mxu0 %v242
  %264 = vmatprep.subr.bf16.mxu0 0
  %265 = vmatpush1.bf16.msra.mxu0 %v243
  %266 = vmatprep.subr.bf16.mxu0 0
  %267 = vmatpush1.bf16.msra.mxu0 %v244
  %268 = vmatprep.subr.bf16.mxu0 0
  %269 = vmatpush1.bf16.msra.mxu0 %v245
  %270 = vmatprep.subr.bf16.mxu0 0
  %271 = vmatpush1.bf16.msra.mxu0 0
  %272 = vmatprep.subr.bf16.mxu0 0
  %273 = vmatpush1.bf16.msra.mxu0 0
  %274 = vmatprep.subr.bf16.mxu0 0
  %275 = vmatpush1.bf16.msra.mxu0 0
  %276 = vmatprep.subr.bf16.mxu0 0
  %277 = vmatpush1.bf16.msra.mxu0 0
  %278 = vmatprep.subr.bf16.mxu0 0
  %279 = vmatpush1.bf16.msra.mxu0 0
  %280 = vmatprep.subr.bf16.mxu0 0
  %281 = vmatpush1.bf16.msra.mxu0 0
  %282 = vmatprep.subr.bf16.mxu0 0
  %283 = vmatpush1.bf16.msra.mxu0 0
  %284 = vmatprep.subr.bf16.mxu0 0
  %285 = vmatpush1.bf16.msra.mxu0 0
  %286 = vmatprep.mubr.bf16.mxu0 0
  %287 = vmatmul.mubr.bf16.gmra.mrb[0].mxu0 %v181
  %v288 = vpop.f32.mrb[0].mxu0
  %v289 = vadd.f32 %v204, %v288
  %v290 = vpop.f32.mrb[0].mxu0
  %v291 = vpop.f32.mrb[0].mxu0
  %v292 = vadd.f32 %v204, %v291
  %v293 = vpop.f32.mrb[0].mxu0
  %294 = vmatprep.mubr.bf16.mxu0 0
  %295 = vmatmul.mubr.bf16.gmra.mrb[0].mxu0 %v182
  %v296 = vpop.f32.mrb[0].mxu0
  %v297 = vadd.f32 %v204, %v296
  %v298 = vpop.f32.mrb[0].mxu0
  %v299 = vpop.f32.mrb[0].mxu0
  %v300 = vadd.f32 %v204, %v299
  %v301 = vpop.f32.mrb[0].mxu0
  %302 = vdwg.mxu0
  %v303 = vunpack.c.l.bf16 %v21
  %v304 = vunpack.c.l.bf16 %v22
  %v305 = vunpack.c.l.bf16 %v23
  %v306 = vunpack.c.l.bf16 %v24
  %v307 = vadd.f32 %v289, %v303
  %v308 = vadd.f32 %v292, %v304
  %v309 = vadd.f32 %v297, %v305
  %v310 = vadd.f32 %v300, %v306
  %v311 = vpack.c.bf16 %v308, %v307
  %v312 = vpack.c.bf16 %v310, %v309
  %v315 = vunpack.c.l.b16 %v311
  %v316 = vunpack.c.h.b16 %v311
  %v317 = vunpack.c.l.b16 %v312
  %v318 = vunpack.c.h.b16 %v312
  %v319 = vpack.c.b16 %v315, %v315
  %v320 = vpack.c.b16 %v316, %v316
  %v321 = vpack.c.b16 %v317, %v317
  %v322 = vpack.c.b16 %v318, %v318
  %327 = vst [vmem:[%s5] sm:$0xf] %v319
  %328 = vst [vmem:[%s5 + $0x4] sm:$0xf] %v320
  %329 = vst [vmem:[%s5 + $0x8] sm:$0xf] %v321
  %330 = vst [vmem:[%s5 + $0xc] sm:$0xf] %v322
  // Predicated region
  $region22: #{a_call__.9} parent=0 // pred_check
    _
  $region23: #{a_call__.9} parent=0 // pred_check_branch
    %332 = sbr.rel (0) target = $region25
  $region24: #{a_call__.9} parent=0 // pred_region
    _
  $region25: #{a_call__.9} parent=0 // pred_fallthru
    _
  // Predicated region
  $region26: #{a_call__.9} parent=0 // pred_check
    _
  $region27: #{a_call__.9} parent=0 // pred_check_branch
    %334 = sbr.rel (0) target = $region29
  $region28: #{a_call__.9} parent=0 // pred_region
    _
  $region29: #{a_call__.9} parent=0 // pred_fallthru
    _

// kernel: a_call__.10
$region0: #{a_call__.10}
  #allocation0 [shape = 'u32[]', space=smem, size = 0x4, offset = 0x4, fixed_abs, tag = 'smem constant byte address 0x4 - core index']
  #allocation1 [shape = 'u32[144,128]{1,0:T(1,128)}', space=vmem, size = 0x12000, scoped, tag = 'internal scratch']
  %s0 = inlined_call_operand.vmem [shape: bf16[256,128], index: 0, kind: input, shape index: {}]
  %s1 = inlined_call_operand.vmem [shape: bf16[256,128], index: 1, kind: input, shape index: {}]
  %s2 = inlined_call_operand.vmem [shape: bf16[128,128], index: 2, kind: input, shape index: {}]
  %s3 = inlined_call_operand.vmem [shape: bf16[128,128], index: 3, kind: input, shape index: {}]
  %s4 = inlined_call_operand.vmem [shape: f32[1,128], index: 4, kind: input, shape index: {}, may-alias: {4,6}]
  %s5 = inlined_call_operand.vmem [shape: bf16[128,128], index: 5, kind: input, shape index: {}]
  %s6 = inlined_call_operand.vmem [shape: f32[1,128], index: 6, kind: input, shape index: {}, may-alias: {4,6}]
  %s7 = inlined_call_operand.vmem [shape: bf16[256,128], index: 7, kind: output, shape index: {}]
  %s8 = sld [smem:[#allocation0]]
  $region38: #{a_call__.10} parent=0
    _
  %s10 = ssub.s32 1, %s8
  %s11 = scalar_select 0, %s10, %s8
  // Predicated region
  $region2: #{a_call__.10} parent=0 // pred_check
    _
  $region3: #{a_call__.10} parent=0 // pred_check_branch
    %13 = sbr.rel (0) target = $region5
  $region4: #{a_call__.10} parent=0 // pred_region
    _
  $region5: #{a_call__.10} parent=0 // pred_fallthru
    _
  // Predicated region
  $region6: #{a_call__.10} parent=0 // pred_check
    _
  $region7: #{a_call__.10} parent=0 // pred_check_branch
    %15 = sbr.rel (0) target = $region9
  $region8: #{a_call__.10} parent=0 // pred_region
    _
  $region9: #{a_call__.10} parent=0 // pred_fallthru
    _
  // Predicated region
  $region10: #{a_call__.10} parent=0 // pred_check
    _
  $region11: #{a_call__.10} parent=0 // pred_check_branch
    %17 = sbr.rel (0) target = $region13
  $region12: #{a_call__.10} parent=0 // pred_region
    _
  $region13: #{a_call__.10} parent=0 // pred_fallthru
    _
  // Predicated region
  $region14: #{a_call__.10} parent=0 // pred_check
    _
  $region15: #{a_call__.10} parent=0 // pred_check_branch
    %19 = sbr.rel (0) target = $region17
  $region16: #{a_call__.10} parent=0 // pred_region
    _
  $region17: #{a_call__.10} parent=0 // pred_fallthru
    _
  // Predicated region
  $region18: #{a_call__.10} parent=0 // pred_check
    _
  $region19: #{a_call__.10} parent=0 // pred_check_branch
    %21 = sbr.rel (0) target = $region21
  $region20: #{a_call__.10} parent=0 // pred_region
    _
  $region21: #{a_call__.10} parent=0 // pred_fallthru
    _
  // Predicated region
  $region22: #{a_call__.10} parent=0 // pred_check
    _
  $region23: #{a_call__.10} parent=0 // pred_check_branch
    %23 = sbr.rel (0) target = $region25
  $region24: #{a_call__.10} parent=0 // pred_region
    _
  $region25: #{a_call__.10} parent=0 // pred_fallthru
    _
  // Predicated region
  $region26: #{a_call__.10} parent=0 // pred_check
    _
  $region27: #{a_call__.10} parent=0 // pred_check_branch
    %25 = sbr.rel (0) target = $region29
  $region28: #{a_call__.10} parent=0 // pred_region
    _
  $region29: #{a_call__.10} parent=0 // pred_fallthru
    _
  %v27 = vld [vmem:[%s0] sm:$0xf]
  %v28 = vld [vmem:[%s0 + $0x4] sm:$0xf]
  %v29 = vld [vmem:[%s0 + $0x8] sm:$0xf]
  %v30 = vld [vmem:[%s0 + $0xc] sm:$0xf]
  %v31 = vld [vmem:[%s0 + $0x10] sm:$0xf]
  %v32 = vld [vmem:[%s0 + $0x14] sm:$0xf]
  %v33 = vld [vmem:[%s0 + $0x18] sm:$0xf]
  %v34 = vld [vmem:[%s0 + $0x1c] sm:$0xf]
  %v35 = vld [vmem:[%s0 + $0x20] sm:$0xf]
  %v36 = vld [vmem:[%s0 + $0x24] sm:$0xf]
  %v37 = vld [vmem:[%s0 + $0x28] sm:$0xf]
  %v38 = vld [vmem:[%s0 + $0x2c] sm:$0xf]
  %v39 = vld [vmem:[%s0 + $0x30] sm:$0xf]
  %v40 = vld [vmem:[%s0 + $0x34] sm:$0xf]
  %v41 = vld [vmem:[%s0 + $0x38] sm:$0xf]
  %v42 = vld [vmem:[%s0 + $0x3c] sm:$0xf]
  %v43 = vld [vmem:[%s0 + $0x40] sm:$0xf]
  %v44 = vld [vmem:[%s0 + $0x44] sm:$0xf]
  %v45 = vld [vmem:[%s0 + $0x48] sm:$0xf]
  %v46 = vld [vmem:[%s0 + $0x4c] sm:$0xf]
  %v47 = vld [vmem:[%s0 + $0x50] sm:$0xf]
  %v48 = vld [vmem:[%s0 + $0x54] sm:$0xf]
  %v49 = vld [vmem:[%s0 + $0x58] sm:$0xf]
  %v50 = vld [vmem:[%s0 + $0x5c] sm:$0xf]
  %v51 = vld [vmem:[%s0 + $0x60] sm:$0xf]
  %v52 = vld [vmem:[%s0 + $0x64] sm:$0xf]
  %v53 = vld [vmem:[%s0 + $0x68] sm:$0xf]
  %v54 = vld [vmem:[%s0 + $0x6c] sm:$0xf]
  %v55 = vld [vmem:[%s0 + $0x70] sm:$0xf]
  %v56 = vld [vmem:[%s0 + $0x74] sm:$0xf]
  %v57 = vld [vmem:[%s0 + $0x78] sm:$0xf]
  %v58 = vld [vmem:[%s0 + $0x7c] sm:$0xf]
  %v59 = vld [vmem:[%s2] sm:$0xf]
  %v60 = vld [vmem:[%s2 + $0x4] sm:$0xf]
  %v61 = vld [vmem:[%s2 + $0x8] sm:$0xf]
  %v62 = vld [vmem:[%s2 + $0xc] sm:$0xf]
  %v63 = vld [vmem:[%s2 + $0x10] sm:$0xf]
  %v64 = vld [vmem:[%s2 + $0x14] sm:$0xf]
  %v65 = vld [vmem:[%s2 + $0x18] sm:$0xf]
  %v66 = vld [vmem:[%s2 + $0x1c] sm:$0xf]
  %v67 = vld [vmem:[%s2 + $0x20] sm:$0xf]
  %v68 = vld [vmem:[%s2 + $0x24] sm:$0xf]
  %v69 = vld [vmem:[%s2 + $0x28] sm:$0xf]
  %v70 = vld [vmem:[%s2 + $0x2c] sm:$0xf]
  %v71 = vld [vmem:[%s2 + $0x30] sm:$0xf]
  %v72 = vld [vmem:[%s2 + $0x34] sm:$0xf]
  %v73 = vld [vmem:[%s2 + $0x38] sm:$0xf]
  %v74 = vld [vmem:[%s2 + $0x3c] sm:$0xf]
  %v75 = vld [vmem:[%s1] sm:$0xf]
  %v76 = vld [vmem:[%s1 + $0x4] sm:$0xf]
  %v77 = vld [vmem:[%s1 + $0x8] sm:$0xf]
  %v78 = vld [vmem:[%s1 + $0xc] sm:$0xf]
  %v79 = vld [vmem:[%s1 + $0x10] sm:$0xf]
  %v80 = vld [vmem:[%s1 + $0x14] sm:$0xf]
  %v81 = vld [vmem:[%s1 + $0x18] sm:$0xf]
  %v82 = vld [vmem:[%s1 + $0x1c] sm:$0xf]
  %v83 = vld [vmem:[%s1 + $0x20] sm:$0xf]
  %v84 = vld [vmem:[%s1 + $0x24] sm:$0xf]
  %v85 = vld [vmem:[%s1 + $0x28] sm:$0xf]
  %v86 = vld [vmem:[%s1 + $0x2c] sm:$0xf]
  %v87 = vld [vmem:[%s1 + $0x30] sm:$0xf]
  %v88 = vld [vmem:[%s1 + $0x34] sm:$0xf]
  %v89 = vld [vmem:[%s1 + $0x38] sm:$0xf]
  %v90 = vld [vmem:[%s1 + $0x3c] sm:$0xf]
  %v91 = vld [vmem:[%s1 + $0x40] sm:$0xf]
  %v92 = vld [vmem:[%s1 + $0x44] sm:$0xf]
  %v93 = vld [vmem:[%s1 + $0x48] sm:$0xf]
  %v94 = vld [vmem:[%s1 + $0x4c] sm:$0xf]
  %v95 = vld [vmem:[%s1 + $0x50] sm:$0xf]
  %v96 = vld [vmem:[%s1 + $0x54] sm:$0xf]
  %v97 = vld [vmem:[%s1 + $0x58] sm:$0xf]
  %v98 = vld [vmem:[%s1 + $0x5c] sm:$0xf]
  %v99 = vld [vmem:[%s1 + $0x60] sm:$0xf]
  %v100 = vld [vmem:[%s1 + $0x64] sm:$0xf]
  %v101 = vld [vmem:[%s1 + $0x68] sm:$0xf]
  %v102 = vld [vmem:[%s1 + $0x6c] sm:$0xf]
  %v103 = vld [vmem:[%s1 + $0x70] sm:$0xf]
  %v104 = vld [vmem:[%s1 + $0x74] sm:$0xf]
  %v105 = vld [vmem:[%s1 + $0x78] sm:$0xf]
  %v106 = vld [vmem:[%s1 + $0x7c] sm:$0xf]
  %v107 = vld [vmem:[%s3] sm:$0xf]
  %v108 = vld [vmem:[%s3 + $0x4] sm:$0xf]
  %v109 = vld [vmem:[%s3 + $0x8] sm:$0xf]
  %v110 = vld [vmem:[%s3 + $0xc] sm:$0xf]
  %v111 = vld [vmem:[%s3 + $0x10] sm:$0xf]
  %v112 = vld [vmem:[%s3 + $0x14] sm:$0xf]
  %v113 = vld [vmem:[%s3 + $0x18] sm:$0xf]
  %v114 = vld [vmem:[%s3 + $0x1c] sm:$0xf]
  %v115 = vld [vmem:[%s3 + $0x20] sm:$0xf]
  %v116 = vld [vmem:[%s3 + $0x24] sm:$0xf]
  %v117 = vld [vmem:[%s3 + $0x28] sm:$0xf]
  %v118 = vld [vmem:[%s3 + $0x2c] sm:$0xf]
  %v119 = vld [vmem:[%s3 + $0x30] sm:$0xf]
  %v120 = vld [vmem:[%s3 + $0x34] sm:$0xf]
  %v121 = vld [vmem:[%s3 + $0x38] sm:$0xf]
  %v122 = vld [vmem:[%s3 + $0x3c] sm:$0xf]
  %v155 = vunpack.c.l.b16 %v75
  %v156 = vunpack.c.l.b16 %v76
  %v157 = vunpack.c.l.b16 %v77
  %v158 = vunpack.c.l.b16 %v78
  %v159 = vunpack.c.l.b16 %v79
  %v160 = vunpack.c.l.b16 %v80
  %v161 = vunpack.c.l.b16 %v81
  %v162 = vunpack.c.l.b16 %v82
  %v163 = vunpack.c.l.b16 %v83
  %v164 = vunpack.c.l.b16 %v84
  %v165 = vunpack.c.l.b16 %v85
  %v166 = vunpack.c.l.b16 %v86
  %v167 = vunpack.c.l.b16 %v87
  %v168 = vunpack.c.l.b16 %v88
  %v169 = vunpack.c.l.b16 %v89
  %v170 = vunpack.c.l.b16 %v90
  %v171 = vunpack.c.l.b16 %v91
  %v172 = vunpack.c.l.b16 %v92
  %v173 = vunpack.c.l.b16 %v93
  %v174 = vunpack.c.l.b16 %v94
  %v175 = vunpack.c.l.b16 %v95
  %v176 = vunpack.c.l.b16 %v96
  %v177 = vunpack.c.l.b16 %v97
  %v178 = vunpack.c.l.b16 %v98
  %v179 = vunpack.c.l.b16 %v99
  %v180 = vunpack.c.l.b16 %v100
  %v181 = vunpack.c.l.b16 %v101
  %v182 = vunpack.c.l.b16 %v102
  %v183 = vunpack.c.l.b16 %v103
  %v184 = vunpack.c.l.b16 %v104
  %v185 = vunpack.c.l.b16 %v105
  %v186 = vunpack.c.l.b16 %v106
  %v187 = vpack.c.b16 %v156, %v155
  %v188 = vpack.c.b16 %v158, %v157
  %v189 = vpack.c.b16 %v160, %v159
  %v190 = vpack.c.b16 %v162, %v161
  %v191 = vpack.c.b16 %v164, %v163
  %v192 = vpack.c.b16 %v166, %v165
  %v193 = vpack.c.b16 %v168, %v167
  %v194 = vpack.c.b16 %v170, %v169
  %v195 = vpack.c.b16 %v172, %v171
  %v196 = vpack.c.b16 %v174, %v173
  %v197 = vpack.c.b16 %v176, %v175
  %v198 = vpack.c.b16 %v178, %v177
  %v199 = vpack.c.b16 %v180, %v179
  %v200 = vpack.c.b16 %v182, %v181
  %v201 = vpack.c.b16 %v184, %v183
  %v202 = vpack.c.b16 %v186, %v185
  %v235 = vunpack.c.l.b16 %v107
  %v236 = vunpack.c.l.b16 %v108
  %v237 = vunpack.c.l.b16 %v109
  %v238 = vunpack.c.l.b16 %v110
  %v239 = vunpack.c.l.b16 %v111
  %v240 = vunpack.c.l.b16 %v112
  %v241 = vunpack.c.l.b16 %v113
  %v242 = vunpack.c.l.b16 %v114
  %v243 = vunpack.c.l.b16 %v115
  %v244 = vunpack.c.l.b16 %v116
  %v245 = vunpack.c.l.b16 %v117
  %v246 = vunpack.c.l.b16 %v118
  %v247 = vunpack.c.l.b16 %v119
  %v248 = vunpack.c.l.b16 %v120
  %v249 = vunpack.c.l.b16 %v121
  %v250 = vunpack.c.l.b16 %v122
  %v251 = vpack.c.b16 %v236, %v235
  %v252 = vpack.c.b16 %v238, %v237
  %v253 = vpack.c.b16 %v240, %v239
  %v254 = vpack.c.b16 %v242, %v241
  %v255 = vpack.c.b16 %v244, %v243
  %v256 = vpack.c.b16 %v246, %v245
  %v257 = vpack.c.b16 %v248, %v247
  %v258 = vpack.c.b16 %v250, %v249
  %267 = vmatprep.subr.bf16.mxu0 0
  %268 = vmatpush1.bf16.msra.mxu0 %v251
  %269 = vmatprep.subr.bf16.mxu0 0
  %270 = vmatpush1.bf16.msra.mxu0 %v252
  %271 = vmatprep.subr.bf16.mxu0 0
  %272 = vmatpush1.bf16.msra.mxu0 %v253
  %273 = vmatprep.subr.bf16.mxu0 0
  %274 = vmatpush1.bf16.msra.mxu0 %v254
  %275 = vmatprep.subr.bf16.mxu0 0
  %276 = vmatpush1.bf16.msra.mxu0 %v255
  %277 = vmatprep.subr.bf16.mxu0 0
  %278 = vmatpush1.bf16.msra.mxu0 %v256
  %279 = vmatprep.subr.bf16.mxu0 0
  %280 = vmatpush1.bf16.msra.mxu0 %v257
  %281 = vmatprep.subr.bf16.mxu0 0
  %282 = vmatpush1.bf16.msra.mxu0 %v258
  %283 = vmatprep.subr.bf16.mxu0 0
  %284 = vmatpush1.bf16.msra.mxu0 0
  %285 = vmatprep.subr.bf16.mxu0 0
  %286 = vmatpush1.bf16.msra.mxu0 0
  %287 = vmatprep.subr.bf16.mxu0 0
  %288 = vmatpush1.bf16.msra.mxu0 0
  %289 = vmatprep.subr.bf16.mxu0 0
  %290 = vmatpush1.bf16.msra.mxu0 0
  %291 = vmatprep.subr.bf16.mxu0 0
  %292 = vmatpush1.bf16.msra.mxu0 0
  %293 = vmatprep.subr.bf16.mxu0 0
  %294 = vmatpush1.bf16.msra.mxu0 0
  %295 = vmatprep.subr.bf16.mxu0 0
  %296 = vmatpush1.bf16.msra.mxu0 0
  %297 = vmatprep.subr.bf16.mxu0 0
  %298 = vmatpush1.bf16.msra.mxu0 0
  %299 = vmatprep.mubr.bf16.mxu0 0
  %300 = vmatmul.mubr.bf16.gmra.mrb[0].mxu0 %v187
  %v301 = vpop.f32.mrb[0].mxu0
  %v302 = vadd.f32 0.0, %v301
  %v303 = vpop.f32.mrb[0].mxu0
  %v304 = vpop.f32.mrb[0].mxu0
  %v305 = vadd.f32 0.0, %v304
  %v306 = vpop.f32.mrb[0].mxu0
  %307 = vmatprep.mubr.bf16.mxu0 0
  %308 = vmatmul.mubr.bf16.gmra.mrb[0].mxu0 %v188
  %v309 = vpop.f32.mrb[0].mxu0
  %v310 = vadd.f32 0.0, %v309
  %v311 = vpop.f32.mrb[0].mxu0
  %v312 = vpop.f32.mrb[0].mxu0
  %v313 = vadd.f32 0.0, %v312
  %v314 = vpop.f32.mrb[0].mxu0
  %315 = vmatprep.mubr.bf16.mxu0 0
  %316 = vmatmul.mubr.bf16.gmra.mrb[0].mxu0 %v189
  %v317 = vpop.f32.mrb[0].mxu0
  %v318 = vadd.f32 0.0, %v317
  %v319 = vpop.f32.mrb[0].mxu0
  %v320 = vpop.f32.mrb[0].mxu0
  %v321 = vadd.f32 0.0, %v320
  %v322 = vpop.f32.mrb[0].mxu0
  %323 = vmatprep.mubr.bf16.mxu0 0
  %324 = vmatmul.mubr.bf16.gmra.mrb[0].mxu0 %v190
  %v325 = vpop.f32.mrb[0].mxu0
  %v326 = vadd.f32 0.0, %v325
  %v327 = vpop.f32.mrb[0].mxu0
  %v328 = vpop.f32.mrb[0].mxu0
  %v329 = vadd.f32 0.0, %v328
  %v330 = vpop.f32.mrb[0].mxu0
  %331 = vmatprep.mubr.bf16.mxu0 0
  %332 = vmatmul.mubr.bf16.gmra.mrb[0].mxu0 %v191
  %v333 = vpop.f32.mrb[0].mxu0
  %v334 = vadd.f32 0.0, %v333
  %v335 = vpop.f32.mrb[0].mxu0
  %v336 = vpop.f32.mrb[0].mxu0
  %v337 = vadd.f32 0.0, %v336
  %v338 = vpop.f32.mrb[0].mxu0
  %339 = vmatprep.mubr.bf16.mxu0 0
  %340 = vmatmul.mubr.bf16.gmra.mrb[0].mxu0 %v192
  %v341 = vpop.f32.mrb[0].mxu0
  %v342 = vadd.f32 0.0, %v341
  %v343 = vpop.f32.mrb[0].mxu0
  %v344 = vpop.f32.mrb[0].mxu0
  %v345 = vadd.f32 0.0, %v344
  %v346 = vpop.f32.mrb[0].mxu0
  %347 = vmatprep.mubr.bf16.mxu0 0
  %348 = vmatmul.mubr.bf16.gmra.mrb[0].mxu0 %v193
  %v349 = vpop.f32.mrb[0].mxu0
  %v350 = vadd.f32 0.0, %v349
  %v351 = vpop.f32.mrb[0].mxu0
  %v352 = vpop.f32.mrb[0].mxu0
  %v353 = vadd.f32 0.0, %v352
  %v354 = vpop.f32.mrb[0].mxu0
  %355 = vmatprep.mubr.bf16.mxu0 0
  %356 = vmatmul.mubr.bf16.gmra.mrb[0].mxu0 %v194
  %v357 = vpop.f32.mrb[0].mxu0
  %v358 = vadd.f32 0.0, %v357
  %v359 = vpop.f32.mrb[0].mxu0
  %v360 = vpop.f32.mrb[0].mxu0
  %v361 = vadd.f32 0.0, %v360
  %v362 = vpop.f32.mrb[0].mxu0
  %363 = vmatprep.mubr.bf16.mxu0 0
  %364 = vmatmul.mubr.bf16.gmra.mrb[0].mxu0 %v195
  %v365 = vpop.f32.mrb[0].mxu0
  %v366 = vadd.f32 0.0, %v365
  %v367 = vpop.f32.mrb[0].mxu0
  %v368 = vpop.f32.mrb[0].mxu0
  %v369 = vadd.f32 0.0, %v368
  %v370 = vpop.f32.mrb[0].mxu0
  %371 = vmatprep.mubr.bf16.mxu0 0
  %372 = vmatmul.mubr.bf16.gmra.mrb[0].mxu0 %v196
  %v373 = vpop.f32.mrb[0].mxu0
  %v374 = vadd.f32 0.0, %v373
  %v375 = vpop.f32.mrb[0].mxu0
  %v376 = vpop.f32.mrb[0].mxu0
  %v377 = vadd.f32 0.0, %v376
  %v378 = vpop.f32.mrb[0].mxu0
  %379 = vmatprep.mubr.bf16.mxu0 0
  %380 = vmatmul.mubr.bf16.gmra.mrb[0].mxu0 %v197
  %v381 = vpop.f32.mrb[0].mxu0
  %v382 = vadd.f32 0.0, %v381
  %v383 = vpop.f32.mrb[0].mxu0
  %v384 = vpop.f32.mrb[0].mxu0
  %v385 = vadd.f32 0.0, %v384
  %v386 = vpop.f32.mrb[0].mxu0
  %387 = vmatprep.mubr.bf16.mxu0 0
  %388 = vmatmul.mubr.bf16.gmra.mrb[0].mxu0 %v198
  %v389 = vpop.f32.mrb[0].mxu0
  %v390 = vadd.f32 0.0, %v389
  %v391 = vpop.f32.mrb[0].mxu0
  %v392 = vpop.f32.mrb[0].mxu0
  %v393 = vadd.f32 0.0, %v392
  %v394 = vpop.f32.mrb[0].mxu0
  %395 = vmatprep.mubr.bf16.mxu0 0
  %396 = vmatmul.mubr.bf16.gmra.mrb[0].mxu0 %v199
  %v397 = vpop.f32.mrb[0].mxu0
  %v398 = vadd.f32 0.0, %v397
  %v399 = vpop.f32.mrb[0].mxu0
  %v400 = vpop.f32.mrb[0].mxu0
  %v401 = vadd.f32 0.0, %v400
  %v402 = vpop.f32.mrb[0].mxu0
  %403 = vmatprep.mubr.bf16.mxu0 0
  %404 = vmatmul.mubr.bf16.gmra.mrb[0].mxu0 %v200
  %v405 = vpop.f32.mrb[0].mxu0
  %v406 = vadd.f32 0.0, %v405
  %v407 = vpop.f32.mrb[0].mxu0
  %v408 = vpop.f32.mrb[0].mxu0
  %v409 = vadd.f32 0.0, %v408
  %v410 = vpop.f32.mrb[0].mxu0
  %411 = vmatprep.mubr.bf16.mxu0 0
  %412 = vmatmul.mubr.bf16.gmra.mrb[0].mxu0 %v201
  %v413 = vpop.f32.mrb[0].mxu0
  %v414 = vadd.f32 0.0, %v413
  %v415 = vpop.f32.mrb[0].mxu0
  %v416 = vpop.f32.mrb[0].mxu0
  %v417 = vadd.f32 0.0, %v416
  %v418 = vpop.f32.mrb[0].mxu0
  %419 = vmatprep.mubr.bf16.mxu0 0
  %420 = vmatmul.mubr.bf16.gmra.mrb[0].mxu0 %v202
  %v421 = vpop.f32.mrb[0].mxu0
  %v422 = vadd.f32 0.0, %v421
  %v423 = vpop.f32.mrb[0].mxu0
  %v424 = vpop.f32.mrb[0].mxu0
  %v425 = vadd.f32 0.0, %v424
  %v426 = vpop.f32.mrb[0].mxu0
  %427 = vdwg.mxu0
  %v460 = vunpack.c.l.b16 %v27
  %v461 = vunpack.c.l.b16 %v28
  %v462 = vunpack.c.l.b16 %v29
  %v463 = vunpack.c.l.b16 %v30
  %v464 = vunpack.c.l.b16 %v31
  %v465 = vunpack.c.l.b16 %v32
  %v466 = vunpack.c.l.b16 %v33
  %v467 = vunpack.c.l.b16 %v34
  %v468 = vunpack.c.l.b16 %v35
  %v469 = vunpack.c.l.b16 %v36
  %v470 = vunpack.c.l.b16 %v37
  %v471 = vunpack.c.l.b16 %v38
  %v472 = vunpack.c.l.b16 %v39
  %v473 = vunpack.c.l.b16 %v40
  %v474 = vunpack.c.l.b16 %v41
  %v475 = vunpack.c.l.b16 %v42
  %v476 = vunpack.c.l.b16 %v43
  %v477 = vunpack.c.l.b16 %v44
  %v478 = vunpack.c.l.b16 %v45
  %v479 = vunpack.c.l.b16 %v46
  %v480 = vunpack.c.l.b16 %v47
  %v481 = vunpack.c.l.b16 %v48
  %v482 = vunpack.c.l.b16 %v49
  %v483 = vunpack.c.l.b16 %v50
  %v484 = vunpack.c.l.b16 %v51
  %v485 = vunpack.c.l.b16 %v52
  %v486 = vunpack.c.l.b16 %v53
  %v487 = vunpack.c.l.b16 %v54
  %v488 = vunpack.c.l.b16 %v55
  %v489 = vunpack.c.l.b16 %v56
  %v490 = vunpack.c.l.b16 %v57
  %v491 = vunpack.c.l.b16 %v58
  %v492 = vpack.c.b16 %v461, %v460
  %v493 = vpack.c.b16 %v463, %v462
  %v494 = vpack.c.b16 %v465, %v464
  %v495 = vpack.c.b16 %v467, %v466
  %v496 = vpack.c.b16 %v469, %v468
  %v497 = vpack.c.b16 %v471, %v470
  %v498 = vpack.c.b16 %v473, %v472
  %v499 = vpack.c.b16 %v475, %v474
  %v500 = vpack.c.b16 %v477, %v476
  %v501 = vpack.c.b16 %v479, %v478
  %v502 = vpack.c.b16 %v481, %v480
  %v503 = vpack.c.b16 %v483, %v482
  %v504 = vpack.c.b16 %v485, %v484
  %v505 = vpack.c.b16 %v487, %v486
  %v506 = vpack.c.b16 %v489, %v488
  %v507 = vpack.c.b16 %v491, %v490
  %v540 = vunpack.c.l.b16 %v59
  %v541 = vunpack.c.l.b16 %v60
  %v542 = vunpack.c.l.b16 %v61
  %v543 = vunpack.c.l.b16 %v62
  %v544 = vunpack.c.l.b16 %v63
  %v545 = vunpack.c.l.b16 %v64
  %v546 = vunpack.c.l.b16 %v65
  %v547 = vunpack.c.l.b16 %v66
  %v548 = vunpack.c.l.b16 %v67
  %v549 = vunpack.c.l.b16 %v68
  %v550 = vunpack.c.l.b16 %v69
  %v551 = vunpack.c.l.b16 %v70
  %v552 = vunpack.c.l.b16 %v71
  %v553 = vunpack.c.l.b16 %v72
  %v554 = vunpack.c.l.b16 %v73
  %v555 = vunpack.c.l.b16 %v74
  %v556 = vpack.c.b16 %v541, %v540
  %v557 = vpack.c.b16 %v543, %v542
  %v558 = vpack.c.b16 %v545, %v544
  %v559 = vpack.c.b16 %v547, %v546
  %v560 = vpack.c.b16 %v549, %v548
  %v561 = vpack.c.b16 %v551, %v550
  %v562 = vpack.c.b16 %v553, %v552
  %v563 = vpack.c.b16 %v555, %v554
  %572 = vmatprep.subr.bf16.mxu0 0
  %573 = vmatpush1.bf16.msra.mxu0 %v556
  %574 = vmatprep.subr.bf16.mxu0 0
  %575 = vmatpush1.bf16.msra.mxu0 %v557
  %576 = vmatprep.subr.bf16.mxu0 0
  %577 = vmatpush1.bf16.msra.mxu0 %v558
  %578 = vmatprep.subr.bf16.mxu0 0
  %579 = vmatpush1.bf16.msra.mxu0 %v559
  %580 = vmatprep.subr.bf16.mxu0 0
  %581 = vmatpush1.bf16.msra.mxu0 %v560
  %582 = vmatprep.subr.bf16.mxu0 0
  %583 = vmatpush1.bf16.msra.mxu0 %v561
  %584 = vmatprep.subr.bf16.mxu0 0
  %585 = vmatpush1.bf16.msra.mxu0 %v562
  %586 = vmatprep.subr.bf16.mxu0 0
  %587 = vmatpush1.bf16.msra.mxu0 %v563
  %588 = vmatprep.subr.bf16.mxu0 0
  %589 = vmatpush1.bf16.msra.mxu0 0
  %590 = vmatprep.subr.bf16.mxu0 0
  %591 = vmatpush1.bf16.msra.mxu0 0
  %592 = vmatprep.subr.bf16.mxu0 0
  %593 = vmatpush1.bf16.msra.mxu0 0
  %594 = vmatprep.subr.bf16.mxu0 0
  %595 = vmatpush1.bf16.msra.mxu0 0
  %596 = vmatprep.subr.bf16.mxu0 0
  %597 = vmatpush1.bf16.msra.mxu0 0
  %598 = vmatprep.subr.bf16.mxu0 0
  %599 = vmatpush1.bf16.msra.mxu0 0
  %600 = vmatprep.subr.bf16.mxu0 0
  %601 = vmatpush1.bf16.msra.mxu0 0
  %602 = vmatprep.subr.bf16.mxu0 0
  %603 = vmatpush1.bf16.msra.mxu0 0
  %604 = vmatprep.mubr.bf16.mxu0 0
  %605 = vmatmul.mubr.bf16.gmra.mrb[0].mxu0 %v492
  %v606 = vpop.f32.mrb[0].mxu0
  %v607 = vadd.f32 %v302, %v606
  %v608 = vpop.f32.mrb[0].mxu0
  %v609 = vpop.f32.mrb[0].mxu0
  %v610 = vadd.f32 %v305, %v609
  %v611 = vpop.f32.mrb[0].mxu0
  %612 = vmatprep.mubr.bf16.mxu0 0
  %613 = vmatmul.mubr.bf16.gmra.mrb[0].mxu0 %v493
  %v614 = vpop.f32.mrb[0].mxu0
  %v615 = vadd.f32 %v310, %v614
  %v616 = vpop.f32.mrb[0].mxu0
  %v617 = vpop.f32.mrb[0].mxu0
  %v618 = vadd.f32 %v313, %v617
  %v619 = vpop.f32.mrb[0].mxu0
  %620 = vmatprep.mubr.bf16.mxu0 0
  %621 = vmatmul.mubr.bf16.gmra.mrb[0].mxu0 %v494
  %v622 = vpop.f32.mrb[0].mxu0
  %v623 = vadd.f32 %v318, %v622
  %v624 = vpop.f32.mrb[0].mxu0
  %v625 = vpop.f32.mrb[0].mxu0
  %v626 = vadd.f32 %v321, %v625
  %v627 = vpop.f32.mrb[0].mxu0
  %628 = vmatprep.mubr.bf16.mxu0 0
  %629 = vmatmul.mubr.bf16.gmra.mrb[0].mxu0 %v495
  %v630 = vpop.f32.mrb[0].mxu0
  %v631 = vadd.f32 %v326, %v630
  %v632 = vpop.f32.mrb[0].mxu0
  %v633 = vpop.f32.mrb[0].mxu0
  %v634 = vadd.f32 %v329, %v633
  %v635 = vpop.f32.mrb[0].mxu0
  %636 = vmatprep.mubr.bf16.mxu0 0
  %637 = vmatmul.mubr.bf16.gmra.mrb[0].mxu0 %v496
  %v638 = vpop.f32.mrb[0].mxu0
  %v639 = vadd.f32 %v334, %v638
  %v640 = vpop.f32.mrb[0].mxu0
  %v641 = vpop.f32.mrb[0].mxu0
  %v642 = vadd.f32 %v337, %v641
  %v643 = vpop.f32.mrb[0].mxu0
  %644 = vmatprep.mubr.bf16.mxu0 0
  %645 = vmatmul.mubr.bf16.gmra.mrb[0].mxu0 %v497
  %v646 = vpop.f32.mrb[0].mxu0
  %v647 = vadd.f32 %v342, %v646
  %v648 = vpop.f32.mrb[0].mxu0
  %v649 = vpop.f32.mrb[0].mxu0
  %v650 = vadd.f32 %v345, %v649
  %v651 = vpop.f32.mrb[0].mxu0
  %652 = vmatprep.mubr.bf16.mxu0 0
  %653 = vmatmul.mubr.bf16.gmra.mrb[0].mxu0 %v498
  %v654 = vpop.f32.mrb[0].mxu0
  %v655 = vadd.f32 %v350, %v654
  %v656 = vpop.f32.mrb[0].mxu0
  %v657 = vpop.f32.mrb[0].mxu0
  %v658 = vadd.f32 %v353, %v657
  %v659 = vpop.f32.mrb[0].mxu0
  %660 = vmatprep.mubr.bf16.mxu0 0
  %661 = vmatmul.mubr.bf16.gmra.mrb[0].mxu0 %v499
  %v662 = vpop.f32.mrb[0].mxu0
  %v663 = vadd.f32 %v358, %v662
  %v664 = vpop.f32.mrb[0].mxu0
  %v665 = vpop.f32.mrb[0].mxu0
  %v666 = vadd.f32 %v361, %v665
  %v667 = vpop.f32.mrb[0].mxu0
  %668 = vmatprep.mubr.bf16.mxu0 0
  %669 = vmatmul.mubr.bf16.gmra.mrb[0].mxu0 %v500
  %v670 = vpop.f32.mrb[0].mxu0
  %v671 = vadd.f32 %v366, %v670
  %v672 = vpop.f32.mrb[0].mxu0
  %v673 = vpop.f32.mrb[0].mxu0
  %v674 = vadd.f32 %v369, %v673
  %v675 = vpop.f32.mrb[0].mxu0
  %676 = vmatprep.mubr.bf16.mxu0 0
  %677 = vmatmul.mubr.bf16.gmra.mrb[0].mxu0 %v501
  %v678 = vpop.f32.mrb[0].mxu0
  %v679 = vadd.f32 %v374, %v678
  %v680 = vpop.f32.mrb[0].mxu0
  %v681 = vpop.f32.mrb[0].mxu0
  %v682 = vadd.f32 %v377, %v681
  %v683 = vpop.f32.mrb[0].mxu0
  %684 = vmatprep.mubr.bf16.mxu0 0
  %685 = vmatmul.mubr.bf16.gmra.mrb[0].mxu0 %v502
  %v686 = vpop.f32.mrb[0].mxu0
  %v687 = vadd.f32 %v382, %v686
  %v688 = vpop.f32.mrb[0].mxu0
  %v689 = vpop.f32.mrb[0].mxu0
  %v690 = vadd.f32 %v385, %v689
  %v691 = vpop.f32.mrb[0].mxu0
  %692 = vmatprep.mubr.bf16.mxu0 0
  %693 = vmatmul.mubr.bf16.gmra.mrb[0].mxu0 %v503
  %v694 = vpop.f32.mrb[0].mxu0
  %v695 = vadd.f32 %v390, %v694
  %v696 = vpop.f32.mrb[0].mxu0
  %v697 = vpop.f32.mrb[0].mxu0
  %v698 = vadd.f32 %v393, %v697
  %v699 = vpop.f32.mrb[0].mxu0
  %700 = vmatprep.mubr.bf16.mxu0 0
  %701 = vmatmul.mubr.bf16.gmra.mrb[0].mxu0 %v504
  %v702 = vpop.f32.mrb[0].mxu0
  %v703 = vadd.f32 %v398, %v702
  %v704 = vpop.f32.mrb[0].mxu0
  %v705 = vpop.f32.mrb[0].mxu0
  %v706 = vadd.f32 %v401, %v705
  %v707 = vpop.f32.mrb[0].mxu0
  %708 = vmatprep.mubr.bf16.mxu0 0
  %709 = vmatmul.mubr.bf16.gmra.mrb[0].mxu0 %v505
  %v710 = vpop.f32.mrb[0].mxu0
  %v711 = vadd.f32 %v406, %v710
  %v712 = vpop.f32.mrb[0].mxu0
  %v713 = vpop.f32.mrb[0].mxu0
  %v714 = vadd.f32 %v409, %v713
  %v715 = vpop.f32.mrb[0].mxu0
  %716 = vmatprep.mubr.bf16.mxu0 0
  %717 = vmatmul.mubr.bf16.gmra.mrb[0].mxu0 %v506
  %v718 = vpop.f32.mrb[0].mxu0
  %v719 = vadd.f32 %v414, %v718
  %v720 = vpop.f32.mrb[0].mxu0
  %v721 = vpop.f32.mrb[0].mxu0
  %v722 = vadd.f32 %v417, %v721
  %v723 = vpop.f32.mrb[0].mxu0
  %724 = vmatprep.mubr.bf16.mxu0 0
  %725 = vmatmul.mubr.bf16.gmra.mrb[0].mxu0 %v507
  %v726 = vpop.f32.mrb[0].mxu0
  %v727 = vadd.f32 %v422, %v726
  %v728 = vpop.f32.mrb[0].mxu0
  %v729 = vpop.f32.mrb[0].mxu0
  %v730 = vadd.f32 %v425, %v729
  %v731 = vpop.f32.mrb[0].mxu0
  %732 = vdwg.mxu0
  %v733 = vld [vmem:[%s4] sm:$0x1]
  %v735 = vlaneseq
  %v736 = vshrl.u32 %v735, 7
  %v737 = vsub.s32 0, %v736
  %v738 = vrot.slane %v733, %v737
  %v740 = vadd.f32 %v607, %v738
  %v741 = vadd.f32 %v610, %v738
  %v742 = vadd.f32 %v615, %v738
  %v743 = vadd.f32 %v618, %v738
  %v744 = vadd.f32 %v623, %v738
  %v745 = vadd.f32 %v626, %v738
  %v746 = vadd.f32 %v631, %v738
  %v747 = vadd.f32 %v634, %v738
  %v748 = vadd.f32 %v639, %v738
  %v749 = vadd.f32 %v642, %v738
  %v750 = vadd.f32 %v647, %v738
  %v751 = vadd.f32 %v650, %v738
  %v752 = vadd.f32 %v655, %v738
  %v753 = vadd.f32 %v658, %v738
  %v754 = vadd.f32 %v663, %v738
  %v755 = vadd.f32 %v666, %v738
  %v756 = vadd.f32 %v671, %v738
  %v757 = vadd.f32 %v674, %v738
  %v758 = vadd.f32 %v679, %v738
  %v759 = vadd.f32 %v682, %v738
  %v760 = vadd.f32 %v687, %v738
  %v761 = vadd.f32 %v690, %v738
  %v762 = vadd.f32 %v695, %v738
  %v763 = vadd.f32 %v698, %v738
  %v764 = vadd.f32 %v703, %v738
  %v765 = vadd.f32 %v706, %v738
  %v766 = vadd.f32 %v711, %v738
  %v767 = vadd.f32 %v714, %v738
  %v768 = vadd.f32 %v719, %v738
  %v769 = vadd.f32 %v722, %v738
  %v770 = vadd.f32 %v727, %v738
  %v771 = vadd.f32 %v730, %v738
  %v772 = vmul.f32 %v740, %v740
  %v773 = vmul.f32 %v741, %v741
  %v774 = vmul.f32 %v742, %v742
  %v775 = vmul.f32 %v743, %v743
  %v776 = vmul.f32 %v744, %v744
  %v777 = vmul.f32 %v745, %v745
  %v778 = vmul.f32 %v746, %v746
  %v779 = vmul.f32 %v747, %v747
  %v780 = vmul.f32 %v748, %v748
  %v781 = vmul.f32 %v749, %v749
  %v782 = vmul.f32 %v750, %v750
  %v783 = vmul.f32 %v751, %v751
  %v784 = vmul.f32 %v752, %v752
  %v785 = vmul.f32 %v753, %v753
  %v786 = vmul.f32 %v754, %v754
  %v787 = vmul.f32 %v755, %v755
  %v788 = vmul.f32 %v756, %v756
  %v789 = vmul.f32 %v757, %v757
  %v790 = vmul.f32 %v758, %v758
  %v791 = vmul.f32 %v759, %v759
  %v792 = vmul.f32 %v760, %v760
  %v793 = vmul.f32 %v761, %v761
  %v794 = vmul.f32 %v762, %v762
  %v795 = vmul.f32 %v763, %v763
  %v796 = vmul.f32 %v764, %v764
  %v797 = vmul.f32 %v765, %v765
  %v798 = vmul.f32 %v766, %v766
  %v799 = vmul.f32 %v767, %v767
  %v800 = vmul.f32 %v768, %v768
  %v801 = vmul.f32 %v769, %v769
  %v802 = vmul.f32 %v770, %v770
  %v803 = vmul.f32 %v771, %v771
  %v804 = vmul.f32 %v740, %v772
  %v805 = vmul.f32 %v741, %v773
  %v806 = vmul.f32 %v742, %v774
  %v807 = vmul.f32 %v743, %v775
  %v808 = vmul.f32 %v744, %v776
  %v809 = vmul.f32 %v745, %v777
  %v810 = vmul.f32 %v746, %v778
  %v811 = vmul.f32 %v747, %v779
  %v812 = vmul.f32 %v748, %v780
  %v813 = vmul.f32 %v749, %v781
  %v814 = vmul.f32 %v750, %v782
  %v815 = vmul.f32 %v751, %v783
  %v816 = vmul.f32 %v752, %v784
  %v817 = vmul.f32 %v753, %v785
  %v818 = vmul.f32 %v754, %v786
  %v819 = vmul.f32 %v755, %v787
  %v820 = vmul.f32 %v756, %v788
  %v821 = vmul.f32 %v757, %v789
  %v822 = vmul.f32 %v758, %v790
  %v823 = vmul.f32 %v759, %v791
  %v824 = vmul.f32 %v760, %v792
  %v825 = vmul.f32 %v761, %v793
  %v826 = vmul.f32 %v762, %v794
  %v827 = vmul.f32 %v763, %v795
  %v828 = vmul.f32 %v764, %v796
  %v829 = vmul.f32 %v765, %v797
  %v830 = vmul.f32 %v766, %v798
  %v831 = vmul.f32 %v767, %v799
  %v832 = vmul.f32 %v768, %v800
  %v833 = vmul.f32 %v769, %v801
  %v834 = vmul.f32 %v770, %v802
  %v835 = vmul.f32 %v771, %v803
  %v836 = vmul.f32 %v804, 0.044715
  %v837 = vmul.f32 %v805, 0.044715
  %v838 = vmul.f32 %v806, 0.044715
  %v839 = vmul.f32 %v807, 0.044715
  %v840 = vmul.f32 %v808, 0.044715
  %v841 = vmul.f32 %v809, 0.044715
  %v842 = vmul.f32 %v810, 0.044715
  %v843 = vmul.f32 %v811, 0.044715
  %v844 = vmul.f32 %v812, 0.044715
  %v845 = vmul.f32 %v813, 0.044715
  %v846 = vmul.f32 %v814, 0.044715
  %v847 = vmul.f32 %v815, 0.044715
  %v848 = vmul.f32 %v816, 0.044715
  %v849 = vmul.f32 %v817, 0.044715
  %v850 = vmul.f32 %v818, 0.044715
  %v851 = vmul.f32 %v819, 0.044715
  %v852 = vmul.f32 %v820, 0.044715
  %v853 = vmul.f32 %v821, 0.044715
  %v854 = vmul.f32 %v822, 0.044715
  %v855 = vmul.f32 %v823, 0.044715
  %v856 = vmul.f32 %v824, 0.044715
  %v857 = vmul.f32 %v825, 0.044715
  %v858 = vmul.f32 %v826, 0.044715
  %v859 = vmul.f32 %v827, 0.044715
  %v860 = vmul.f32 %v828, 0.044715
  %v861 = vmul.f32 %v829, 0.044715
  %v862 = vmul.f32 %v830, 0.044715
  %v863 = vmul.f32 %v831, 0.044715
  %v864 = vmul.f32 %v832, 0.044715
  %v865 = vmul.f32 %v833, 0.044715
  %v866 = vmul.f32 %v834, 0.044715
  %v867 = vmul.f32 %v835, 0.044715
  %v868 = vadd.f32 %v740, %v836
  %v869 = vadd.f32 %v741, %v837
  %v870 = vadd.f32 %v742, %v838
  %v871 = vadd.f32 %v743, %v839
  %v872 = vadd.f32 %v744, %v840
  %v873 = vadd.f32 %v745, %v841
  %v874 = vadd.f32 %v746, %v842
  %v875 = vadd.f32 %v747, %v843
  %v876 = vadd.f32 %v748, %v844
  %v877 = vadd.f32 %v749, %v845
  %v878 = vadd.f32 %v750, %v846
  %v879 = vadd.f32 %v751, %v847
  %v880 = vadd.f32 %v752, %v848
  %v881 = vadd.f32 %v753, %v849
  %v882 = vadd.f32 %v754, %v850
  %v883 = vadd.f32 %v755, %v851
  %v884 = vadd.f32 %v756, %v852
  %v885 = vadd.f32 %v757, %v853
  %v886 = vadd.f32 %v758, %v854
  %v887 = vadd.f32 %v759, %v855
  %v888 = vadd.f32 %v760, %v856
  %v889 = vadd.f32 %v761, %v857
  %v890 = vadd.f32 %v762, %v858
  %v891 = vadd.f32 %v763, %v859
  %v892 = vadd.f32 %v764, %v860
  %v893 = vadd.f32 %v765, %v861
  %v894 = vadd.f32 %v766, %v862
  %v895 = vadd.f32 %v767, %v863
  %v896 = vadd.f32 %v768, %v864
  %v897 = vadd.f32 %v769, %v865
  %v898 = vadd.f32 %v770, %v866
  %v899 = vadd.f32 %v771, %v867
  %v900 = vmul.f32 %v868, 0.7978846
  %v901 = vmul.f32 %v869, 0.7978846
  %v902 = vmul.f32 %v870, 0.7978846
  %v903 = vmul.f32 %v871, 0.7978846
  %v904 = vmul.f32 %v872, 0.7978846
  %v905 = vmul.f32 %v873, 0.7978846
  %v906 = vmul.f32 %v874, 0.7978846
  %v907 = vmul.f32 %v875, 0.7978846
  %v908 = vmul.f32 %v876, 0.7978846
  %v909 = vmul.f32 %v877, 0.7978846
  %v910 = vmul.f32 %v878, 0.7978846
  %v911 = vmul.f32 %v879, 0.7978846
  %v912 = vmul.f32 %v880, 0.7978846
  %v913 = vmul.f32 %v881, 0.7978846
  %v914 = vmul.f32 %v882, 0.7978846
  %v915 = vmul.f32 %v883, 0.7978846
  %v916 = vmul.f32 %v884, 0.7978846
  %v917 = vmul.f32 %v885, 0.7978846
  %v918 = vmul.f32 %v886, 0.7978846
  %v919 = vmul.f32 %v887, 0.7978846
  %v920 = vmul.f32 %v888, 0.7978846
  %v921 = vmul.f32 %v889, 0.7978846
  %v922 = vmul.f32 %v890, 0.7978846
  %v923 = vmul.f32 %v891, 0.7978846
  %v924 = vmul.f32 %v892, 0.7978846
  %v925 = vmul.f32 %v893, 0.7978846
  %v926 = vmul.f32 %v894, 0.7978846
  %v927 = vmul.f32 %v895, 0.7978846
  %v928 = vmul.f32 %v896, 0.7978846
  %v929 = vmul.f32 %v897, 0.7978846
  %v930 = vmul.f32 %v898, 0.7978846
  %v931 = vmul.f32 %v899, 0.7978846
  %v932 = vtanh.pop %v900
  %v933 = vtanh.pop %v901
  %v934 = vtanh.pop %v902
  %v935 = vtanh.pop %v903
  %v936 = vtanh.pop %v904
  %v937 = vtanh.pop %v905
  %v938 = vtanh.pop %v906
  %v939 = vtanh.pop %v907
  %v940 = vtanh.pop %v908
  %v941 = vtanh.pop %v909
  %v942 = vtanh.pop %v910
  %v943 = vtanh.pop %v911
  %v944 = vtanh.pop %v912
  %v945 = vtanh.pop %v913
  %v946 = vtanh.pop %v914
  %v947 = vtanh.pop %v915
  %v948 = vtanh.pop %v916
  %v949 = vtanh.pop %v917
  %v950 = vtanh.pop %v918
  %v951 = vtanh.pop %v919
  %v952 = vtanh.pop %v920
  %v953 = vtanh.pop %v921
  %v954 = vtanh.pop %v922
  %v955 = vtanh.pop %v923
  %v956 = vtanh.pop %v924
  %v957 = vtanh.pop %v925
  %v958 = vtanh.pop %v926
  %v959 = vtanh.pop %v927
  %v960 = vtanh.pop %v928
  %v961 = vtanh.pop %v929
  %v962 = vtanh.pop %v930
  %v963 = vtanh.pop %v931
  %v964 = vadd.f32 %v932, 1.0
  %v965 = vadd.f32 %v933, 1.0
  %v966 = vadd.f32 %v934, 1.0
  %v967 = vadd.f32 %v935, 1.0
  %v968 = vadd.f32 %v936, 1.0
  %v969 = vadd.f32 %v937, 1.0
  %v970 = vadd.f32 %v938, 1.0
  %v971 = vadd.f32 %v939, 1.0
  %v972 = vadd.f32 %v940, 1.0
  %v973 = vadd.f32 %v941, 1.0
  %v974 = vadd.f32 %v942, 1.0
  %v975 = vadd.f32 %v943, 1.0
  %v976 = vadd.f32 %v944, 1.0
  %v977 = vadd.f32 %v945, 1.0
  %v978 = vadd.f32 %v946, 1.0
  %v979 = vadd.f32 %v947, 1.0
  %v980 = vadd.f32 %v948, 1.0
  %v981 = vadd.f32 %v949, 1.0
  %v982 = vadd.f32 %v950, 1.0
  %v983 = vadd.f32 %v951, 1.0
  %v984 = vadd.f32 %v952, 1.0
  %v985 = vadd.f32 %v953, 1.0
  %v986 = vadd.f32 %v954, 1.0
  %v987 = vadd.f32 %v955, 1.0
  %v988 = vadd.f32 %v956, 1.0
  %v989 = vadd.f32 %v957, 1.0
  %v990 = vadd.f32 %v958, 1.0
  %v991 = vadd.f32 %v959, 1.0
  %v992 = vadd.f32 %v960, 1.0
  %v993 = vadd.f32 %v961, 1.0
  %v994 = vadd.f32 %v962, 1.0
  %v995 = vadd.f32 %v963, 1.0
  %v996 = vmul.f32 %v964, 0.5
  %v997 = vmul.f32 %v965, 0.5
  %v998 = vmul.f32 %v966, 0.5
  %v999 = vmul.f32 %v967, 0.5
  %v1000 = vmul.f32 %v968, 0.5
  %v1001 = vmul.f32 %v969, 0.5
  %v1002 = vmul.f32 %v970, 0.5
  %v1003 = vmul.f32 %v971, 0.5
  %v1004 = vmul.f32 %v972, 0.5
  %v1005 = vmul.f32 %v973, 0.5
  %v1006 = vmul.f32 %v974, 0.5
  %v1007 = vmul.f32 %v975, 0.5
  %v1008 = vmul.f32 %v976, 0.5
  %v1009 = vmul.f32 %v977, 0.5
  %v1010 = vmul.f32 %v978, 0.5
  %v1011 = vmul.f32 %v979, 0.5
  %v1012 = vmul.f32 %v980, 0.5
  %v1013 = vmul.f32 %v981, 0.5
  %v1014 = vmul.f32 %v982, 0.5
  %v1015 = vmul.f32 %v983, 0.5
  %v1016 = vmul.f32 %v984, 0.5
  %v1017 = vmul.f32 %v985, 0.5
  %v1018 = vmul.f32 %v986, 0.5
  %v1019 = vmul.f32 %v987, 0.5
  %v1020 = vmul.f32 %v988, 0.5
  %v1021 = vmul.f32 %v989, 0.5
  %v1022 = vmul.f32 %v990, 0.5
  %v1023 = vmul.f32 %v991, 0.5
  %v1024 = vmul.f32 %v992, 0.5
  %v1025 = vmul.f32 %v993, 0.5
  %v1026 = vmul.f32 %v994, 0.5
  %v1027 = vmul.f32 %v995, 0.5
  %v1028 = vmul.f32 %v740, %v996
  %v1029 = vmul.f32 %v741, %v997
  %v1030 = vmul.f32 %v742, %v998
  %v1031 = vmul.f32 %v743, %v999
  %v1032 = vmul.f32 %v744, %v1000
  %v1033 = vmul.f32 %v745, %v1001
  %v1034 = vmul.f32 %v746, %v1002
  %v1035 = vmul.f32 %v747, %v1003
  %v1036 = vmul.f32 %v748, %v1004
  %v1037 = vmul.f32 %v749, %v1005
  %v1038 = vmul.f32 %v750, %v1006
  %v1039 = vmul.f32 %v751, %v1007
  %v1040 = vmul.f32 %v752, %v1008
  %v1041 = vmul.f32 %v753, %v1009
  %v1042 = vmul.f32 %v754, %v1010
  %v1043 = vmul.f32 %v755, %v1011
  %v1044 = vmul.f32 %v756, %v1012
  %v1045 = vmul.f32 %v757, %v1013
  %v1046 = vmul.f32 %v758, %v1014
  %v1047 = vmul.f32 %v759, %v1015
  %v1048 = vmul.f32 %v760, %v1016
  %v1049 = vmul.f32 %v761, %v1017
  %v1050 = vmul.f32 %v762, %v1018
  %v1051 = vmul.f32 %v763, %v1019
  %v1052 = vmul.f32 %v764, %v1020
  %v1053 = vmul.f32 %v765, %v1021
  %v1054 = vmul.f32 %v766, %v1022
  %v1055 = vmul.f32 %v767, %v1023
  %v1056 = vmul.f32 %v768, %v1024
  %v1057 = vmul.f32 %v769, %v1025
  %v1058 = vmul.f32 %v770, %v1026
  %v1059 = vmul.f32 %v771, %v1027
  %v1060 = vpack.c.bf16 %v1029, %v1028
  %v1061 = vpack.c.bf16 %v1031, %v1030
  %v1062 = vpack.c.bf16 %v1033, %v1032
  %v1063 = vpack.c.bf16 %v1035, %v1034
  %v1064 = vpack.c.bf16 %v1037, %v1036
  %v1065 = vpack.c.bf16 %v1039, %v1038
  %v1066 = vpack.c.bf16 %v1041, %v1040
  %v1067 = vpack.c.bf16 %v1043, %v1042
  %v1068 = vpack.c.bf16 %v1045, %v1044
  %v1069 = vpack.c.bf16 %v1047, %v1046
  %v1070 = vpack.c.bf16 %v1049, %v1048
  %v1071 = vpack.c.bf16 %v1051, %v1050
  %v1072 = vpack.c.bf16 %v1053, %v1052
  %v1073 = vpack.c.bf16 %v1055, %v1054
  %v1074 = vpack.c.bf16 %v1057, %v1056
  %v1075 = vpack.c.bf16 %v1059, %v1058
  %v1076 = vld [vmem:[%s5] sm:$0xf]
  %v1077 = vld [vmem:[%s5 + $0x4] sm:$0xf]
  %v1078 = vld [vmem:[%s5 + $0x8] sm:$0xf]
  %v1079 = vld [vmem:[%s5 + $0xc] sm:$0xf]
  %v1080 = vld [vmem:[%s5 + $0x10] sm:$0xf]
  %v1081 = vld [vmem:[%s5 + $0x14] sm:$0xf]
  %v1082 = vld [vmem:[%s5 + $0x18] sm:$0xf]
  %v1083 = vld [vmem:[%s5 + $0x1c] sm:$0xf]
  %v1084 = vld [vmem:[%s5 + $0x20] sm:$0xf]
  %v1085 = vld [vmem:[%s5 + $0x24] sm:$0xf]
  %v1086 = vld [vmem:[%s5 + $0x28] sm:$0xf]
  %v1087 = vld [vmem:[%s5 + $0x2c] sm:$0xf]
  %v1088 = vld [vmem:[%s5 + $0x30] sm:$0xf]
  %v1089 = vld [vmem:[%s5 + $0x34] sm:$0xf]
  %v1090 = vld [vmem:[%s5 + $0x38] sm:$0xf]
  %v1091 = vld [vmem:[%s5 + $0x3c] sm:$0xf]
  %v1092 = vld [vmem:[%s6] sm:$0x1]
  %v1094 = vlaneseq
  %v1095 = vshrl.u32 %v1094, 7
  %v1096 = vsub.s32 0, %v1095
  %v1097 = vrot.slane %v1092, %v1096
  %v1115 = vunpack.c.l.b16 %v1076
  %v1116 = vunpack.c.l.b16 %v1077
  %v1117 = vunpack.c.l.b16 %v1078
  %v1118 = vunpack.c.l.b16 %v1079
  %v1119 = vunpack.c.l.b16 %v1080
  %v1120 = vunpack.c.l.b16 %v1081
  %v1121 = vunpack.c.l.b16 %v1082
  %v1122 = vunpack.c.l.b16 %v1083
  %v1123 = vunpack.c.l.b16 %v1084
  %v1124 = vunpack.c.l.b16 %v1085
  %v1125 = vunpack.c.l.b16 %v1086
  %v1126 = vunpack.c.l.b16 %v1087
  %v1127 = vunpack.c.l.b16 %v1088
  %v1128 = vunpack.c.l.b16 %v1089
  %v1129 = vunpack.c.l.b16 %v1090
  %v1130 = vunpack.c.l.b16 %v1091
  %v1131 = vpack.c.b16 %v1116, %v1115
  %v1132 = vpack.c.b16 %v1118, %v1117
  %v1133 = vpack.c.b16 %v1120, %v1119
  %v1134 = vpack.c.b16 %v1122, %v1121
  %v1135 = vpack.c.b16 %v1124, %v1123
  %v1136 = vpack.c.b16 %v1126, %v1125
  %v1137 = vpack.c.b16 %v1128, %v1127
  %v1138 = vpack.c.b16 %v1130, %v1129
  %1147 = vmatprep.subr.bf16.mxu0 0
  %1148 = vmatpush1.bf16.msra.mxu0 %v1131
  %1149 = vmatprep.subr.bf16.mxu0 0
  %1150 = vmatpush1.bf16.msra.mxu0 %v1132
  %1151 = vmatprep.subr.bf16.mxu0 0
  %1152 = vmatpush1.bf16.msra.mxu0 %v1133
  %1153 = vmatprep.subr.bf16.mxu0 0
  %1154 = vmatpush1.bf16.msra.mxu0 %v1134
  %1155 = vmatprep.subr.bf16.mxu0 0
  %1156 = vmatpush1.bf16.msra.mxu0 %v1135
  %1157 = vmatprep.subr.bf16.mxu0 0
  %1158 = vmatpush1.bf16.msra.mxu0 %v1136
  %1159 = vmatprep.subr.bf16.mxu0 0
  %1160 = vmatpush1.bf16.msra.mxu0 %v1137
  %1161 = vmatprep.subr.bf16.mxu0 0
  %1162 = vmatpush1.bf16.msra.mxu0 %v1138
  %1163 = vmatprep.subr.bf16.mxu0 0
  %1164 = vmatpush1.bf16.msra.mxu0 0
  %1165 = vmatprep.subr.bf16.mxu0 0
  %1166 = vmatpush1.bf16.msra.mxu0 0
  %1167 = vmatprep.subr.bf16.mxu0 0
  %1168 = vmatpush1.bf16.msra.mxu0 0
  %1169 = vmatprep.subr.bf16.mxu0 0
  %1170 = vmatpush1.bf16.msra.mxu0 0
  %1171 = vmatprep.subr.bf16.mxu0 0
  %1172 = vmatpush1.bf16.msra.mxu0 0
  %1173 = vmatprep.subr.bf16.mxu0 0
  %1174 = vmatpush1.bf16.msra.mxu0 0
  %1175 = vmatprep.subr.bf16.mxu0 0
  %1176 = vmatpush1.bf16.msra.mxu0 0
  %1177 = vmatprep.subr.bf16.mxu0 0
  %1178 = vmatpush1.bf16.msra.mxu0 0
  %1179 = vmatprep.mubr.bf16.mxu0 0
  %1180 = vmatmul.mubr.bf16.gmra.mrb[0].mxu0 %v1060
  %v1181 = vpop.f32.mrb[0].mxu0
  %v1182 = vadd.f32 %v1097, %v1181
  %v1183 = vpop.f32.mrb[0].mxu0
  %v1184 = vpop.f32.mrb[0].mxu0
  %v1185 = vadd.f32 %v1097, %v1184
  %v1186 = vpop.f32.mrb[0].mxu0
  %1187 = vmatprep.mubr.bf16.mxu0 0
  %1188 = vmatmul.mubr.bf16.gmra.mrb[0].mxu0 %v1061
  %v1189 = vpop.f32.mrb[0].mxu0
  %v1190 = vadd.f32 %v1097, %v1189
  %v1191 = vpop.f32.mrb[0].mxu0
  %v1192 = vpop.f32.mrb[0].mxu0
  %v1193 = vadd.f32 %v1097, %v1192
  %v1194 = vpop.f32.mrb[0].mxu0
  %1195 = vmatprep.mubr.bf16.mxu0 0
  %1196 = vmatmul.mubr.bf16.gmra.mrb[0].mxu0 %v1062
  %v1197 = vpop.f32.mrb[0].mxu0
  %v1198 = vadd.f32 %v1097, %v1197
  %v1199 = vpop.f32.mrb[0].mxu0
  %v1200 = vpop.f32.mrb[0].mxu0
  %v1201 = vadd.f32 %v1097, %v1200
  %v1202 = vpop.f32.mrb[0].mxu0
  %1203 = vmatprep.mubr.bf16.mxu0 0
  %1204 = vmatmul.mubr.bf16.gmra.mrb[0].mxu0 %v1063
  %v1205 = vpop.f32.mrb[0].mxu0
  %v1206 = vadd.f32 %v1097, %v1205
  %v1207 = vpop.f32.mrb[0].mxu0
  %v1208 = vpop.f32.mrb[0].mxu0
  %v1209 = vadd.f32 %v1097, %v1208
  %v1210 = vpop.f32.mrb[0].mxu0
  %1211 = vmatprep.mubr.bf16.mxu0 0
  %1212 = vmatmul.mubr.bf16.gmra.mrb[0].mxu0 %v1064
  %v1213 = vpop.f32.mrb[0].mxu0
  %v1214 = vadd.f32 %v1097, %v1213
  %v1215 = vpop.f32.mrb[0].mxu0
  %v1216 = vpop.f32.mrb[0].mxu0
  %v1217 = vadd.f32 %v1097, %v1216
  %v1218 = vpop.f32.mrb[0].mxu0
  %1219 = vmatprep.mubr.bf16.mxu0 0
  %1220 = vmatmul.mubr.bf16.gmra.mrb[0].mxu0 %v1065
  %v1221 = vpop.f32.mrb[0].mxu0
  %v1222 = vadd.f32 %v1097, %v1221
  %v1223 = vpop.f32.mrb[0].mxu0
  %v1224 = vpop.f32.mrb[0].mxu0
  %v1225 = vadd.f32 %v1097, %v1224
  %v1226 = vpop.f32.mrb[0].mxu0
  %1227 = vmatprep.mubr.bf16.mxu0 0
  %1228 = vmatmul.mubr.bf16.gmra.mrb[0].mxu0 %v1066
  %v1229 = vpop.f32.mrb[0].mxu0
  %v1230 = vadd.f32 %v1097, %v1229
  %v1231 = vpop.f32.mrb[0].mxu0
  %v1232 = vpop.f32.mrb[0].mxu0
  %v1233 = vadd.f32 %v1097, %v1232
  %v1234 = vpop.f32.mrb[0].mxu0
  %1235 = vmatprep.mubr.bf16.mxu0 0
  %1236 = vmatmul.mubr.bf16.gmra.mrb[0].mxu0 %v1067
  %v1237 = vpop.f32.mrb[0].mxu0
  %v1238 = vadd.f32 %v1097, %v1237
  %v1239 = vpop.f32.mrb[0].mxu0
  %v1240 = vpop.f32.mrb[0].mxu0
  %v1241 = vadd.f32 %v1097, %v1240
  %v1242 = vpop.f32.mrb[0].mxu0
  %1243 = vmatprep.mubr.bf16.mxu0 0
  %1244 = vmatmul.mubr.bf16.gmra.mrb[0].mxu0 %v1068
  %v1245 = vpop.f32.mrb[0].mxu0
  %v1246 = vadd.f32 %v1097, %v1245
  %v1247 = vpop.f32.mrb[0].mxu0
  %v1248 = vpop.f32.mrb[0].mxu0
  %v1249 = vadd.f32 %v1097, %v1248
  %v1250 = vpop.f32.mrb[0].mxu0
  %1251 = vmatprep.mubr.bf16.mxu0 0
  %1252 = vmatmul.mubr.bf16.gmra.mrb[0].mxu0 %v1069
  %v1253 = vpop.f32.mrb[0].mxu0
  %v1254 = vadd.f32 %v1097, %v1253
  %v1255 = vpop.f32.mrb[0].mxu0
  %v1256 = vpop.f32.mrb[0].mxu0
  %v1257 = vadd.f32 %v1097, %v1256
  %v1258 = vpop.f32.mrb[0].mxu0
  %1259 = vmatprep.mubr.bf16.mxu0 0
  %1260 = vmatmul.mubr.bf16.gmra.mrb[0].mxu0 %v1070
  %v1261 = vpop.f32.mrb[0].mxu0
  %v1262 = vadd.f32 %v1097, %v1261
  %v1263 = vpop.f32.mrb[0].mxu0
  %v1264 = vpop.f32.mrb[0].mxu0
  %v1265 = vadd.f32 %v1097, %v1264
  %v1266 = vpop.f32.mrb[0].mxu0
  %1267 = vmatprep.mubr.bf16.mxu0 0
  %1268 = vmatmul.mubr.bf16.gmra.mrb[0].mxu0 %v1071
  %v1269 = vpop.f32.mrb[0].mxu0
  %v1270 = vadd.f32 %v1097, %v1269
  %v1271 = vpop.f32.mrb[0].mxu0
  %v1272 = vpop.f32.mrb[0].mxu0
  %v1273 = vadd.f32 %v1097, %v1272
  %v1274 = vpop.f32.mrb[0].mxu0
  %1275 = vmatprep.mubr.bf16.mxu0 0
  %1276 = vmatmul.mubr.bf16.gmra.mrb[0].mxu0 %v1072
  %v1277 = vpop.f32.mrb[0].mxu0
  %v1278 = vadd.f32 %v1097, %v1277
  %v1279 = vpop.f32.mrb[0].mxu0
  %v1280 = vpop.f32.mrb[0].mxu0
  %v1281 = vadd.f32 %v1097, %v1280
  %v1282 = vpop.f32.mrb[0].mxu0
  %1283 = vmatprep.mubr.bf16.mxu0 0
  %1284 = vmatmul.mubr.bf16.gmra.mrb[0].mxu0 %v1073
  %v1285 = vpop.f32.mrb[0].mxu0
  %v1286 = vadd.f32 %v1097, %v1285
  %v1287 = vpop.f32.mrb[0].mxu0
  %v1288 = vpop.f32.mrb[0].mxu0
  %v1289 = vadd.f32 %v1097, %v1288
  %v1290 = vpop.f32.mrb[0].mxu0
  %1291 = vmatprep.mubr.bf16.mxu0 0
  %1292 = vmatmul.mubr.bf16.gmra.mrb[0].mxu0 %v1074
  %v1293 = vpop.f32.mrb[0].mxu0
  %v1294 = vadd.f32 %v1097, %v1293
  %v1295 = vpop.f32.mrb[0].mxu0
  %v1296 = vpop.f32.mrb[0].mxu0
  %v1297 = vadd.f32 %v1097, %v1296
  %v1298 = vpop.f32.mrb[0].mxu0
  %1299 = vmatprep.mubr.bf16.mxu0 0
  %1300 = vmatmul.mubr.bf16.gmra.mrb[0].mxu0 %v1075
  %v1301 = vpop.f32.mrb[0].mxu0
  %v1302 = vadd.f32 %v1097, %v1301
  %v1303 = vpop.f32.mrb[0].mxu0
  %v1304 = vpop.f32.mrb[0].mxu0
  %v1305 = vadd.f32 %v1097, %v1304
  %v1306 = vpop.f32.mrb[0].mxu0
  %1307 = vdwg.mxu0
  %v1308 = vpack.c.bf16 %v1185, %v1182
  %v1309 = vpack.c.bf16 %v1193, %v1190
  %v1310 = vpack.c.bf16 %v1201, %v1198
  %v1311 = vpack.c.bf16 %v1209, %v1206
  %v1312 = vpack.c.bf16 %v1217, %v1214
  %v1313 = vpack.c.bf16 %v1225, %v1222
  %v1314 = vpack.c.bf16 %v1233, %v1230
  %v1315 = vpack.c.bf16 %v1241, %v1238
  %v1316 = vpack.c.bf16 %v1249, %v1246
  %v1317 = vpack.c.bf16 %v1257, %v1254
  %v1318 = vpack.c.bf16 %v1265, %v1262
  %v1319 = vpack.c.bf16 %v1273, %v1270
  %v1320 = vpack.c.bf16 %v1281, %v1278
  %v1321 = vpack.c.bf16 %v1289, %v1286
  %v1322 = vpack.c.bf16 %v1297, %v1294
  %v1323 = vpack.c.bf16 %v1305, %v1302
  %v1340 = vunpack.c.l.b16 %v1308
  %v1341 = vunpack.c.h.b16 %v1308
  %v1342 = vunpack.c.l.b16 %v1309
  %v1343 = vunpack.c.h.b16 %v1309
  %v1344 = vunpack.c.l.b16 %v1310
  %v1345 = vunpack.c.h.b16 %v1310
  %v1346 = vunpack.c.l.b16 %v1311
  %v1347 = vunpack.c.h.b16 %v1311
  %v1348 = vunpack.c.l.b16 %v1312
  %v1349 = vunpack.c.h.b16 %v1312
  %v1350 = vunpack.c.l.b16 %v1313
  %v1351 = vunpack.c.h.b16 %v1313
  %v1352 = vunpack.c.l.b16 %v1314
  %v1353 = vunpack.c.h.b16 %v1314
  %v1354 = vunpack.c.l.b16 %v1315
  %v1355 = vunpack.c.h.b16 %v1315
  %v1356 = vunpack.c.l.b16 %v1316
  %v1357 = vunpack.c.h.b16 %v1316
  %v1358 = vunpack.c.l.b16 %v1317
  %v1359 = vunpack.c.h.b16 %v1317
  %v1360 = vunpack.c.l.b16 %v1318
  %v1361 = vunpack.c.h.b16 %v1318
  %v1362 = vunpack.c.l.b16 %v1319
  %v1363 = vunpack.c.h.b16 %v1319
  %v1364 = vunpack.c.l.b16 %v1320
  %v1365 = vunpack.c.h.b16 %v1320
  %v1366 = vunpack.c.l.b16 %v1321
  %v1367 = vunpack.c.h.b16 %v1321
  %v1368 = vunpack.c.l.b16 %v1322
  %v1369 = vunpack.c.h.b16 %v1322
  %v1370 = vunpack.c.l.b16 %v1323
  %v1371 = vunpack.c.h.b16 %v1323
  %v1372 = vpack.c.b16 %v1340, %v1340
  %v1373 = vpack.c.b16 %v1341, %v1341
  %v1374 = vpack.c.b16 %v1342, %v1342
  %v1375 = vpack.c.b16 %v1343, %v1343
  %v1376 = vpack.c.b16 %v1344, %v1344
  %v1377 = vpack.c.b16 %v1345, %v1345
  %v1378 = vpack.c.b16 %v1346, %v1346
  %v1379 = vpack.c.b16 %v1347, %v1347
  %v1380 = vpack.c.b16 %v1348, %v1348
  %v1381 = vpack.c.b16 %v1349, %v1349
  %v1382 = vpack.c.b16 %v1350, %v1350
  %v1383 = vpack.c.b16 %v1351, %v1351
  %v1384 = vpack.c.b16 %v1352, %v1352
  %v1385 = vpack.c.b16 %v1353, %v1353
  %v1386 = vpack.c.b16 %v1354, %v1354
  %v1387 = vpack.c.b16 %v1355, %v1355
  %v1388 = vpack.c.b16 %v1356, %v1356
  %v1389 = vpack.c.b16 %v1357, %v1357
  %v1390 = vpack.c.b16 %v1358, %v1358
  %v1391 = vpack.c.b16 %v1359, %v1359
  %v1392 = vpack.c.b16 %v1360, %v1360
  %v1393 = vpack.c.b16 %v1361, %v1361
  %v1394 = vpack.c.b16 %v1362, %v1362
  %v1395 = vpack.c.b16 %v1363, %v1363
  %v1396 = vpack.c.b16 %v1364, %v1364
  %v1397 = vpack.c.b16 %v1365, %v1365
  %v1398 = vpack.c.b16 %v1366, %v1366
  %v1399 = vpack.c.b16 %v1367, %v1367
  %v1400 = vpack.c.b16 %v1368, %v1368
  %v1401 = vpack.c.b16 %v1369, %v1369
  %v1402 = vpack.c.b16 %v1370, %v1370
  %v1403 = vpack.c.b16 %v1371, %v1371
  %1436 = vst [vmem:[%s7] sm:$0xf] %v1372
  %1437 = vst [vmem:[%s7 + $0x4] sm:$0xf] %v1373
  %1438 = vst [vmem:[%s7 + $0x8] sm:$0xf] %v1374
  %1439 = vst [vmem:[%s7 + $0xc] sm:$0xf] %v1375
  %1440 = vst [vmem:[%s7 + $0x10] sm:$0xf] %v1376
  %1441 = vst [vmem:[%s7 + $0x14] sm:$0xf] %v1377
  %1442 = vst [vmem:[%s7 + $0x18] sm:$0xf] %v1378
  %1443 = vst [vmem:[%s7 + $0x1c] sm:$0xf] %v1379
  %1444 = vst [vmem:[%s7 + $0x20] sm:$0xf] %v1380
  %1445 = vst [vmem:[%s7 + $0x24] sm:$0xf] %v1381
  %1446 = vst [vmem:[%s7 + $0x28] sm:$0xf] %v1382
  %1447 = vst [vmem:[%s7 + $0x2c] sm:$0xf] %v1383
  %1448 = vst [vmem:[%s7 + $0x30] sm:$0xf] %v1384
  %1449 = vst [vmem:[%s7 + $0x34] sm:$0xf] %v1385
  %1450 = vst [vmem:[%s7 + $0x38] sm:$0xf] %v1386
  %1451 = vst [vmem:[%s7 + $0x3c] sm:$0xf] %v1387
  %1452 = vst [vmem:[%s7 + $0x40] sm:$0xf] %v1388
  %1453 = vst [vmem:[%s7 + $0x44] sm:$0xf] %v1389
  %1454 = vst [vmem:[%s7 + $0x48] sm:$0xf] %v1390
  %1455 = vst [vmem:[%s7 + $0x4c] sm:$0xf] %v1391
  %1456 = vst [vmem:[%s7 + $0x50] sm:$0xf] %v1392
  %1457 = vst [vmem:[%s7 + $0x54] sm:$0xf] %v1393
  %1458 = vst [vmem:[%s7 + $0x58] sm:$0xf] %v1394
  %1459 = vst [vmem:[%s7 + $0x5c] sm:$0xf] %v1395
  %1460 = vst [vmem:[%s7 + $0x60] sm:$0xf] %v1396
  %1461 = vst [vmem:[%s7 + $0x64] sm:$0xf] %v1397
  %1462 = vst [vmem:[%s7 + $0x68] sm:$0xf] %v1398
  %1463 = vst [vmem:[%s7 + $0x6c] sm:$0xf] %v1399
  %1464 = vst [vmem:[%s7 + $0x70] sm:$0xf] %v1400
  %1465 = vst [vmem:[%s7 + $0x74] sm:$0xf] %v1401
  %1466 = vst [vmem:[%s7 + $0x78] sm:$0xf] %v1402
  %1467 = vst [vmem:[%s7 + $0x7c] sm:$0xf] %v1403
  // Predicated region
  $region30: #{a_call__.10} parent=0 // pred_check
    _
  $region31: #{a_call__.10} parent=0 // pred_check_branch
    %1469 = sbr.rel (0) target = $region33
  $region32: #{a_call__.10} parent=0 // pred_region
    _
  $region33: #{a_call__.10} parent=0 // pred_fallthru
    _
  // Predicated region
  $region34: #{a_call__.10} parent=0 // pred_check
    _
  $region35: #{a_call__.10} parent=0 // pred_check_branch
    %1471 = sbr.rel (0) target = $region37
  $region36: #{a_call__.10} parent=0 // pred_region
    _
  $region37: #{a_call__.10} parent=0 // pred_fallthru
    _

// kernel: a_call__.11
$region0: #{a_call__.11}
  #allocation0 [shape = 'u32[]', space=smem, size = 0x4, offset = 0x4, fixed_abs, tag = 'smem constant byte address 0x4 - core index']
  #allocation1 [shape = 'u32[144,128]{1,0:T(1,128)}', space=vmem, size = 0x12000, scoped, tag = 'internal scratch']
  %s0 = inlined_call_operand.vmem [shape: bf16[64,128], index: 0, kind: input, shape index: {}, may-alias: {0,8}]
  %s1 = inlined_call_operand.vmem [shape: f32[64,128], index: 1, kind: input, shape index: {}]
  %s2 = inlined_call_operand.vmem [shape: f32[64,1], index: 2, kind: input, shape index: {}]
  %s3 = inlined_call_operand.vmem [shape: bf16[128,128], index: 3, kind: input, shape index: {}]
  %s4 = inlined_call_operand.vmem [shape: bf16[128,128], index: 4, kind: input, shape index: {}]
  %s5 = inlined_call_operand.vmem [shape: f32[1,128], index: 5, kind: input, shape index: {}, may-alias: {5,7}]
  %s6 = inlined_call_operand.vmem [shape: bf16[128,128], index: 6, kind: input, shape index: {}]
  %s7 = inlined_call_operand.vmem [shape: f32[1,128], index: 7, kind: input, shape index: {}, may-alias: {5,7}]
  %s8 = inlined_call_operand.vmem [shape: bf16[64,128], index: 8, kind: output, shape index: {}, may-alias: {0,8}]
  %s9 = sld [smem:[#allocation0]]
  $region42: #{a_call__.11} parent=0
    _
  %s11 = ssub.s32 1, %s9
  %s12 = scalar_select 0, %s11, %s9
  // Predicated region
  $region2: #{a_call__.11} parent=0 // pred_check
    _
  $region3: #{a_call__.11} parent=0 // pred_check_branch
    %14 = sbr.rel (0) target = $region5
  $region4: #{a_call__.11} parent=0 // pred_region
    _
  $region5: #{a_call__.11} parent=0 // pred_fallthru
    _
  // Predicated region
  $region6: #{a_call__.11} parent=0 // pred_check
    _
  $region7: #{a_call__.11} parent=0 // pred_check_branch
    %16 = sbr.rel (0) target = $region9
  $region8: #{a_call__.11} parent=0 // pred_region
    _
  $region9: #{a_call__.11} parent=0 // pred_fallthru
    _
  // Predicated region
  $region10: #{a_call__.11} parent=0 // pred_check
    _
  $region11: #{a_call__.11} parent=0 // pred_check_branch
    %18 = sbr.rel (0) target = $region13
  $region12: #{a_call__.11} parent=0 // pred_region
    _
  $region13: #{a_call__.11} parent=0 // pred_fallthru
    _
  // Predicated region
  $region14: #{a_call__.11} parent=0 // pred_check
    _
  $region15: #{a_call__.11} parent=0 // pred_check_branch
    %20 = sbr.rel (0) target = $region17
  $region16: #{a_call__.11} parent=0 // pred_region
    _
  $region17: #{a_call__.11} parent=0 // pred_fallthru
    _
  // Predicated region
  $region18: #{a_call__.11} parent=0 // pred_check
    _
  $region19: #{a_call__.11} parent=0 // pred_check_branch
    %22 = sbr.rel (0) target = $region21
  $region20: #{a_call__.11} parent=0 // pred_region
    _
  $region21: #{a_call__.11} parent=0 // pred_fallthru
    _
  // Predicated region
  $region22: #{a_call__.11} parent=0 // pred_check
    _
  $region23: #{a_call__.11} parent=0 // pred_check_branch
    %24 = sbr.rel (0) target = $region25
  $region24: #{a_call__.11} parent=0 // pred_region
    _
  $region25: #{a_call__.11} parent=0 // pred_fallthru
    _
  // Predicated region
  $region26: #{a_call__.11} parent=0 // pred_check
    _
  $region27: #{a_call__.11} parent=0 // pred_check_branch
    %26 = sbr.rel (0) target = $region29
  $region28: #{a_call__.11} parent=0 // pred_region
    _
  $region29: #{a_call__.11} parent=0 // pred_fallthru
    _
  // Predicated region
  $region30: #{a_call__.11} parent=0 // pred_check
    _
  $region31: #{a_call__.11} parent=0 // pred_check_branch
    %28 = sbr.rel (0) target = $region33
  $region32: #{a_call__.11} parent=0 // pred_region
    _
  $region33: #{a_call__.11} parent=0 // pred_fallthru
    _
  %v30 = vld [vmem:[%s0] sm:$0xf]
  %v31 = vld [vmem:[%s0 + $0x4] sm:$0xf]
  %v32 = vld [vmem:[%s0 + $0x8] sm:$0xf]
  %v33 = vld [vmem:[%s0 + $0xc] sm:$0xf]
  %v34 = vld [vmem:[%s0 + $0x10] sm:$0xf]
  %v35 = vld [vmem:[%s0 + $0x14] sm:$0xf]
  %v36 = vld [vmem:[%s0 + $0x18] sm:$0xf]
  %v37 = vld [vmem:[%s0 + $0x1c] sm:$0xf]
  %v38 = vld [vmem:[%s3] sm:$0xf]
  %v39 = vld [vmem:[%s3 + $0x4] sm:$0xf]
  %v40 = vld [vmem:[%s3 + $0x8] sm:$0xf]
  %v41 = vld [vmem:[%s3 + $0xc] sm:$0xf]
  %v42 = vld [vmem:[%s3 + $0x10] sm:$0xf]
  %v43 = vld [vmem:[%s3 + $0x14] sm:$0xf]
  %v44 = vld [vmem:[%s3 + $0x18] sm:$0xf]
  %v45 = vld [vmem:[%s3 + $0x1c] sm:$0xf]
  %v46 = vld [vmem:[%s3 + $0x20] sm:$0xf]
  %v47 = vld [vmem:[%s3 + $0x24] sm:$0xf]
  %v48 = vld [vmem:[%s3 + $0x28] sm:$0xf]
  %v49 = vld [vmem:[%s3 + $0x2c] sm:$0xf]
  %v50 = vld [vmem:[%s3 + $0x30] sm:$0xf]
  %v51 = vld [vmem:[%s3 + $0x34] sm:$0xf]
  %v52 = vld [vmem:[%s3 + $0x38] sm:$0xf]
  %v53 = vld [vmem:[%s3 + $0x3c] sm:$0xf]
  %v54 = vld [vmem:[%s1] sm:$0xff]
  %v55 = vld [vmem:[%s1 + $0x8] sm:$0xff]
  %v56 = vld [vmem:[%s1 + $0x10] sm:$0xff]
  %v57 = vld [vmem:[%s1 + $0x18] sm:$0xff]
  %v58 = vld [vmem:[%s1 + $0x20] sm:$0xff]
  %v59 = vld [vmem:[%s1 + $0x28] sm:$0xff]
  %v60 = vld [vmem:[%s1 + $0x30] sm:$0xff]
  %v61 = vld [vmem:[%s1 + $0x38] sm:$0xff]
  %v62 = vld [vmem:[%s2] sm:$0xff]
  %v63 = vld [vmem:[%s2 + $0x8] sm:$0xff]
  %v64 = vld [vmem:[%s2 + $0x10] sm:$0xff]
  %v65 = vld [vmem:[%s2 + $0x18] sm:$0xff]
  %v66 = vld [vmem:[%s2 + $0x20] sm:$0xff]
  %v67 = vld [vmem:[%s2 + $0x28] sm:$0xff]
  %v68 = vld [vmem:[%s2 + $0x30] sm:$0xff]
  %v69 = vld [vmem:[%s2 + $0x38] sm:$0xff]
  %71 = vset.pattern.permute.xlu0 0
  %72 = vperm.xlu0 %71, %v62
  %v73 = vpop.permute.xlu0 %72
  %76 = vset.pattern.permute.xlu0 0
  %77 = vperm.xlu0 %76, %v63
  %v78 = vpop.permute.xlu0 %77
  %81 = vset.pattern.permute.xlu0 0
  %82 = vperm.xlu0 %81, %v64
  %v83 = vpop.permute.xlu0 %82
  %86 = vset.pattern.permute.xlu0 0
  %87 = vperm.xlu0 %86, %v65
  %v88 = vpop.permute.xlu0 %87
  %91 = vset.pattern.permute.xlu0 0
  %92 = vperm.xlu0 %91, %v66
  %v93 = vpop.permute.xlu0 %92
  %96 = vset.pattern.permute.xlu0 0
  %97 = vperm.xlu0 %96, %v67
  %v98 = vpop.permute.xlu0 %97
  %101 = vset.pattern.permute.xlu0 0
  %102 = vperm.xlu0 %101, %v68
  %v103 = vpop.permute.xlu0 %102
  %106 = vset.pattern.permute.xlu0 0
  %107 = vperm.xlu0 %106, %v69
  %v108 = vpop.permute.xlu0 %107
  %v110 = vmul.f32 %v54, %v73
  %v111 = vmul.f32 %v55, %v78
  %v112 = vmul.f32 %v56, %v83
  %v113 = vmul.f32 %v57, %v88
  %v114 = vmul.f32 %v58, %v93
  %v115 = vmul.f32 %v59, %v98
  %v116 = vmul.f32 %v60, %v103
  %v117 = vmul.f32 %v61, %v108
  %v118 = vpack.c.bf16 %v111, %v110
  %v119 = vpack.c.bf16 %v113, %v112
  %v120 = vpack.c.bf16 %v115, %v114
  %v121 = vpack.c.bf16 %v117, %v116
  %v122 = vld [vmem:[%s4] sm:$0xf]
  %v123 = vld [vmem:[%s4 + $0x4] sm:$0xf]
  %v124 = vld [vmem:[%s4 + $0x8] sm:$0xf]
  %v125 = vld [vmem:[%s4 + $0xc] sm:$0xf]
  %v126 = vld [vmem:[%s4 + $0x10] sm:$0xf]
  %v127 = vld [vmem:[%s4 + $0x14] sm:$0xf]
  %v128 = vld [vmem:[%s4 + $0x18] sm:$0xf]
  %v129 = vld [vmem:[%s4 + $0x1c] sm:$0xf]
  %v130 = vld [vmem:[%s4 + $0x20] sm:$0xf]
  %v131 = vld [vmem:[%s4 + $0x24] sm:$0xf]
  %v132 = vld [vmem:[%s4 + $0x28] sm:$0xf]
  %v133 = vld [vmem:[%s4 + $0x2c] sm:$0xf]
  %v134 = vld [vmem:[%s4 + $0x30] sm:$0xf]
  %v135 = vld [vmem:[%s4 + $0x34] sm:$0xf]
  %v136 = vld [vmem:[%s4 + $0x38] sm:$0xf]
  %v137 = vld [vmem:[%s4 + $0x3c] sm:$0xf]
  %v154 = vunpack.c.l.b16 %v122
  %v155 = vunpack.c.l.b16 %v123
  %v156 = vunpack.c.l.b16 %v124
  %v157 = vunpack.c.l.b16 %v125
  %v158 = vunpack.c.l.b16 %v126
  %v159 = vunpack.c.l.b16 %v127
  %v160 = vunpack.c.l.b16 %v128
  %v161 = vunpack.c.l.b16 %v129
  %v162 = vunpack.c.l.b16 %v130
  %v163 = vunpack.c.l.b16 %v131
  %v164 = vunpack.c.l.b16 %v132
  %v165 = vunpack.c.l.b16 %v133
  %v166 = vunpack.c.l.b16 %v134
  %v167 = vunpack.c.l.b16 %v135
  %v168 = vunpack.c.l.b16 %v136
  %v169 = vunpack.c.l.b16 %v137
  %v170 = vpack.c.b16 %v155, %v154
  %v171 = vpack.c.b16 %v157, %v156
  %v172 = vpack.c.b16 %v159, %v158
  %v173 = vpack.c.b16 %v161, %v160
  %v174 = vpack.c.b16 %v163, %v162
  %v175 = vpack.c.b16 %v165, %v164
  %v176 = vpack.c.b16 %v167, %v166
  %v177 = vpack.c.b16 %v169, %v168
  %186 = vmatprep.subr.bf16.mxu0 0
  %187 = vmatpush1.bf16.msra.mxu0 %v170
  %188 = vmatprep.subr.bf16.mxu0 0
  %189 = vmatpush1.bf16.msra.mxu0 %v171
  %190 = vmatprep.subr.bf16.mxu0 0
  %191 = vmatpush1.bf16.msra.mxu0 %v172
  %192 = vmatprep.subr.bf16.mxu0 0
  %193 = vmatpush1.bf16.msra.mxu0 %v173
  %194 = vmatprep.subr.bf16.mxu0 0
  %195 = vmatpush1.bf16.msra.mxu0 %v174
  %196 = vmatprep.subr.bf16.mxu0 0
  %197 = vmatpush1.bf16.msra.mxu0 %v175
  %198 = vmatprep.subr.bf16.mxu0 0
  %199 = vmatpush1.bf16.msra.mxu0 %v176
  %200 = vmatprep.subr.bf16.mxu0 0
  %201 = vmatpush1.bf16.msra.mxu0 %v177
  %202 = vmatprep.subr.bf16.mxu0 0
  %203 = vmatpush1.bf16.msra.mxu0 0
  %204 = vmatprep.subr.bf16.mxu0 0
  %205 = vmatpush1.bf16.msra.mxu0 0
  %206 = vmatprep.subr.bf16.mxu0 0
  %207 = vmatpush1.bf16.msra.mxu0 0
  %208 = vmatprep.subr.bf16.mxu0 0
  %209 = vmatpush1.bf16.msra.mxu0 0
  %210 = vmatprep.subr.bf16.mxu0 0
  %211 = vmatpush1.bf16.msra.mxu0 0
  %212 = vmatprep.subr.bf16.mxu0 0
  %213 = vmatpush1.bf16.msra.mxu0 0
  %214 = vmatprep.subr.bf16.mxu0 0
  %215 = vmatpush1.bf16.msra.mxu0 0
  %216 = vmatprep.subr.bf16.mxu0 0
  %217 = vmatpush1.bf16.msra.mxu0 0
  %218 = vmatprep.mubr.bf16.mxu0 0
  %219 = vmatmul.mubr.bf16.gmra.mrb[0].mxu0 %v118
  %v220 = vpop.f32.mrb[0].mxu0
  %v221 = vadd.f32 0.0, %v220
  %v222 = vpop.f32.mrb[0].mxu0
  %v223 = vpop.f32.mrb[0].mxu0
  %v224 = vadd.f32 0.0, %v223
  %v225 = vpop.f32.mrb[0].mxu0
  %226 = vmatprep.mubr.bf16.mxu0 0
  %227 = vmatmul.mubr.bf16.gmra.mrb[0].mxu0 %v119
  %v228 = vpop.f32.mrb[0].mxu0
  %v229 = vadd.f32 0.0, %v228
  %v230 = vpop.f32.mrb[0].mxu0
  %v231 = vpop.f32.mrb[0].mxu0
  %v232 = vadd.f32 0.0, %v231
  %v233 = vpop.f32.mrb[0].mxu0
  %234 = vmatprep.mubr.bf16.mxu0 0
  %235 = vmatmul.mubr.bf16.gmra.mrb[0].mxu0 %v120
  %v236 = vpop.f32.mrb[0].mxu0
  %v237 = vadd.f32 0.0, %v236
  %v238 = vpop.f32.mrb[0].mxu0
  %v239 = vpop.f32.mrb[0].mxu0
  %v240 = vadd.f32 0.0, %v239
  %v241 = vpop.f32.mrb[0].mxu0
  %242 = vmatprep.mubr.bf16.mxu0 0
  %243 = vmatmul.mubr.bf16.gmra.mrb[0].mxu0 %v121
  %v244 = vpop.f32.mrb[0].mxu0
  %v245 = vadd.f32 0.0, %v244
  %v246 = vpop.f32.mrb[0].mxu0
  %v247 = vpop.f32.mrb[0].mxu0
  %v248 = vadd.f32 0.0, %v247
  %v249 = vpop.f32.mrb[0].mxu0
  %250 = vdwg.mxu0
  %v259 = vunpack.c.l.b16 %v30
  %v260 = vunpack.c.l.b16 %v31
  %v261 = vunpack.c.l.b16 %v32
  %v262 = vunpack.c.l.b16 %v33
  %v263 = vunpack.c.l.b16 %v34
  %v264 = vunpack.c.l.b16 %v35
  %v265 = vunpack.c.l.b16 %v36
  %v266 = vunpack.c.l.b16 %v37
  %v267 = vpack.c.b16 %v260, %v259
  %v268 = vpack.c.b16 %v262, %v261
  %v269 = vpack.c.b16 %v264, %v263
  %v270 = vpack.c.b16 %v266, %v265
  %v291 = vunpack.c.l.b16 %v38
  %v292 = vunpack.c.l.b16 %v39
  %v293 = vunpack.c.l.b16 %v40
  %v294 = vunpack.c.l.b16 %v41
  %v295 = vunpack.c.l.b16 %v42
  %v296 = vunpack.c.l.b16 %v43
  %v297 = vunpack.c.l.b16 %v44
  %v298 = vunpack.c.l.b16 %v45
  %v299 = vunpack.c.l.b16 %v46
  %v300 = vunpack.c.l.b16 %v47
  %v301 = vunpack.c.l.b16 %v48
  %v302 = vunpack.c.l.b16 %v49
  %v303 = vunpack.c.l.b16 %v50
  %v304 = vunpack.c.l.b16 %v51
  %v305 = vunpack.c.l.b16 %v52
  %v306 = vunpack.c.l.b16 %v53
  %v307 = vpack.c.b16 %v292, %v291
  %v308 = vpack.c.b16 %v294, %v293
  %v309 = vpack.c.b16 %v296, %v295
  %v310 = vpack.c.b16 %v298, %v297
  %v311 = vpack.c.b16 %v300, %v299
  %v312 = vpack.c.b16 %v302, %v301
  %v313 = vpack.c.b16 %v304, %v303
  %v314 = vpack.c.b16 %v306, %v305
  %323 = vmatprep.subr.bf16.mxu0 0
  %324 = vmatpush1.bf16.msra.mxu0 %v307
  %325 = vmatprep.subr.bf16.mxu0 0
  %326 = vmatpush1.bf16.msra.mxu0 %v308
  %327 = vmatprep.subr.bf16.mxu0 0
  %328 = vmatpush1.bf16.msra.mxu0 %v309
  %329 = vmatprep.subr.bf16.mxu0 0
  %330 = vmatpush1.bf16.msra.mxu0 %v310
  %331 = vmatprep.subr.bf16.mxu0 0
  %332 = vmatpush1.bf16.msra.mxu0 %v311
  %333 = vmatprep.subr.bf16.mxu0 0
  %334 = vmatpush1.bf16.msra.mxu0 %v312
  %335 = vmatprep.subr.bf16.mxu0 0
  %336 = vmatpush1.bf16.msra.mxu0 %v313
  %337 = vmatprep.subr.bf16.mxu0 0
  %338 = vmatpush1.bf16.msra.mxu0 %v314
  %339 = vmatprep.subr.bf16.mxu0 0
  %340 = vmatpush1.bf16.msra.mxu0 0
  %341 = vmatprep.subr.bf16.mxu0 0
  %342 = vmatpush1.bf16.msra.mxu0 0
  %343 = vmatprep.subr.bf16.mxu0 0
  %344 = vmatpush1.bf16.msra.mxu0 0
  %345 = vmatprep.subr.bf16.mxu0 0
  %346 = vmatpush1.bf16.msra.mxu0 0
  %347 = vmatprep.subr.bf16.mxu0 0
  %348 = vmatpush1.bf16.msra.mxu0 0
  %349 = vmatprep.subr.bf16.mxu0 0
  %350 = vmatpush1.bf16.msra.mxu0 0
  %351 = vmatprep.subr.bf16.mxu0 0
  %352 = vmatpush1.bf16.msra.mxu0 0
  %353 = vmatprep.subr.bf16.mxu0 0
  %354 = vmatpush1.bf16.msra.mxu0 0
  %355 = vmatprep.mubr.bf16.mxu0 0
  %356 = vmatmul.mubr.bf16.gmra.mrb[0].mxu0 %v267
  %v357 = vpop.f32.mrb[0].mxu0
  %v358 = vadd.f32 %v221, %v357
  %v359 = vpop.f32.mrb[0].mxu0
  %v360 = vpop.f32.mrb[0].mxu0
  %v361 = vadd.f32 %v224, %v360
  %v362 = vpop.f32.mrb[0].mxu0
  %363 = vmatprep.mubr.bf16.mxu0 0
  %364 = vmatmul.mubr.bf16.gmra.mrb[0].mxu0 %v268
  %v365 = vpop.f32.mrb[0].mxu0
  %v366 = vadd.f32 %v229, %v365
  %v367 = vpop.f32.mrb[0].mxu0
  %v368 = vpop.f32.mrb[0].mxu0
  %v369 = vadd.f32 %v232, %v368
  %v370 = vpop.f32.mrb[0].mxu0
  %371 = vmatprep.mubr.bf16.mxu0 0
  %372 = vmatmul.mubr.bf16.gmra.mrb[0].mxu0 %v269
  %v373 = vpop.f32.mrb[0].mxu0
  %v374 = vadd.f32 %v237, %v373
  %v375 = vpop.f32.mrb[0].mxu0
  %v376 = vpop.f32.mrb[0].mxu0
  %v377 = vadd.f32 %v240, %v376
  %v378 = vpop.f32.mrb[0].mxu0
  %379 = vmatprep.mubr.bf16.mxu0 0
  %380 = vmatmul.mubr.bf16.gmra.mrb[0].mxu0 %v270
  %v381 = vpop.f32.mrb[0].mxu0
  %v382 = vadd.f32 %v245, %v381
  %v383 = vpop.f32.mrb[0].mxu0
  %v384 = vpop.f32.mrb[0].mxu0
  %v385 = vadd.f32 %v248, %v384
  %v386 = vpop.f32.mrb[0].mxu0
  %387 = vdwg.mxu0
  %v388 = vld [vmem:[%s5] sm:$0x1]
  %v390 = vlaneseq
  %v391 = vshrl.u32 %v390, 7
  %v392 = vsub.s32 0, %v391
  %v393 = vrot.slane %v388, %v392
  %v395 = vadd.f32 %v358, %v393
  %v396 = vadd.f32 %v361, %v393
  %v397 = vadd.f32 %v366, %v393
  %v398 = vadd.f32 %v369, %v393
  %v399 = vadd.f32 %v374, %v393
  %v400 = vadd.f32 %v377, %v393
  %v401 = vadd.f32 %v382, %v393
  %v402 = vadd.f32 %v385, %v393
  %v403 = vmul.f32 %v395, %v395
  %v404 = vmul.f32 %v396, %v396
  %v405 = vmul.f32 %v397, %v397
  %v406 = vmul.f32 %v398, %v398
  %v407 = vmul.f32 %v399, %v399
  %v408 = vmul.f32 %v400, %v400
  %v409 = vmul.f32 %v401, %v401
  %v410 = vmul.f32 %v402, %v402
  %v411 = vmul.f32 %v395, %v403
  %v412 = vmul.f32 %v396, %v404
  %v413 = vmul.f32 %v397, %v405
  %v414 = vmul.f32 %v398, %v406
  %v415 = vmul.f32 %v399, %v407
  %v416 = vmul.f32 %v400, %v408
  %v417 = vmul.f32 %v401, %v409
  %v418 = vmul.f32 %v402, %v410
  %v419 = vmul.f32 %v411, 0.044715
  %v420 = vmul.f32 %v412, 0.044715
  %v421 = vmul.f32 %v413, 0.044715
  %v422 = vmul.f32 %v414, 0.044715
  %v423 = vmul.f32 %v415, 0.044715
  %v424 = vmul.f32 %v416, 0.044715
  %v425 = vmul.f32 %v417, 0.044715
  %v426 = vmul.f32 %v418, 0.044715
  %v427 = vadd.f32 %v395, %v419
  %v428 = vadd.f32 %v396, %v420
  %v429 = vadd.f32 %v397, %v421
  %v430 = vadd.f32 %v398, %v422
  %v431 = vadd.f32 %v399, %v423
  %v432 = vadd.f32 %v400, %v424
  %v433 = vadd.f32 %v401, %v425
  %v434 = vadd.f32 %v402, %v426
  %v435 = vmul.f32 %v427, 0.7978846
  %v436 = vmul.f32 %v428, 0.7978846
  %v437 = vmul.f32 %v429, 0.7978846
  %v438 = vmul.f32 %v430, 0.7978846
  %v439 = vmul.f32 %v431, 0.7978846
  %v440 = vmul.f32 %v432, 0.7978846
  %v441 = vmul.f32 %v433, 0.7978846
  %v442 = vmul.f32 %v434, 0.7978846
  %v443 = vtanh.pop %v435
  %v444 = vtanh.pop %v436
  %v445 = vtanh.pop %v437
  %v446 = vtanh.pop %v438
  %v447 = vtanh.pop %v439
  %v448 = vtanh.pop %v440
  %v449 = vtanh.pop %v441
  %v450 = vtanh.pop %v442
  %v451 = vadd.f32 %v443, 1.0
  %v452 = vadd.f32 %v444, 1.0
  %v453 = vadd.f32 %v445, 1.0
  %v454 = vadd.f32 %v446, 1.0
  %v455 = vadd.f32 %v447, 1.0
  %v456 = vadd.f32 %v448, 1.0
  %v457 = vadd.f32 %v449, 1.0
  %v458 = vadd.f32 %v450, 1.0
  %v459 = vmul.f32 %v451, 0.5
  %v460 = vmul.f32 %v452, 0.5
  %v461 = vmul.f32 %v453, 0.5
  %v462 = vmul.f32 %v454, 0.5
  %v463 = vmul.f32 %v455, 0.5
  %v464 = vmul.f32 %v456, 0.5
  %v465 = vmul.f32 %v457, 0.5
  %v466 = vmul.f32 %v458, 0.5
  %v467 = vmul.f32 %v395, %v459
  %v468 = vmul.f32 %v396, %v460
  %v469 = vmul.f32 %v397, %v461
  %v470 = vmul.f32 %v398, %v462
  %v471 = vmul.f32 %v399, %v463
  %v472 = vmul.f32 %v400, %v464
  %v473 = vmul.f32 %v401, %v465
  %v474 = vmul.f32 %v402, %v466
  %v475 = vpack.c.bf16 %v468, %v467
  %v476 = vpack.c.bf16 %v470, %v469
  %v477 = vpack.c.bf16 %v472, %v471
  %v478 = vpack.c.bf16 %v474, %v473
  %v479 = vld [vmem:[%s6] sm:$0xf]
  %v480 = vld [vmem:[%s6 + $0x4] sm:$0xf]
  %v481 = vld [vmem:[%s6 + $0x8] sm:$0xf]
  %v482 = vld [vmem:[%s6 + $0xc] sm:$0xf]
  %v483 = vld [vmem:[%s6 + $0x10] sm:$0xf]
  %v484 = vld [vmem:[%s6 + $0x14] sm:$0xf]
  %v485 = vld [vmem:[%s6 + $0x18] sm:$0xf]
  %v486 = vld [vmem:[%s6 + $0x1c] sm:$0xf]
  %v487 = vld [vmem:[%s6 + $0x20] sm:$0xf]
  %v488 = vld [vmem:[%s6 + $0x24] sm:$0xf]
  %v489 = vld [vmem:[%s6 + $0x28] sm:$0xf]
  %v490 = vld [vmem:[%s6 + $0x2c] sm:$0xf]
  %v491 = vld [vmem:[%s6 + $0x30] sm:$0xf]
  %v492 = vld [vmem:[%s6 + $0x34] sm:$0xf]
  %v493 = vld [vmem:[%s6 + $0x38] sm:$0xf]
  %v494 = vld [vmem:[%s6 + $0x3c] sm:$0xf]
  %v495 = vld [vmem:[%s7] sm:$0x1]
  %v497 = vlaneseq
  %v498 = vshrl.u32 %v497, 7
  %v499 = vsub.s32 0, %v498
  %v500 = vrot.slane %v495, %v499
  %v518 = vunpack.c.l.b16 %v479
  %v519 = vunpack.c.l.b16 %v480
  %v520 = vunpack.c.l.b16 %v481
  %v521 = vunpack.c.l.b16 %v482
  %v522 = vunpack.c.l.b16 %v483
  %v523 = vunpack.c.l.b16 %v484
  %v524 = vunpack.c.l.b16 %v485
  %v525 = vunpack.c.l.b16 %v486
  %v526 = vunpack.c.l.b16 %v487
  %v527 = vunpack.c.l.b16 %v488
  %v528 = vunpack.c.l.b16 %v489
  %v529 = vunpack.c.l.b16 %v490
  %v530 = vunpack.c.l.b16 %v491
  %v531 = vunpack.c.l.b16 %v492
  %v532 = vunpack.c.l.b16 %v493
  %v533 = vunpack.c.l.b16 %v494
  %v534 = vpack.c.b16 %v519, %v518
  %v535 = vpack.c.b16 %v521, %v520
  %v536 = vpack.c.b16 %v523, %v522
  %v537 = vpack.c.b16 %v525, %v524
  %v538 = vpack.c.b16 %v527, %v526
  %v539 = vpack.c.b16 %v529, %v528
  %v540 = vpack.c.b16 %v531, %v530
  %v541 = vpack.c.b16 %v533, %v532
  %550 = vmatprep.subr.bf16.mxu0 0
  %551 = vmatpush1.bf16.msra.mxu0 %v534
  %552 = vmatprep.subr.bf16.mxu0 0
  %553 = vmatpush1.bf16.msra.mxu0 %v535
  %554 = vmatprep.subr.bf16.mxu0 0
  %555 = vmatpush1.bf16.msra.mxu0 %v536
  %556 = vmatprep.subr.bf16.mxu0 0
  %557 = vmatpush1.bf16.msra.mxu0 %v537
  %558 = vmatprep.subr.bf16.mxu0 0
  %559 = vmatpush1.bf16.msra.mxu0 %v538
  %560 = vmatprep.subr.bf16.mxu0 0
  %561 = vmatpush1.bf16.msra.mxu0 %v539
  %562 = vmatprep.subr.bf16.mxu0 0
  %563 = vmatpush1.bf16.msra.mxu0 %v540
  %564 = vmatprep.subr.bf16.mxu0 0
  %565 = vmatpush1.bf16.msra.mxu0 %v541
  %566 = vmatprep.subr.bf16.mxu0 0
  %567 = vmatpush1.bf16.msra.mxu0 0
  %568 = vmatprep.subr.bf16.mxu0 0
  %569 = vmatpush1.bf16.msra.mxu0 0
  %570 = vmatprep.subr.bf16.mxu0 0
  %571 = vmatpush1.bf16.msra.mxu0 0
  %572 = vmatprep.subr.bf16.mxu0 0
  %573 = vmatpush1.bf16.msra.mxu0 0
  %574 = vmatprep.subr.bf16.mxu0 0
  %575 = vmatpush1.bf16.msra.mxu0 0
  %576 = vmatprep.subr.bf16.mxu0 0
  %577 = vmatpush1.bf16.msra.mxu0 0
  %578 = vmatprep.subr.bf16.mxu0 0
  %579 = vmatpush1.bf16.msra.mxu0 0
  %580 = vmatprep.subr.bf16.mxu0 0
  %581 = vmatpush1.bf16.msra.mxu0 0
  %582 = vmatprep.mubr.bf16.mxu0 0
  %583 = vmatmul.mubr.bf16.gmra.mrb[0].mxu0 %v475
  %v584 = vpop.f32.mrb[0].mxu0
  %v585 = vadd.f32 %v500, %v584
  %v586 = vpop.f32.mrb[0].mxu0
  %v587 = vpop.f32.mrb[0].mxu0
  %v588 = vadd.f32 %v500, %v587
  %v589 = vpop.f32.mrb[0].mxu0
  %590 = vmatprep.mubr.bf16.mxu0 0
  %591 = vmatmul.mubr.bf16.gmra.mrb[0].mxu0 %v476
  %v592 = vpop.f32.mrb[0].mxu0
  %v593 = vadd.f32 %v500, %v592
  %v594 = vpop.f32.mrb[0].mxu0
  %v595 = vpop.f32.mrb[0].mxu0
  %v596 = vadd.f32 %v500, %v595
  %v597 = vpop.f32.mrb[0].mxu0
  %598 = vmatprep.mubr.bf16.mxu0 0
  %599 = vmatmul.mubr.bf16.gmra.mrb[0].mxu0 %v477
  %v600 = vpop.f32.mrb[0].mxu0
  %v601 = vadd.f32 %v500, %v600
  %v602 = vpop.f32.mrb[0].mxu0
  %v603 = vpop.f32.mrb[0].mxu0
  %v604 = vadd.f32 %v500, %v603
  %v605 = vpop.f32.mrb[0].mxu0
  %606 = vmatprep.mubr.bf16.mxu0 0
  %607 = vmatmul.mubr.bf16.gmra.mrb[0].mxu0 %v478
  %v608 = vpop.f32.mrb[0].mxu0
  %v609 = vadd.f32 %v500, %v608
  %v610 = vpop.f32.mrb[0].mxu0
  %v611 = vpop.f32.mrb[0].mxu0
  %v612 = vadd.f32 %v500, %v611
  %v613 = vpop.f32.mrb[0].mxu0
  %614 = vdwg.mxu0
  %v615 = vunpack.c.l.bf16 %v30
  %v616 = vunpack.c.l.bf16 %v31
  %v617 = vunpack.c.l.bf16 %v32
  %v618 = vunpack.c.l.bf16 %v33
  %v619 = vunpack.c.l.bf16 %v34
  %v620 = vunpack.c.l.bf16 %v35
  %v621 = vunpack.c.l.bf16 %v36
  %v622 = vunpack.c.l.bf16 %v37
  %v623 = vadd.f32 %v585, %v615
  %v624 = vadd.f32 %v588, %v616
  %v625 = vadd.f32 %v593, %v617
  %v626 = vadd.f32 %v596, %v618
  %v627 = vadd.f32 %v601, %v619
  %v628 = vadd.f32 %v604, %v620
  %v629 = vadd.f32 %v609, %v621
  %v630 = vadd.f32 %v612, %v622
  %v631 = vpack.c.bf16 %v624, %v623
  %v632 = vpack.c.bf16 %v626, %v625
  %v633 = vpack.c.bf16 %v628, %v627
  %v634 = vpack.c.bf16 %v630, %v629
  %v639 = vunpack.c.l.b16 %v631
  %v640 = vunpack.c.h.b16 %v631
  %v641 = vunpack.c.l.b16 %v632
  %v642 = vunpack.c.h.b16 %v632
  %v643 = vunpack.c.l.b16 %v633
  %v644 = vunpack.c.h.b16 %v633
  %v645 = vunpack.c.l.b16 %v634
  %v646 = vunpack.c.h.b16 %v634
  %v647 = vpack.c.b16 %v639, %v639
  %v648 = vpack.c.b16 %v640, %v640
  %v649 = vpack.c.b16 %v641, %v641
  %v650 = vpack.c.b16 %v642, %v642
  %v651 = vpack.c.b16 %v643, %v643
  %v652 = vpack.c.b16 %v644, %v644
  %v653 = vpack.c.b16 %v645, %v645
  %v654 = vpack.c.b16 %v646, %v646
  %663 = vst [vmem:[%s8] sm:$0xf] %v647
  %664 = vst [vmem:[%s8 + $0x4] sm:$0xf] %v648
  %665 = vst [vmem:[%s8 + $0x8] sm:$0xf] %v649
  %666 = vst [vmem:[%s8 + $0xc] sm:$0xf] %v650
  %667 = vst [vmem:[%s8 + $0x10] sm:$0xf] %v651
  %668 = vst [vmem:[%s8 + $0x14] sm:$0xf] %v652
  %669 = vst [vmem:[%s8 + $0x18] sm:$0xf] %v653
  %670 = vst [vmem:[%s8 + $0x1c] sm:$0xf] %v654
  // Predicated region
  $region34: #{a_call__.11} parent=0 // pred_check
    _
  $region35: #{a_call__.11} parent=0 // pred_check_branch
    %672 = sbr.rel (0) target = $region37
  $region36: #{a_call__.11} parent=0 // pred_region
    _
  $region37: #{a_call__.11} parent=0 // pred_fallthru
    _
  // Predicated region
  $region38: #{a_call__.11} parent=0 // pred_check
    _
  $region39: #{a_call__.11} parent=0 // pred_check_branch
    %674 = sbr.rel (0) target = $region41
  $region40: #{a_call__.11} parent=0 // pred_region
    _
  $region41: #{a_call__.11} parent=0 // pred_fallthru
    _

</llo_original>
